<compile_context>
chip_gen: v5e
topology: v5e:2x2
jax: 0.10.0
libtpu: 0.0.40
codegen_flags: <defaults>
</compile_context>

<pallas_src>
import functools
import math

import jax
import jax.numpy as jnp
from jax.experimental import pallas as pl
from jax.experimental.pallas import tpu as pltpu

LANE = 128                      # vreg lane width
_BLOCK_M = 512                  # M-tile target (review: 256-512)
_VMEM_LIMIT = 32 * 1024 * 1024  # safe on v5e/v6e/v7x for these tiles


def _round_up(x, m):
    return ((x + m - 1) // m) * m


# ---------------------------------------------------------------------------
# Pallas kernel: fused  out = act(x @ w + b)   (bf16 MXU, f32 epilogue)
# ---------------------------------------------------------------------------
def _linear_kernel(x_ref, w_ref, b_ref, o_ref, *, apply_relu):
    acc = jnp.dot(x_ref[...], w_ref[...], preferred_element_type=jnp.float32)
    acc = acc + b_ref[...]                      # (1, N) broadcasts over rows
    if apply_relu:
        acc = jnp.maximum(acc, 0.0)             # f32 epilogue (v5e: no bf16 VPU)
    o_ref[...] = acc.astype(o_ref.dtype)


def linear_pallas(x, w, b, *, apply_relu, out_dtype=jnp.float32,
                  block_m=_BLOCK_M):
    """x: (M, K); w: (K, N) with N % 128 == 0; b: (N,) f32 -> (M, N)."""
    M, K = x.shape
    Kw, N = w.shape
    assert K == Kw and N % LANE == 0, (x.shape, w.shape)

    x = x.astype(jnp.bfloat16)
    w = w.astype(jnp.bfloat16)
    b2 = b.reshape(1, N).astype(jnp.float32)

    # Tile M; pad so the tile divides it exactly (padded rows sliced off below).
    tm = min(block_m, _round_up(M, 8))
    m_pad = _round_up(M, tm)
    if m_pad != M:
        x = jnp.pad(x, ((0, m_pad - M), (0, 0)))

    out = pl.pallas_call(
        functools.partial(_linear_kernel, apply_relu=apply_relu),
        out_shape=jax.ShapeDtypeStruct((m_pad, N), out_dtype),
        grid=(m_pad // tm,),
        in_specs=[
            pl.BlockSpec((tm, K), lambda i: (i, 0)),
            pl.BlockSpec((K, N), lambda i: (0, 0)),     # weight stays resident
            pl.BlockSpec((1, N), lambda i: (0, 0)),     # bias stays resident
        ],
        out_specs=pl.BlockSpec((tm, N), lambda i: (i, 0)),
        compiler_params=pltpu.CompilerParams(
            dimension_semantics=("parallel",),
            vmem_limit_bytes=_VMEM_LIMIT,
        ),
        cost_estimate=pl.CostEstimate(
            flops=2 * m_pad * K * N,
            transcendentals=0,
            bytes_accessed=(m_pad * K + K * N) * 2
                           + m_pad * N * jnp.dtype(out_dtype).itemsize,
        ),
    )(x, w, b2)
    return out[:M] if m_pad != M else out


# ---------------------------------------------------------------------------
# Pallas kernel: fused fc head  out = relu(x @ w1 + b1) @ w2 + b2
# ---------------------------------------------------------------------------
def _mlp_kernel(x_ref, w1_ref, b1_ref, w2_ref, b2_ref, o_ref):
    h = jnp.dot(x_ref[...], w1_ref[...], preferred_element_type=jnp.float32)
    h = jnp.maximum(h + b1_ref[...], 0.0)                   # f32 bias + ReLU
    y = jnp.dot(h.astype(jnp.bfloat16), w2_ref[...],
                preferred_element_type=jnp.float32)
    o_ref[...] = (y + b2_ref[...]).astype(o_ref.dtype)


def mlp_head_pallas(x, w1, b1, w2, b2, *, block_m=_BLOCK_M):
    """relu(x @ w1 + b1) @ w2 + b2 in one kernel.  w2's N2 must be 128-padded."""
    M, K = x.shape
    K1, N1 = w1.shape
    K2, N2 = w2.shape
    assert K == K1 and N1 == K2 and N2 % LANE == 0

    x = x.astype(jnp.bfloat16)
    b1v = b1.reshape(1, N1).astype(jnp.float32)
    b2v = b2.reshape(1, N2).astype(jnp.float32)

    tm = min(block_m, _round_up(M, 8))
    m_pad = _round_up(M, tm)
    if m_pad != M:
        x = jnp.pad(x, ((0, m_pad - M), (0, 0)))

    out = pl.pallas_call(
        _mlp_kernel,
        out_shape=jax.ShapeDtypeStruct((m_pad, N2), jnp.float32),
        grid=(m_pad // tm,),
        in_specs=[
            pl.BlockSpec((tm, K), lambda i: (i, 0)),
            pl.BlockSpec((K, N1), lambda i: (0, 0)),    # w1 resident (~1 MB bf16)
            pl.BlockSpec((1, N1), lambda i: (0, 0)),
            pl.BlockSpec((N1, N2), lambda i: (0, 0)),   # w2 resident
            pl.BlockSpec((1, N2), lambda i: (0, 0)),
        ],
        out_specs=pl.BlockSpec((tm, N2), lambda i: (i, 0)),
        compiler_params=pltpu.CompilerParams(
            dimension_semantics=("parallel",),
            vmem_limit_bytes=_VMEM_LIMIT,
        ),
        cost_estimate=pl.CostEstimate(
            flops=2 * m_pad * (K * N1 + N1 * N2),
            transcendentals=0,
            bytes_accessed=(m_pad * K + K * N1 + N1 * N2) * 2 + m_pad * N2 * 4,
        ),
    )(x, w1.astype(jnp.bfloat16), b1v, w2.astype(jnp.bfloat16), b2v)
    return out[:M] if m_pad != M else out


# ---------------------------------------------------------------------------
# Conv2d(valid, stride) + ReLU via im2col (glue) + Pallas matmul kernel
# ---------------------------------------------------------------------------
def conv2d_relu(x_nhwc, w_mat, b_vec, kh, kw, stride, co):
    """x_nhwc: (N,H,W,Ci) bf16; w_mat: (kh*kw*Ci, 128) bf16 (Cout zero-padded);
    b_vec: (128,) f32.  Returns (N, Ho, Wo, co) bf16."""
    n, h, w, ci = x_nhwc.shape
    ho = (h - kh) // stride + 1
    wo = (w - kw) // stride + 1

    # Patch extraction in (kh, kw, Cin) order — matches w_mat's row layout.
    patches = [
        x_nhwc[:, i:i + stride * ho:stride, j:j + stride * wo:stride, :]
        for i in range(kh) for j in range(kw)
    ]
    cols = jnp.concatenate(patches, axis=-1).reshape(n * ho * wo, kh * kw * ci)

    y = linear_pallas(cols, w_mat, b_vec, apply_relu=True,
                      out_dtype=jnp.bfloat16)           # (M, 128) lane-dense
    return y.reshape(n, ho, wo, -1)[..., :co]            # drop padded Cout


# ---------------------------------------------------------------------------
# Parameters: PyTorch-default-like init, converted ONCE to kernel layout
# ---------------------------------------------------------------------------
def _conv_size_out(size, kernel_size, stride):
    return (size - (kernel_size - 1) - 1) // stride + 1


def init_params(h, w, outputs, key):
    convw = _conv_size_out(_conv_size_out(_conv_size_out(w, 8, 4), 4, 2), 3, 1)
    convh = _conv_size_out(_conv_size_out(_conv_size_out(h, 8, 4), 4, 2), 3, 1)
    lin_in = convw * convh * 64

    keys = jax.random.split(key, 10)

    def u(k, shape, fan_in):
        bound = 1.0 / math.sqrt(fan_in)
        return jax.random.uniform(k, shape, jnp.float32, -bound, bound)

    def conv_layer(kw_key, kb_key, co, ci, kh, kw_):
        fan = ci * kh * kw_
        w_oihw = u(kw_key, (co, ci, kh, kw_), fan)           # PyTorch layout
        b = u(kb_key, (co,), fan)
        # Kernel layout: (kh*kw*Ci, 128) bf16, Cout zero-padded to a lane group.
        wm = jnp.transpose(w_oihw, (2, 3, 1, 0)).reshape(kh * kw_ * ci, co)
        wm = jnp.pad(wm, ((0, 0), (0, LANE - co))).astype(jnp.bfloat16)
        bp = jnp.pad(b, (0, LANE - co))
        return wm, bp

    c1w, c1b = conv_layer(keys[0], keys[1], 32, 3, 8, 8)
    c2w, c2b = conv_layer(keys[2], keys[3], 64, 32, 4, 4)
    c3w, c3b = conv_layer(keys[4], keys[5], 64, 64, 3, 3)

    # fc1: PyTorch weight (512, 64*convh*convw) applies to an NCHW flatten.
    # Permute its input-feature rows once so it applies directly to the NHWC
    # flatten coming out of conv3 (removes the per-forward transpose + .T).
    fc1_pt = u(keys[6], (512, 64, convh, convw), lin_in)
    fc1_w = jnp.transpose(fc1_pt, (2, 3, 1, 0)).reshape(lin_in, 512)
    fc1_w = fc1_w.astype(jnp.bfloat16)
    fc1_b = u(keys[7], (512,), lin_in)

    # fc2: stored pre-transposed (512, 128) with zero-padded output lanes;
    # the wrapper slices logits back to `outputs`.
    n2 = _round_up(max(outputs, 1), LANE)
    fc2_pt = u(keys[8], (outputs, 512), 512)
    fc2_w = jnp.pad(fc2_pt.T, ((0, 0), (0, n2 - outputs))).astype(jnp.bfloat16)
    fc2_b = jnp.pad(u(keys[9], (outputs,), 512), (0, n2 - outputs))

    return {
        "conv1_w": c1w, "conv1_b": c1b,
        "conv2_w": c2w, "conv2_b": c2b,
        "conv3_w": c3w, "conv3_b": c3b,
        "fc1_w": fc1_w, "fc1_b": fc1_b,
        "fc2_w": fc2_w, "fc2_b": fc2_b,
    }


# ---------------------------------------------------------------------------
# DQN_Model forward
# ---------------------------------------------------------------------------
@functools.partial(jax.jit, static_argnames=("outputs",))
def dqn_forward(params, x_nchw, *, outputs):
    n = x_nchw.shape[0]
    x = jnp.transpose(x_nchw, (0, 2, 3, 1)).astype(jnp.bfloat16)  # NCHW->NHWC
    x = conv2d_relu(x, params["conv1_w"], params["conv1_b"], 8, 8, 4, 32)
    x = conv2d_relu(x, params["conv2_w"], params["conv2_b"], 4, 4, 2, 64)
    x = conv2d_relu(x, params["conv3_w"], params["conv3_b"], 3, 3, 1, 64)
    feats = x.reshape(n, -1)          # NHWC flatten; fc1_w rows already match
    logits = mlp_head_pallas(feats, params["fc1_w"], params["fc1_b"],
                             params["fc2_w"], params["fc2_b"])
    return logits[:, :outputs]


if __name__ == "__main__":
    H, W = 64, 64                 # smallest-ish spatial that survives the convs
    BATCH, OUTPUTS = 2, 4

    key = jax.random.PRNGKey(0)
    k_params, k_x = jax.random.split(key)

    params = init_params(H, W, OUTPUTS, k_params)
    x = jax.random.normal(k_x, (BATCH, 3, H, W), dtype=jnp.float32)

    out = dqn_forward(params, x, outputs=OUTPUTS)
    out = jax.block_until_ready(out)
    assert out.shape == (BATCH, OUTPUTS), out.shape
    assert bool(jnp.all(jnp.isfinite(out)))
    print("KERNEL_OK")
</pallas_src>

<mosaic_0001>
module attributes {stable_mosaic.version = 11 : i64} {
  func.func @_linear_kernel(%arg0: i32, %arg1: memref<456x192xbf16, #tpu.memory_space<vmem>>, %arg2: memref<192x128xbf16, #tpu.memory_space<vmem>>, %arg3: memref<1x128xf32, #tpu.memory_space<vmem>>, %arg4: memref<456x128xbf16, #tpu.memory_space<vmem>>) attributes {dimension_semantics = [#tpu.dimension_semantics<parallel>], iteration_bounds = array<i64: 1>, scalar_prefetch = 0 : i64, scratch_operands = 0 : i64, tpu.core_type = #tpu.core_type<tc>, window_params = [{transform_indices = @transform_0, window_bounds = array<i64: 456, 192>}, {pipeline_mode = #tpu.pipeline_mode<synchronous>, transform_indices = @transform_1, window_bounds = array<i64: 192, 128>}, {pipeline_mode = #tpu.pipeline_mode<synchronous>, transform_indices = @transform_2, window_bounds = array<i64: 1, 128>}, {transform_indices = @transform_3, window_bounds = array<i64: 456, 128>}]} {
    %c0 = arith.constant 0 : index
    %c0_0 = arith.constant 0 : index
    %0 = vector.load %arg1[%c0, %c0_0] : memref<456x192xbf16, #tpu.memory_space<vmem>>, vector<456x192xbf16>
    %c0_1 = arith.constant 0 : index
    %c0_2 = arith.constant 0 : index
    %1 = vector.load %arg2[%c0_1, %c0_2] : memref<192x128xbf16, #tpu.memory_space<vmem>>, vector<192x128xbf16>
    %cst = arith.constant dense<0.000000e+00> : vector<456x128xf32>
    %2 = tpu.matmul %0, %1, %cst {dimension_numbers = #tpu.dot_dimension_numbers<[1], [0], [0], [1], [0, 0, 1, 1], [], []>} : vector<456x192xbf16>, vector<192x128xbf16>, vector<456x128xf32> -> vector<456x128xf32>
    %c0_3 = arith.constant 0 : index
    %c0_4 = arith.constant 0 : index
    %3 = vector.load %arg3[%c0_3, %c0_4] : memref<1x128xf32, #tpu.memory_space<vmem>>, vector<1x128xf32>
    %4 = vector.broadcast %3 : vector<1x128xf32> to vector<456x128xf32>
    %5 = arith.addf %2, %4 : vector<456x128xf32>
    %cst_5 = arith.constant 0.000000e+00 : f32
    %6 = vector.broadcast %cst_5 : f32 to vector<456x128xf32>
    %7 = arith.maximumf %5, %6 : vector<456x128xf32>
    %8 = arith.truncf %7 : vector<456x128xf32> to vector<456x128xbf16>
    %c0_6 = arith.constant 0 : index
    %c0_7 = arith.constant 0 : index
    %9 = vector.load %arg4[%c0_6, %c0_7] : memref<456x128xbf16, #tpu.memory_space<vmem>>, vector<456x128xbf16>
    tpu.vector_store %arg4[%c0_6, %c0_7], %8 {strides = array<i32>} : memref<456x128xbf16, #tpu.memory_space<vmem>>, vector<456x128xbf16>,
    return
  }
  func.func @transform_0(%arg0: i32) -> (i32, i32) {
    %c0_i32 = arith.constant 0 : i32
    %c0_i32_0 = arith.constant 0 : i32
    return %arg0, %c0_i32 : i32, i32
  }
  func.func @transform_1(%arg0: i32) -> (i32, i32) {
    %c0_i32 = arith.constant 0 : i32
    %c0_i32_0 = arith.constant 0 : i32
    %c0_i32_1 = arith.constant 0 : i32
    return %c0_i32, %c0_i32_0 : i32, i32
  }
  func.func @transform_2(%arg0: i32) -> (i32, i32) {
    %c0_i32 = arith.constant 0 : i32
    %c0_i32_0 = arith.constant 0 : i32
    %c0_i32_1 = arith.constant 0 : i32
    return %c0_i32, %c0_i32_0 : i32, i32
  }
  func.func @transform_3(%arg0: i32) -> (i32, i32) {
    %c0_i32 = arith.constant 0 : i32
    %c0_i32_0 = arith.constant 0 : i32
    return %arg0, %c0_i32 : i32, i32
  }
}

module attributes {stable_mosaic.version = 11 : i64} {
  func.func @_linear_kernel(%arg0: i32, %arg1: memref<72x512xbf16, #tpu.memory_space<vmem>>, %arg2: memref<512x128xbf16, #tpu.memory_space<vmem>>, %arg3: memref<1x128xf32, #tpu.memory_space<vmem>>, %arg4: memref<72x128xbf16, #tpu.memory_space<vmem>>) attributes {dimension_semantics = [#tpu.dimension_semantics<parallel>], iteration_bounds = array<i64: 1>, scalar_prefetch = 0 : i64, scratch_operands = 0 : i64, tpu.core_type = #tpu.core_type<tc>, window_params = [{transform_indices = @transform_0, window_bounds = array<i64: 72, 512>}, {pipeline_mode = #tpu.pipeline_mode<synchronous>, transform_indices = @transform_1, window_bounds = array<i64: 512, 128>}, {pipeline_mode = #tpu.pipeline_mode<synchronous>, transform_indices = @transform_2, window_bounds = array<i64: 1, 128>}, {transform_indices = @transform_3, window_bounds = array<i64: 72, 128>}]} {
    %c0 = arith.constant 0 : index
    %c0_0 = arith.constant 0 : index
    %0 = vector.load %arg1[%c0, %c0_0] : memref<72x512xbf16, #tpu.memory_space<vmem>>, vector<72x512xbf16>
    %c0_1 = arith.constant 0 : index
    %c0_2 = arith.constant 0 : index
    %1 = vector.load %arg2[%c0_1, %c0_2] : memref<512x128xbf16, #tpu.memory_space<vmem>>, vector<512x128xbf16>
    %cst = arith.constant dense<0.000000e+00> : vector<72x128xf32>
    %2 = tpu.matmul %0, %1, %cst {dimension_numbers = #tpu.dot_dimension_numbers<[1], [0], [0], [1], [0, 0, 1, 1], [], []>} : vector<72x512xbf16>, vector<512x128xbf16>, vector<72x128xf32> -> vector<72x128xf32>
    %c0_3 = arith.constant 0 : index
    %c0_4 = arith.constant 0 : index
    %3 = vector.load %arg3[%c0_3, %c0_4] : memref<1x128xf32, #tpu.memory_space<vmem>>, vector<1x128xf32>
    %4 = vector.broadcast %3 : vector<1x128xf32> to vector<72x128xf32>
    %5 = arith.addf %2, %4 : vector<72x128xf32>
    %cst_5 = arith.constant 0.000000e+00 : f32
    %6 = vector.broadcast %cst_5 : f32 to vector<72x128xf32>
    %7 = arith.maximumf %5, %6 : vector<72x128xf32>
    %8 = arith.truncf %7 : vector<72x128xf32> to vector<72x128xbf16>
    %c0_6 = arith.constant 0 : index
    %c0_7 = arith.constant 0 : index
    %9 = vector.load %arg4[%c0_6, %c0_7] : memref<72x128xbf16, #tpu.memory_space<vmem>>, vector<72x128xbf16>
    tpu.vector_store %arg4[%c0_6, %c0_7], %8 {strides = array<i32>} : memref<72x128xbf16, #tpu.memory_space<vmem>>, vector<72x128xbf16>,
    return
  }
  func.func @transform_0(%arg0: i32) -> (i32, i32) {
    %c0_i32 = arith.constant 0 : i32
    %c0_i32_0 = arith.constant 0 : i32
    return %arg0, %c0_i32 : i32, i32
  }
  func.func @transform_1(%arg0: i32) -> (i32, i32) {
    %c0_i32 = arith.constant 0 : i32
    %c0_i32_0 = arith.constant 0 : i32
    %c0_i32_1 = arith.constant 0 : i32
    return %c0_i32, %c0_i32_0 : i32, i32
  }
  func.func @transform_2(%arg0: i32) -> (i32, i32) {
    %c0_i32 = arith.constant 0 : i32
    %c0_i32_0 = arith.constant 0 : i32
    %c0_i32_1 = arith.constant 0 : i32
    return %c0_i32, %c0_i32_0 : i32, i32
  }
  func.func @transform_3(%arg0: i32) -> (i32, i32) {
    %c0_i32 = arith.constant 0 : i32
    %c0_i32_0 = arith.constant 0 : i32
    return %arg0, %c0_i32 : i32, i32
  }
}

module attributes {stable_mosaic.version = 11 : i64} {
  func.func @_linear_kernel(%arg0: i32, %arg1: memref<32x576xbf16, #tpu.memory_space<vmem>>, %arg2: memref<576x128xbf16, #tpu.memory_space<vmem>>, %arg3: memref<1x128xf32, #tpu.memory_space<vmem>>, %arg4: memref<32x128xbf16, #tpu.memory_space<vmem>>) attributes {dimension_semantics = [#tpu.dimension_semantics<parallel>], iteration_bounds = array<i64: 1>, scalar_prefetch = 0 : i64, scratch_operands = 0 : i64, tpu.core_type = #tpu.core_type<tc>, window_params = [{transform_indices = @transform_0, window_bounds = array<i64: 32, 576>}, {pipeline_mode = #tpu.pipeline_mode<synchronous>, transform_indices = @transform_1, window_bounds = array<i64: 576, 128>}, {pipeline_mode = #tpu.pipeline_mode<synchronous>, transform_indices = @transform_2, window_bounds = array<i64: 1, 128>}, {transform_indices = @transform_3, window_bounds = array<i64: 32, 128>}]} {
    %c0 = arith.constant 0 : index
    %c0_0 = arith.constant 0 : index
    %0 = vector.load %arg1[%c0, %c0_0] : memref<32x576xbf16, #tpu.memory_space<vmem>>, vector<32x576xbf16>
    %c0_1 = arith.constant 0 : index
    %c0_2 = arith.constant 0 : index
    %1 = vector.load %arg2[%c0_1, %c0_2] : memref<576x128xbf16, #tpu.memory_space<vmem>>, vector<576x128xbf16>
    %cst = arith.constant dense<0.000000e+00> : vector<32x128xf32>
    %2 = tpu.matmul %0, %1, %cst {dimension_numbers = #tpu.dot_dimension_numbers<[1], [0], [0], [1], [0, 0, 1, 1], [], []>} : vector<32x576xbf16>, vector<576x128xbf16>, vector<32x128xf32> -> vector<32x128xf32>
    %c0_3 = arith.constant 0 : index
    %c0_4 = arith.constant 0 : index
    %3 = vector.load %arg3[%c0_3, %c0_4] : memref<1x128xf32, #tpu.memory_space<vmem>>, vector<1x128xf32>
    %4 = vector.broadcast %3 : vector<1x128xf32> to vector<32x128xf32>
    %5 = arith.addf %2, %4 : vector<32x128xf32>
    %cst_5 = arith.constant 0.000000e+00 : f32
    %6 = vector.broadcast %cst_5 : f32 to vector<32x128xf32>
    %7 = arith.maximumf %5, %6 : vector<32x128xf32>
    %8 = arith.truncf %7 : vector<32x128xf32> to vector<32x128xbf16>
    %c0_6 = arith.constant 0 : index
    %c0_7 = arith.constant 0 : index
    %9 = vector.load %arg4[%c0_6, %c0_7] : memref<32x128xbf16, #tpu.memory_space<vmem>>, vector<32x128xbf16>
    tpu.vector_store %arg4[%c0_6, %c0_7], %8 {strides = array<i32>} : memref<32x128xbf16, #tpu.memory_space<vmem>>, vector<32x128xbf16>,
    return
  }
  func.func @transform_0(%arg0: i32) -> (i32, i32) {
    %c0_i32 = arith.constant 0 : i32
    %c0_i32_0 = arith.constant 0 : i32
    return %arg0, %c0_i32 : i32, i32
  }
  func.func @transform_1(%arg0: i32) -> (i32, i32) {
    %c0_i32 = arith.constant 0 : i32
    %c0_i32_0 = arith.constant 0 : i32
    %c0_i32_1 = arith.constant 0 : i32
    return %c0_i32, %c0_i32_0 : i32, i32
  }
  func.func @transform_2(%arg0: i32) -> (i32, i32) {
    %c0_i32 = arith.constant 0 : i32
    %c0_i32_0 = arith.constant 0 : i32
    %c0_i32_1 = arith.constant 0 : i32
    return %c0_i32, %c0_i32_0 : i32, i32
  }
  func.func @transform_3(%arg0: i32) -> (i32, i32) {
    %c0_i32 = arith.constant 0 : i32
    %c0_i32_0 = arith.constant 0 : i32
    return %arg0, %c0_i32 : i32, i32
  }
}

module attributes {stable_mosaic.version = 11 : i64} {
  func.func @_mlp_kernel(%arg0: i32, %arg1: memref<8x1024xbf16, #tpu.memory_space<vmem>>, %arg2: memref<1024x512xbf16, #tpu.memory_space<vmem>>, %arg3: memref<1x512xf32, #tpu.memory_space<vmem>>, %arg4: memref<512x128xbf16, #tpu.memory_space<vmem>>, %arg5: memref<1x128xf32, #tpu.memory_space<vmem>>, %arg6: memref<8x128xf32, #tpu.memory_space<vmem>>) attributes {dimension_semantics = [#tpu.dimension_semantics<parallel>], iteration_bounds = array<i64: 1>, scalar_prefetch = 0 : i64, scratch_operands = 0 : i64, tpu.core_type = #tpu.core_type<tc>, window_params = [{transform_indices = @transform_0, window_bounds = array<i64: 8, 1024>}, {pipeline_mode = #tpu.pipeline_mode<synchronous>, transform_indices = @transform_1, window_bounds = array<i64: 1024, 512>}, {pipeline_mode = #tpu.pipeline_mode<synchronous>, transform_indices = @transform_2, window_bounds = array<i64: 1, 512>}, {pipeline_mode = #tpu.pipeline_mode<synchronous>, transform_indices = @transform_3, window_bounds = array<i64: 512, 128>}, {pipeline_mode = #tpu.pipeline_mode<synchronous>, transform_indices = @transform_4, window_bounds = array<i64: 1, 128>}, {transform_indices = @transform_5, window_bounds = array<i64: 8, 128>}]} {
    %c0 = arith.constant 0 : index
    %c0_0 = arith.constant 0 : index
    %0 = vector.load %arg1[%c0, %c0_0] : memref<8x1024xbf16, #tpu.memory_space<vmem>>, vector<8x1024xbf16>
    %c0_1 = arith.constant 0 : index
    %c0_2 = arith.constant 0 : index
    %1 = vector.load %arg2[%c0_1, %c0_2] : memref<1024x512xbf16, #tpu.memory_space<vmem>>, vector<1024x512xbf16>
    %cst = arith.constant dense<0.000000e+00> : vector<8x512xf32>
    %2 = tpu.matmul %0, %1, %cst {dimension_numbers = #tpu.dot_dimension_numbers<[1], [0], [0], [1], [0, 0, 1, 1], [], []>} : vector<8x1024xbf16>, vector<1024x512xbf16>, vector<8x512xf32> -> vector<8x512xf32>
    %c0_3 = arith.constant 0 : index
    %c0_4 = arith.constant 0 : index
    %3 = vector.load %arg3[%c0_3, %c0_4] : memref<1x512xf32, #tpu.memory_space<vmem>>, vector<1x512xf32>
    %4 = vector.broadcast %3 : vector<1x512xf32> to vector<8x512xf32>
    %5 = arith.addf %2, %4 : vector<8x512xf32>
    %cst_5 = arith.constant 0.000000e+00 : f32
    %6 = vector.broadcast %cst_5 : f32 to vector<8x512xf32>
    %7 = arith.maximumf %5, %6 : vector<8x512xf32>
    %8 = arith.truncf %7 : vector<8x512xf32> to vector<8x512xbf16>
    %c0_6 = arith.constant 0 : index
    %c0_7 = arith.constant 0 : index
    %9 = vector.load %arg4[%c0_6, %c0_7] : memref<512x128xbf16, #tpu.memory_space<vmem>>, vector<512x128xbf16>
    %cst_8 = arith.constant dense<0.000000e+00> : vector<8x128xf32>
    %10 = tpu.matmul %8, %9, %cst_8 {dimension_numbers = #tpu.dot_dimension_numbers<[1], [0], [0], [1], [0, 0, 1, 1], [], []>} : vector<8x512xbf16>, vector<512x128xbf16>, vector<8x128xf32> -> vector<8x128xf32>
    %c0_9 = arith.constant 0 : index
    %c0_10 = arith.constant 0 : index
    %11 = vector.load %arg5[%c0_9, %c0_10] : memref<1x128xf32, #tpu.memory_space<vmem>>, vector<1x128xf32>
    %12 = vector.broadcast %11 : vector<1x128xf32> to vector<8x128xf32>
    %13 = arith.addf %10, %12 : vector<8x128xf32>
    %c0_11 = arith.constant 0 : index
    %c0_12 = arith.constant 0 : index
    %14 = vector.load %arg6[%c0_11, %c0_12] : memref<8x128xf32, #tpu.memory_space<vmem>>, vector<8x128xf32>
    tpu.vector_store %arg6[%c0_11, %c0_12], %13 {strides = array<i32>} : memref<8x128xf32, #tpu.memory_space<vmem>>, vector<8x128xf32>,
    return
  }
  func.func @transform_0(%arg0: i32) -> (i32, i32) {
    %c0_i32 = arith.constant 0 : i32
    %c0_i32_0 = arith.constant 0 : i32
    return %arg0, %c0_i32 : i32, i32
  }
  func.func @transform_1(%arg0: i32) -> (i32, i32) {
    %c0_i32 = arith.constant 0 : i32
    %c0_i32_0 = arith.constant 0 : i32
    %c0_i32_1 = arith.constant 0 : i32
    return %c0_i32, %c0_i32_0 : i32, i32
  }
  func.func @transform_2(%arg0: i32) -> (i32, i32) {
    %c0_i32 = arith.constant 0 : i32
    %c0_i32_0 = arith.constant 0 : i32
    %c0_i32_1 = arith.constant 0 : i32
    return %c0_i32, %c0_i32_0 : i32, i32
  }
  func.func @transform_3(%arg0: i32) -> (i32, i32) {
    %c0_i32 = arith.constant 0 : i32
    %c0_i32_0 = arith.constant 0 : i32
    %c0_i32_1 = arith.constant 0 : i32
    return %c0_i32, %c0_i32_0 : i32, i32
  }
  func.func @transform_4(%arg0: i32) -> (i32, i32) {
    %c0_i32 = arith.constant 0 : i32
    %c0_i32_0 = arith.constant 0 : i32
    %c0_i32_1 = arith.constant 0 : i32
    return %c0_i32, %c0_i32_0 : i32, i32
  }
  func.func @transform_5(%arg0: i32) -> (i32, i32) {
    %c0_i32 = arith.constant 0 : i32
    %c0_i32_0 = arith.constant 0 : i32
    return %arg0, %c0_i32 : i32, i32
  }
}

</mosaic_0001>

<llo_original>
// kernel: dqn_forward.4
$region0: #{dqn_forward.4}
  #allocation0 [shape = 'u32[]', space=smem, size = 0x4, offset = 0x4, fixed_abs, tag = 'smem constant byte address 0x4 - core index']
  #allocation1 [shape = 'u32[72,128]{1,0:T(1,128)}', space=vmem, size = 0x9000, scoped, tag = 'internal scratch']
  %s0 = inlined_call_operand.vmem [shape: bf16[456,192], index: 0, kind: input, shape index: {}]
  %s1 = inlined_call_operand.vmem [shape: bf16[192,128], index: 1, kind: input, shape index: {}]
  %s2 = inlined_call_operand.vmem [shape: f32[1,128], index: 2, kind: input, shape index: {}]
  %s3 = inlined_call_operand.vmem [shape: bf16[456,128], index: 3, kind: output, shape index: {}]
  %s4 = sld [smem:[#allocation0]]
  $region22: #{dqn_forward.4} parent=0
    _
  %s6 = ssub.s32 1, %s4
  %s7 = scalar_select 0, %s6, %s4
  // Predicated region
  $region2: #{dqn_forward.4} parent=0 // pred_check
    _
  $region3: #{dqn_forward.4} parent=0 // pred_check_branch
    %9 = sbr.rel (0) target = $region5
  $region4: #{dqn_forward.4} parent=0 // pred_region
    _
  $region5: #{dqn_forward.4} parent=0 // pred_fallthru
    _
  // Predicated region
  $region6: #{dqn_forward.4} parent=0 // pred_check
    _
  $region7: #{dqn_forward.4} parent=0 // pred_check_branch
    %11 = sbr.rel (0) target = $region9
  $region8: #{dqn_forward.4} parent=0 // pred_region
    _
  $region9: #{dqn_forward.4} parent=0 // pred_fallthru
    _
  // Predicated region
  $region10: #{dqn_forward.4} parent=0 // pred_check
    _
  $region11: #{dqn_forward.4} parent=0 // pred_check_branch
    %13 = sbr.rel (0) target = $region13
  $region12: #{dqn_forward.4} parent=0 // pred_region
    _
  $region13: #{dqn_forward.4} parent=0 // pred_fallthru
    _
  %v15 = vld [vmem:[%s0] sm:$0xff]
  %v16 = vld [vmem:[%s0 + $0x8] sm:$0xff]
  %v17 = vld [vmem:[%s0 + $0x10] sm:$0xff]
  %v18 = vld [vmem:[%s0 + $0x18] sm:$0xff]
  %v19 = vld [vmem:[%s0 + $0x20] sm:$0xff]
  %v20 = vld [vmem:[%s0 + $0x28] sm:$0xff]
  %v21 = vld [vmem:[%s0 + $0x30] sm:$0xff]
  %v22 = vld [vmem:[%s0 + $0x38] sm:$0xff]
  %v23 = vld [vmem:[%s0 + $0x40] sm:$0xff]
  %v24 = vld [vmem:[%s0 + $0x48] sm:$0xff]
  %v25 = vld [vmem:[%s0 + $0x50] sm:$0xff]
  %v26 = vld [vmem:[%s0 + $0x58] sm:$0xff]
  %v27 = vld [vmem:[%s0 + $0x60] sm:$0xff]
  %v28 = vld [vmem:[%s0 + $0x68] sm:$0xff]
  %v29 = vld [vmem:[%s0 + $0x70] sm:$0xff]
  %v30 = vld [vmem:[%s0 + $0x78] sm:$0xff]
  %v31 = vld [vmem:[%s0 + $0x80] sm:$0xff]
  %v32 = vld [vmem:[%s0 + $0x88] sm:$0xff]
  %v33 = vld [vmem:[%s0 + $0x90] sm:$0xff]
  %v34 = vld [vmem:[%s0 + $0x98] sm:$0xff]
  %v35 = vld [vmem:[%s0 + $0xa0] sm:$0xff]
  %v36 = vld [vmem:[%s0 + $0xa8] sm:$0xff]
  %v37 = vld [vmem:[%s0 + $0xb0] sm:$0xff]
  %v38 = vld [vmem:[%s0 + $0xb8] sm:$0xff]
  %v39 = vld [vmem:[%s0 + $0xc0] sm:$0xff]
  %v40 = vld [vmem:[%s0 + $0xc8] sm:$0xff]
  %v41 = vld [vmem:[%s0 + $0xd0] sm:$0xff]
  %v42 = vld [vmem:[%s0 + $0xd8] sm:$0xff]
  %v43 = vld [vmem:[%s0 + $0xe0] sm:$0xff]
  %v44 = vld [vmem:[%s0 + $0xe8] sm:$0xff]
  %v45 = vld [vmem:[%s0 + $0xf0] sm:$0xff]
  %v46 = vld [vmem:[%s0 + $0xf8] sm:$0xff]
  %v47 = vld [vmem:[%s0 + $0x100] sm:$0xff]
  %v48 = vld [vmem:[%s0 + $0x108] sm:$0xff]
  %v49 = vld [vmem:[%s0 + $0x110] sm:$0xff]
  %v50 = vld [vmem:[%s0 + $0x118] sm:$0xff]
  %v51 = vld [vmem:[%s0 + $0x120] sm:$0xff]
  %v52 = vld [vmem:[%s0 + $0x128] sm:$0xff]
  %v53 = vld [vmem:[%s0 + $0x130] sm:$0xff]
  %v54 = vld [vmem:[%s0 + $0x138] sm:$0xff]
  %v55 = vld [vmem:[%s0 + $0x140] sm:$0xff]
  %v56 = vld [vmem:[%s0 + $0x148] sm:$0xff]
  %v57 = vld [vmem:[%s0 + $0x150] sm:$0xff]
  %v58 = vld [vmem:[%s0 + $0x158] sm:$0xff]
  %v59 = vld [vmem:[%s0 + $0x160] sm:$0xff]
  %v60 = vld [vmem:[%s0 + $0x168] sm:$0xff]
  %v61 = vld [vmem:[%s0 + $0x170] sm:$0xff]
  %v62 = vld [vmem:[%s0 + $0x178] sm:$0xff]
  %v63 = vld [vmem:[%s0 + $0x180] sm:$0xff]
  %v64 = vld [vmem:[%s0 + $0x188] sm:$0xff]
  %v65 = vld [vmem:[%s0 + $0x190] sm:$0xff]
  %v66 = vld [vmem:[%s0 + $0x198] sm:$0xff]
  %v67 = vld [vmem:[%s0 + $0x1a0] sm:$0xff]
  %v68 = vld [vmem:[%s0 + $0x1a8] sm:$0xff]
  %v69 = vld [vmem:[%s0 + $0x1b0] sm:$0xff]
  %v70 = vld [vmem:[%s0 + $0x1b8] sm:$0xff]
  %v71 = vld [vmem:[%s0 + $0x1c0] sm:$0xff]
  %v72 = vld [vmem:[%s1] sm:$0xf]
  %v73 = vld [vmem:[%s1 + $0x4] sm:$0xf]
  %v74 = vld [vmem:[%s1 + $0x8] sm:$0xf]
  %v75 = vld [vmem:[%s1 + $0xc] sm:$0xf]
  %v76 = vld [vmem:[%s1 + $0x10] sm:$0xf]
  %v77 = vld [vmem:[%s1 + $0x14] sm:$0xf]
  %v78 = vld [vmem:[%s1 + $0x18] sm:$0xf]
  %v79 = vld [vmem:[%s1 + $0x1c] sm:$0xf]
  %v80 = vld [vmem:[%s1 + $0x20] sm:$0xf]
  %v81 = vld [vmem:[%s1 + $0x24] sm:$0xf]
  %v82 = vld [vmem:[%s1 + $0x28] sm:$0xf]
  %v83 = vld [vmem:[%s1 + $0x2c] sm:$0xf]
  %v84 = vld [vmem:[%s1 + $0x30] sm:$0xf]
  %v85 = vld [vmem:[%s1 + $0x34] sm:$0xf]
  %v86 = vld [vmem:[%s1 + $0x38] sm:$0xf]
  %v87 = vld [vmem:[%s1 + $0x3c] sm:$0xf]
  %v88 = vld [vmem:[%s1 + $0x40] sm:$0xf]
  %v89 = vld [vmem:[%s1 + $0x44] sm:$0xf]
  %v90 = vld [vmem:[%s1 + $0x48] sm:$0xf]
  %v91 = vld [vmem:[%s1 + $0x4c] sm:$0xf]
  %v92 = vld [vmem:[%s1 + $0x50] sm:$0xf]
  %v93 = vld [vmem:[%s1 + $0x54] sm:$0xf]
  %v94 = vld [vmem:[%s1 + $0x58] sm:$0xf]
  %v95 = vld [vmem:[%s1 + $0x5c] sm:$0xf]
  %v96 = vld [vmem:[%s2] sm:$0x1]
  %v98 = vperm.slane %v96, 0
  %v157 = vunpack.c.l.b16 %v15
  %v158 = vunpack.c.h.b16 %v15
  %v159 = vunpack.c.l.b16 %v16
  %v160 = vunpack.c.h.b16 %v16
  %v161 = vunpack.c.l.b16 %v17
  %v162 = vunpack.c.h.b16 %v17
  %v163 = vunpack.c.l.b16 %v18
  %v164 = vunpack.c.h.b16 %v18
  %v165 = vunpack.c.l.b16 %v19
  %v166 = vunpack.c.h.b16 %v19
  %v167 = vunpack.c.l.b16 %v20
  %v168 = vunpack.c.h.b16 %v20
  %v169 = vunpack.c.l.b16 %v21
  %v170 = vunpack.c.h.b16 %v21
  %v171 = vunpack.c.l.b16 %v22
  %v172 = vunpack.c.h.b16 %v22
  %v173 = vunpack.c.l.b16 %v23
  %v174 = vunpack.c.h.b16 %v23
  %v175 = vunpack.c.l.b16 %v24
  %v176 = vunpack.c.h.b16 %v24
  %v177 = vunpack.c.l.b16 %v25
  %v178 = vunpack.c.h.b16 %v25
  %v179 = vunpack.c.l.b16 %v26
  %v180 = vunpack.c.h.b16 %v26
  %v181 = vunpack.c.l.b16 %v27
  %v182 = vunpack.c.h.b16 %v27
  %v183 = vunpack.c.l.b16 %v28
  %v184 = vunpack.c.h.b16 %v28
  %v185 = vunpack.c.l.b16 %v29
  %v186 = vunpack.c.h.b16 %v29
  %v187 = vunpack.c.l.b16 %v30
  %v188 = vunpack.c.h.b16 %v30
  %v189 = vunpack.c.l.b16 %v31
  %v190 = vunpack.c.h.b16 %v31
  %v191 = vunpack.c.l.b16 %v32
  %v192 = vunpack.c.h.b16 %v32
  %v193 = vunpack.c.l.b16 %v33
  %v194 = vunpack.c.h.b16 %v33
  %v195 = vunpack.c.l.b16 %v34
  %v196 = vunpack.c.h.b16 %v34
  %v197 = vunpack.c.l.b16 %v35
  %v198 = vunpack.c.h.b16 %v35
  %v199 = vunpack.c.l.b16 %v36
  %v200 = vunpack.c.h.b16 %v36
  %v201 = vunpack.c.l.b16 %v37
  %v202 = vunpack.c.h.b16 %v37
  %v203 = vunpack.c.l.b16 %v38
  %v204 = vunpack.c.h.b16 %v38
  %v205 = vunpack.c.l.b16 %v39
  %v206 = vunpack.c.h.b16 %v39
  %v207 = vunpack.c.l.b16 %v40
  %v208 = vunpack.c.h.b16 %v40
  %v209 = vunpack.c.l.b16 %v41
  %v210 = vunpack.c.h.b16 %v41
  %v211 = vunpack.c.l.b16 %v42
  %v212 = vunpack.c.h.b16 %v42
  %v213 = vunpack.c.l.b16 %v43
  %v214 = vunpack.c.h.b16 %v43
  %v215 = vunpack.c.l.b16 %v44
  %v216 = vunpack.c.h.b16 %v44
  %v217 = vunpack.c.l.b16 %v45
  %v218 = vunpack.c.h.b16 %v45
  %v219 = vunpack.c.l.b16 %v46
  %v220 = vunpack.c.h.b16 %v46
  %v221 = vunpack.c.l.b16 %v47
  %v222 = vunpack.c.h.b16 %v47
  %v223 = vunpack.c.l.b16 %v48
  %v224 = vunpack.c.h.b16 %v48
  %v225 = vunpack.c.l.b16 %v49
  %v226 = vunpack.c.h.b16 %v49
  %v227 = vunpack.c.l.b16 %v50
  %v228 = vunpack.c.h.b16 %v50
  %v229 = vunpack.c.l.b16 %v51
  %v230 = vunpack.c.h.b16 %v51
  %v231 = vunpack.c.l.b16 %v52
  %v232 = vunpack.c.h.b16 %v52
  %v233 = vunpack.c.l.b16 %v53
  %v234 = vunpack.c.h.b16 %v53
  %v235 = vunpack.c.l.b16 %v54
  %v236 = vunpack.c.h.b16 %v54
  %v237 = vunpack.c.l.b16 %v55
  %v238 = vunpack.c.h.b16 %v55
  %v239 = vunpack.c.l.b16 %v56
  %v240 = vunpack.c.h.b16 %v56
  %v241 = vunpack.c.l.b16 %v57
  %v242 = vunpack.c.h.b16 %v57
  %v243 = vunpack.c.l.b16 %v58
  %v244 = vunpack.c.h.b16 %v58
  %v245 = vunpack.c.l.b16 %v59
  %v246 = vunpack.c.h.b16 %v59
  %v247 = vunpack.c.l.b16 %v60
  %v248 = vunpack.c.h.b16 %v60
  %v249 = vunpack.c.l.b16 %v61
  %v250 = vunpack.c.h.b16 %v61
  %v251 = vunpack.c.l.b16 %v62
  %v252 = vunpack.c.h.b16 %v62
  %v253 = vunpack.c.l.b16 %v63
  %v254 = vunpack.c.h.b16 %v63
  %v255 = vunpack.c.l.b16 %v64
  %v256 = vunpack.c.h.b16 %v64
  %v257 = vunpack.c.l.b16 %v65
  %v258 = vunpack.c.h.b16 %v65
  %v259 = vunpack.c.l.b16 %v66
  %v260 = vunpack.c.h.b16 %v66
  %v261 = vunpack.c.l.b16 %v67
  %v262 = vunpack.c.h.b16 %v67
  %v263 = vunpack.c.l.b16 %v68
  %v264 = vunpack.c.h.b16 %v68
  %v265 = vunpack.c.l.b16 %v69
  %v266 = vunpack.c.h.b16 %v69
  %v267 = vunpack.c.l.b16 %v70
  %v268 = vunpack.c.h.b16 %v70
  %v269 = vunpack.c.l.b16 %v71
  %v270 = vunpack.c.h.b16 %v71
  %v271 = vpack.c.b16 %v159, %v157
  %v272 = vpack.c.b16 %v160, %v158
  %v273 = vpack.c.b16 %v163, %v161
  %v274 = vpack.c.b16 %v164, %v162
  %v275 = vpack.c.b16 %v167, %v165
  %v276 = vpack.c.b16 %v168, %v166
  %v277 = vpack.c.b16 %v171, %v169
  %v278 = vpack.c.b16 %v172, %v170
  %v279 = vpack.c.b16 %v175, %v173
  %v280 = vpack.c.b16 %v176, %v174
  %v281 = vpack.c.b16 %v179, %v177
  %v282 = vpack.c.b16 %v180, %v178
  %v283 = vpack.c.b16 %v183, %v181
  %v284 = vpack.c.b16 %v184, %v182
  %v285 = vpack.c.b16 %v187, %v185
  %v286 = vpack.c.b16 %v188, %v186
  %v287 = vpack.c.b16 %v191, %v189
  %v288 = vpack.c.b16 %v192, %v190
  %v289 = vpack.c.b16 %v195, %v193
  %v290 = vpack.c.b16 %v196, %v194
  %v291 = vpack.c.b16 %v199, %v197
  %v292 = vpack.c.b16 %v200, %v198
  %v293 = vpack.c.b16 %v203, %v201
  %v294 = vpack.c.b16 %v204, %v202
  %v295 = vpack.c.b16 %v207, %v205
  %v296 = vpack.c.b16 %v208, %v206
  %v297 = vpack.c.b16 %v211, %v209
  %v298 = vpack.c.b16 %v212, %v210
  %v299 = vpack.c.b16 %v215, %v213
  %v300 = vpack.c.b16 %v216, %v214
  %v301 = vpack.c.b16 %v219, %v217
  %v302 = vpack.c.b16 %v220, %v218
  %v303 = vpack.c.b16 %v223, %v221
  %v304 = vpack.c.b16 %v224, %v222
  %v305 = vpack.c.b16 %v227, %v225
  %v306 = vpack.c.b16 %v228, %v226
  %v307 = vpack.c.b16 %v231, %v229
  %v308 = vpack.c.b16 %v232, %v230
  %v309 = vpack.c.b16 %v235, %v233
  %v310 = vpack.c.b16 %v236, %v234
  %v311 = vpack.c.b16 %v239, %v237
  %v312 = vpack.c.b16 %v240, %v238
  %v313 = vpack.c.b16 %v243, %v241
  %v314 = vpack.c.b16 %v244, %v242
  %v315 = vpack.c.b16 %v247, %v245
  %v316 = vpack.c.b16 %v248, %v246
  %v317 = vpack.c.b16 %v251, %v249
  %v318 = vpack.c.b16 %v252, %v250
  %v319 = vpack.c.b16 %v255, %v253
  %v320 = vpack.c.b16 %v256, %v254
  %v321 = vpack.c.b16 %v259, %v257
  %v322 = vpack.c.b16 %v260, %v258
  %v323 = vpack.c.b16 %v263, %v261
  %v324 = vpack.c.b16 %v264, %v262
  %v325 = vpack.c.b16 %v267, %v265
  %v326 = vpack.c.b16 %v268, %v266
  %v327 = vpack.c.b16 %v269, %v269
  %v328 = vpack.c.b16 %v270, %v270
  %v382 = vunpack.c.l.b16 %v72
  %v383 = vunpack.c.l.b16 %v73
  %v384 = vunpack.c.l.b16 %v74
  %v385 = vunpack.c.l.b16 %v75
  %v386 = vunpack.c.l.b16 %v76
  %v387 = vunpack.c.l.b16 %v77
  %v388 = vunpack.c.l.b16 %v78
  %v389 = vunpack.c.l.b16 %v79
  %v390 = vunpack.c.l.b16 %v80
  %v391 = vunpack.c.l.b16 %v81
  %v392 = vunpack.c.l.b16 %v82
  %v393 = vunpack.c.l.b16 %v83
  %v394 = vunpack.c.l.b16 %v84
  %v395 = vunpack.c.l.b16 %v85
  %v396 = vunpack.c.l.b16 %v86
  %v397 = vunpack.c.l.b16 %v87
  %v398 = vunpack.c.l.b16 %v88
  %v399 = vunpack.c.l.b16 %v89
  %v400 = vunpack.c.l.b16 %v90
  %v401 = vunpack.c.l.b16 %v91
  %v402 = vunpack.c.l.b16 %v92
  %v403 = vunpack.c.l.b16 %v93
  %v404 = vunpack.c.l.b16 %v94
  %v405 = vunpack.c.l.b16 %v95
  %v406 = vpack.c.b16 %v383, %v382
  %v407 = vpack.c.b16 %v385, %v384
  %v408 = vpack.c.b16 %v387, %v386
  %v409 = vpack.c.b16 %v389, %v388
  %v410 = vpack.c.b16 %v391, %v390
  %v411 = vpack.c.b16 %v393, %v392
  %v412 = vpack.c.b16 %v395, %v394
  %v413 = vpack.c.b16 %v397, %v396
  %v414 = vpack.c.b16 %v399, %v398
  %v415 = vpack.c.b16 %v401, %v400
  %v416 = vpack.c.b16 %v403, %v402
  %v417 = vpack.c.b16 %v405, %v404
  %vm430 = vcmask 523264
  %v432 = vsel %vm430, %v272, 0
  %v435 = vsel %vm430, %v274, 0
  %v438 = vsel %vm430, %v276, 0
  %v441 = vsel %vm430, %v278, 0
  %v444 = vsel %vm430, %v280, 0
  %v447 = vsel %vm430, %v282, 0
  %v450 = vsel %vm430, %v284, 0
  %v453 = vsel %vm430, %v286, 0
  %v456 = vsel %vm430, %v288, 0
  %v459 = vsel %vm430, %v290, 0
  %v462 = vsel %vm430, %v292, 0
  %v465 = vsel %vm430, %v294, 0
  %v468 = vsel %vm430, %v296, 0
  %v471 = vsel %vm430, %v298, 0
  %v474 = vsel %vm430, %v300, 0
  %v477 = vsel %vm430, %v302, 0
  %v480 = vsel %vm430, %v304, 0
  %v483 = vsel %vm430, %v306, 0
  %v486 = vsel %vm430, %v308, 0
  %v489 = vsel %vm430, %v310, 0
  %v492 = vsel %vm430, %v312, 0
  %v495 = vsel %vm430, %v314, 0
  %v498 = vsel %vm430, %v316, 0
  %v501 = vsel %vm430, %v318, 0
  %v504 = vsel %vm430, %v320, 0
  %v507 = vsel %vm430, %v322, 0
  %v510 = vsel %vm430, %v324, 0
  %v513 = vsel %vm430, %v326, 0
  %v516 = vsel %vm430, %v328, 0
  %518 = vmatpush.bf16.msra.mxu0 %v413
  %519 = vmatpush.bf16.msra.mxu0 %v412
  %520 = vmatpush.bf16.msra.mxu0 %v411
  %521 = vmatpush.bf16.msra.mxu0 %v410
  %522 = vmatpush.bf16.msra.mxu0 %v409
  %523 = vmatpush.bf16.msra.mxu0 %v408
  %524 = vmatpush.bf16.msra.mxu0 %v407
  %525 = vmatpush.bf16.msra.mxu0 %v406
  %526 = vmatmul.bf16.gmra.mxu0 %v271
  %v527 = vpop.f32.mrf.mxu0
  %v528 = vadd.f32 %v98, %v527
  %v529 = vpop.f32.mrf.mxu0
  %v530 = vadd.f32 %v98, %v529
  %531 = vmatmul.bf16.gmra.mxu0 %v273
  %v532 = vpop.f32.mrf.mxu0
  %v533 = vadd.f32 %v98, %v532
  %v534 = vpop.f32.mrf.mxu0
  %v535 = vadd.f32 %v98, %v534
  %536 = vmatmul.bf16.gmra.mxu0 %v275
  %v537 = vpop.f32.mrf.mxu0
  %v538 = vadd.f32 %v98, %v537
  %v539 = vpop.f32.mrf.mxu0
  %v540 = vadd.f32 %v98, %v539
  %541 = vmatmul.bf16.gmra.mxu0 %v277
  %v542 = vpop.f32.mrf.mxu0
  %v543 = vadd.f32 %v98, %v542
  %v544 = vpop.f32.mrf.mxu0
  %v545 = vadd.f32 %v98, %v544
  %546 = vmatmul.bf16.gmra.mxu0 %v279
  %v547 = vpop.f32.mrf.mxu0
  %v548 = vadd.f32 %v98, %v547
  %v549 = vpop.f32.mrf.mxu0
  %v550 = vadd.f32 %v98, %v549
  %551 = vmatmul.bf16.gmra.mxu0 %v281
  %v552 = vpop.f32.mrf.mxu0
  %v553 = vadd.f32 %v98, %v552
  %v554 = vpop.f32.mrf.mxu0
  %v555 = vadd.f32 %v98, %v554
  %556 = vmatmul.bf16.gmra.mxu0 %v283
  %v557 = vpop.f32.mrf.mxu0
  %v558 = vadd.f32 %v98, %v557
  %v559 = vpop.f32.mrf.mxu0
  %v560 = vadd.f32 %v98, %v559
  %561 = vmatmul.bf16.gmra.mxu0 %v285
  %v562 = vpop.f32.mrf.mxu0
  %v563 = vadd.f32 %v98, %v562
  %v564 = vpop.f32.mrf.mxu0
  %v565 = vadd.f32 %v98, %v564
  %566 = vmatmul.bf16.gmra.mxu0 %v287
  %v567 = vpop.f32.mrf.mxu0
  %v568 = vadd.f32 %v98, %v567
  %v569 = vpop.f32.mrf.mxu0
  %v570 = vadd.f32 %v98, %v569
  %571 = vmatmul.bf16.gmra.mxu0 %v289
  %v572 = vpop.f32.mrf.mxu0
  %v573 = vadd.f32 %v98, %v572
  %v574 = vpop.f32.mrf.mxu0
  %v575 = vadd.f32 %v98, %v574
  %576 = vmatmul.bf16.gmra.mxu0 %v291
  %v577 = vpop.f32.mrf.mxu0
  %v578 = vadd.f32 %v98, %v577
  %v579 = vpop.f32.mrf.mxu0
  %v580 = vadd.f32 %v98, %v579
  %581 = vmatmul.bf16.gmra.mxu0 %v293
  %v582 = vpop.f32.mrf.mxu0
  %v583 = vadd.f32 %v98, %v582
  %v584 = vpop.f32.mrf.mxu0
  %v585 = vadd.f32 %v98, %v584
  %586 = vmatmul.bf16.gmra.mxu0 %v295
  %v587 = vpop.f32.mrf.mxu0
  %v588 = vadd.f32 %v98, %v587
  %v589 = vpop.f32.mrf.mxu0
  %v590 = vadd.f32 %v98, %v589
  %591 = vmatmul.bf16.gmra.mxu0 %v297
  %v592 = vpop.f32.mrf.mxu0
  %v593 = vadd.f32 %v98, %v592
  %v594 = vpop.f32.mrf.mxu0
  %v595 = vadd.f32 %v98, %v594
  %596 = vmatmul.bf16.gmra.mxu0 %v299
  %v597 = vpop.f32.mrf.mxu0
  %v598 = vadd.f32 %v98, %v597
  %v599 = vpop.f32.mrf.mxu0
  %v600 = vadd.f32 %v98, %v599
  %601 = vmatmul.bf16.gmra.mxu0 %v301
  %v602 = vpop.f32.mrf.mxu0
  %v603 = vadd.f32 %v98, %v602
  %v604 = vpop.f32.mrf.mxu0
  %v605 = vadd.f32 %v98, %v604
  %606 = vmatmul.bf16.gmra.mxu0 %v303
  %v607 = vpop.f32.mrf.mxu0
  %v608 = vadd.f32 %v98, %v607
  %v609 = vpop.f32.mrf.mxu0
  %v610 = vadd.f32 %v98, %v609
  %611 = vmatmul.bf16.gmra.mxu0 %v305
  %v612 = vpop.f32.mrf.mxu0
  %v613 = vadd.f32 %v98, %v612
  %v614 = vpop.f32.mrf.mxu0
  %v615 = vadd.f32 %v98, %v614
  %616 = vmatmul.bf16.gmra.mxu0 %v307
  %v617 = vpop.f32.mrf.mxu0
  %v618 = vadd.f32 %v98, %v617
  %v619 = vpop.f32.mrf.mxu0
  %v620 = vadd.f32 %v98, %v619
  %621 = vmatmul.bf16.gmra.mxu0 %v309
  %v622 = vpop.f32.mrf.mxu0
  %v623 = vadd.f32 %v98, %v622
  %v624 = vpop.f32.mrf.mxu0
  %v625 = vadd.f32 %v98, %v624
  %626 = vmatmul.bf16.gmra.mxu0 %v311
  %v627 = vpop.f32.mrf.mxu0
  %v628 = vadd.f32 %v98, %v627
  %v629 = vpop.f32.mrf.mxu0
  %v630 = vadd.f32 %v98, %v629
  %631 = vmatmul.bf16.gmra.mxu0 %v313
  %v632 = vpop.f32.mrf.mxu0
  %v633 = vadd.f32 %v98, %v632
  %v634 = vpop.f32.mrf.mxu0
  %v635 = vadd.f32 %v98, %v634
  %636 = vmatmul.bf16.gmra.mxu0 %v315
  %v637 = vpop.f32.mrf.mxu0
  %v638 = vadd.f32 %v98, %v637
  %v639 = vpop.f32.mrf.mxu0
  %v640 = vadd.f32 %v98, %v639
  %641 = vmatmul.bf16.gmra.mxu0 %v317
  %v642 = vpop.f32.mrf.mxu0
  %v643 = vadd.f32 %v98, %v642
  %v644 = vpop.f32.mrf.mxu0
  %v645 = vadd.f32 %v98, %v644
  %646 = vmatmul.bf16.gmra.mxu0 %v319
  %v647 = vpop.f32.mrf.mxu0
  %v648 = vadd.f32 %v98, %v647
  %v649 = vpop.f32.mrf.mxu0
  %v650 = vadd.f32 %v98, %v649
  %651 = vmatmul.bf16.gmra.mxu0 %v321
  %v652 = vpop.f32.mrf.mxu0
  %v653 = vadd.f32 %v98, %v652
  %v654 = vpop.f32.mrf.mxu0
  %v655 = vadd.f32 %v98, %v654
  %656 = vmatmul.bf16.gmra.mxu0 %v323
  %v657 = vpop.f32.mrf.mxu0
  %v658 = vadd.f32 %v98, %v657
  %v659 = vpop.f32.mrf.mxu0
  %v660 = vadd.f32 %v98, %v659
  %661 = vmatmul.bf16.gmra.mxu0 %v325
  %v662 = vpop.f32.mrf.mxu0
  %v663 = vadd.f32 %v98, %v662
  %v664 = vpop.f32.mrf.mxu0
  %v665 = vadd.f32 %v98, %v664
  %666 = vmatmul.bf16.gmra.mxu0 %v327
  %v667 = vpop.f32.mrf.mxu0
  %v668 = vadd.f32 %v98, %v667
  %v669 = vpop.f32.mrf.mxu0
  %670 = vdwg.mxu0
  %671 = vmatpush.bf16.msra.mxu0 0
  %672 = vmatpush.bf16.msra.mxu0 0
  %673 = vmatpush.bf16.msra.mxu0 0
  %674 = vmatpush.bf16.msra.mxu0 0
  %675 = vmatpush.bf16.msra.mxu0 %v417
  %676 = vmatpush.bf16.msra.mxu0 %v416
  %677 = vmatpush.bf16.msra.mxu0 %v415
  %678 = vmatpush.bf16.msra.mxu0 %v414
  %679 = vmatmul.bf16.gmra.mxu0 %v432
  %v680 = vpop.f32.mrf.mxu0
  %v681 = vadd.f32 %v528, %v680
  %v682 = vpop.f32.mrf.mxu0
  %v683 = vadd.f32 %v530, %v682
  %684 = vmatmul.bf16.gmra.mxu0 %v435
  %v685 = vpop.f32.mrf.mxu0
  %v686 = vadd.f32 %v533, %v685
  %v687 = vpop.f32.mrf.mxu0
  %v688 = vadd.f32 %v535, %v687
  %689 = vmatmul.bf16.gmra.mxu0 %v438
  %v690 = vpop.f32.mrf.mxu0
  %v691 = vadd.f32 %v538, %v690
  %v692 = vpop.f32.mrf.mxu0
  %v693 = vadd.f32 %v540, %v692
  %694 = vmatmul.bf16.gmra.mxu0 %v441
  %v695 = vpop.f32.mrf.mxu0
  %v696 = vadd.f32 %v543, %v695
  %v697 = vpop.f32.mrf.mxu0
  %v698 = vadd.f32 %v545, %v697
  %699 = vmatmul.bf16.gmra.mxu0 %v444
  %v700 = vpop.f32.mrf.mxu0
  %v701 = vadd.f32 %v548, %v700
  %v702 = vpop.f32.mrf.mxu0
  %v703 = vadd.f32 %v550, %v702
  %704 = vmatmul.bf16.gmra.mxu0 %v447
  %v705 = vpop.f32.mrf.mxu0
  %v706 = vadd.f32 %v553, %v705
  %v707 = vpop.f32.mrf.mxu0
  %v708 = vadd.f32 %v555, %v707
  %709 = vmatmul.bf16.gmra.mxu0 %v450
  %v710 = vpop.f32.mrf.mxu0
  %v711 = vadd.f32 %v558, %v710
  %v712 = vpop.f32.mrf.mxu0
  %v713 = vadd.f32 %v560, %v712
  %714 = vmatmul.bf16.gmra.mxu0 %v453
  %v715 = vpop.f32.mrf.mxu0
  %v716 = vadd.f32 %v563, %v715
  %v717 = vpop.f32.mrf.mxu0
  %v718 = vadd.f32 %v565, %v717
  %719 = vmatmul.bf16.gmra.mxu0 %v456
  %v720 = vpop.f32.mrf.mxu0
  %v721 = vadd.f32 %v568, %v720
  %v722 = vpop.f32.mrf.mxu0
  %v723 = vadd.f32 %v570, %v722
  %724 = vmatmul.bf16.gmra.mxu0 %v459
  %v725 = vpop.f32.mrf.mxu0
  %v726 = vadd.f32 %v573, %v725
  %v727 = vpop.f32.mrf.mxu0
  %v728 = vadd.f32 %v575, %v727
  %729 = vmatmul.bf16.gmra.mxu0 %v462
  %v730 = vpop.f32.mrf.mxu0
  %v731 = vadd.f32 %v578, %v730
  %v732 = vpop.f32.mrf.mxu0
  %v733 = vadd.f32 %v580, %v732
  %734 = vmatmul.bf16.gmra.mxu0 %v465
  %v735 = vpop.f32.mrf.mxu0
  %v736 = vadd.f32 %v583, %v735
  %v737 = vpop.f32.mrf.mxu0
  %v738 = vadd.f32 %v585, %v737
  %739 = vmatmul.bf16.gmra.mxu0 %v468
  %v740 = vpop.f32.mrf.mxu0
  %v741 = vadd.f32 %v588, %v740
  %v742 = vpop.f32.mrf.mxu0
  %v743 = vadd.f32 %v590, %v742
  %744 = vmatmul.bf16.gmra.mxu0 %v471
  %v745 = vpop.f32.mrf.mxu0
  %v746 = vadd.f32 %v593, %v745
  %v747 = vpop.f32.mrf.mxu0
  %v748 = vadd.f32 %v595, %v747
  %749 = vmatmul.bf16.gmra.mxu0 %v474
  %v750 = vpop.f32.mrf.mxu0
  %v751 = vadd.f32 %v598, %v750
  %v752 = vpop.f32.mrf.mxu0
  %v753 = vadd.f32 %v600, %v752
  %754 = vmatmul.bf16.gmra.mxu0 %v477
  %v755 = vpop.f32.mrf.mxu0
  %v756 = vadd.f32 %v603, %v755
  %v757 = vpop.f32.mrf.mxu0
  %v758 = vadd.f32 %v605, %v757
  %759 = vmatmul.bf16.gmra.mxu0 %v480
  %v760 = vpop.f32.mrf.mxu0
  %v761 = vadd.f32 %v608, %v760
  %v762 = vpop.f32.mrf.mxu0
  %v763 = vadd.f32 %v610, %v762
  %764 = vmatmul.bf16.gmra.mxu0 %v483
  %v765 = vpop.f32.mrf.mxu0
  %v766 = vadd.f32 %v613, %v765
  %v767 = vpop.f32.mrf.mxu0
  %v768 = vadd.f32 %v615, %v767
  %769 = vmatmul.bf16.gmra.mxu0 %v486
  %v770 = vpop.f32.mrf.mxu0
  %v771 = vadd.f32 %v618, %v770
  %v772 = vpop.f32.mrf.mxu0
  %v773 = vadd.f32 %v620, %v772
  %774 = vmatmul.bf16.gmra.mxu0 %v489
  %v775 = vpop.f32.mrf.mxu0
  %v776 = vadd.f32 %v623, %v775
  %v777 = vpop.f32.mrf.mxu0
  %v778 = vadd.f32 %v625, %v777
  %779 = vmatmul.bf16.gmra.mxu0 %v492
  %v780 = vpop.f32.mrf.mxu0
  %v781 = vadd.f32 %v628, %v780
  %v782 = vpop.f32.mrf.mxu0
  %v783 = vadd.f32 %v630, %v782
  %784 = vmatmul.bf16.gmra.mxu0 %v495
  %v785 = vpop.f32.mrf.mxu0
  %v786 = vadd.f32 %v633, %v785
  %v787 = vpop.f32.mrf.mxu0
  %v788 = vadd.f32 %v635, %v787
  %789 = vmatmul.bf16.gmra.mxu0 %v498
  %v790 = vpop.f32.mrf.mxu0
  %v791 = vadd.f32 %v638, %v790
  %v792 = vpop.f32.mrf.mxu0
  %v793 = vadd.f32 %v640, %v792
  %794 = vmatmul.bf16.gmra.mxu0 %v501
  %v795 = vpop.f32.mrf.mxu0
  %v796 = vadd.f32 %v643, %v795
  %v797 = vpop.f32.mrf.mxu0
  %v798 = vadd.f32 %v645, %v797
  %799 = vmatmul.bf16.gmra.mxu0 %v504
  %v800 = vpop.f32.mrf.mxu0
  %v801 = vadd.f32 %v648, %v800
  %v802 = vpop.f32.mrf.mxu0
  %v803 = vadd.f32 %v650, %v802
  %804 = vmatmul.bf16.gmra.mxu0 %v507
  %v805 = vpop.f32.mrf.mxu0
  %v806 = vadd.f32 %v653, %v805
  %v807 = vpop.f32.mrf.mxu0
  %v808 = vadd.f32 %v655, %v807
  %809 = vmatmul.bf16.gmra.mxu0 %v510
  %v810 = vpop.f32.mrf.mxu0
  %v811 = vadd.f32 %v658, %v810
  %v812 = vpop.f32.mrf.mxu0
  %v813 = vadd.f32 %v660, %v812
  %814 = vmatmul.bf16.gmra.mxu0 %v513
  %v815 = vpop.f32.mrf.mxu0
  %v816 = vadd.f32 %v663, %v815
  %v817 = vpop.f32.mrf.mxu0
  %v818 = vadd.f32 %v665, %v817
  %819 = vmatmul.bf16.gmra.mxu0 %v516
  %v820 = vpop.f32.mrf.mxu0
  %v821 = vadd.f32 %v668, %v820
  %v822 = vpop.f32.mrf.mxu0
  %823 = vdwg.mxu0
  %v824 = vmax.f32 %v681, 0.0
  %v825 = vmax.f32 %v683, 0.0
  %v826 = vmax.f32 %v686, 0.0
  %v827 = vmax.f32 %v688, 0.0
  %v828 = vmax.f32 %v691, 0.0
  %v829 = vmax.f32 %v693, 0.0
  %v830 = vmax.f32 %v696, 0.0
  %v831 = vmax.f32 %v698, 0.0
  %v832 = vmax.f32 %v701, 0.0
  %v833 = vmax.f32 %v703, 0.0
  %v834 = vmax.f32 %v706, 0.0
  %v835 = vmax.f32 %v708, 0.0
  %v836 = vmax.f32 %v711, 0.0
  %v837 = vmax.f32 %v713, 0.0
  %v838 = vmax.f32 %v716, 0.0
  %v839 = vmax.f32 %v718, 0.0
  %v840 = vmax.f32 %v721, 0.0
  %v841 = vmax.f32 %v723, 0.0
  %v842 = vmax.f32 %v726, 0.0
  %v843 = vmax.f32 %v728, 0.0
  %v844 = vmax.f32 %v731, 0.0
  %v845 = vmax.f32 %v733, 0.0
  %v846 = vmax.f32 %v736, 0.0
  %v847 = vmax.f32 %v738, 0.0
  %v848 = vmax.f32 %v741, 0.0
  %v849 = vmax.f32 %v743, 0.0
  %v850 = vmax.f32 %v746, 0.0
  %v851 = vmax.f32 %v748, 0.0
  %v852 = vmax.f32 %v751, 0.0
  %v853 = vmax.f32 %v753, 0.0
  %v854 = vmax.f32 %v756, 0.0
  %v855 = vmax.f32 %v758, 0.0
  %v856 = vmax.f32 %v761, 0.0
  %v857 = vmax.f32 %v763, 0.0
  %v858 = vmax.f32 %v766, 0.0
  %v859 = vmax.f32 %v768, 0.0
  %v860 = vmax.f32 %v771, 0.0
  %v861 = vmax.f32 %v773, 0.0
  %v862 = vmax.f32 %v776, 0.0
  %v863 = vmax.f32 %v778, 0.0
  %v864 = vmax.f32 %v781, 0.0
  %v865 = vmax.f32 %v783, 0.0
  %v866 = vmax.f32 %v786, 0.0
  %v867 = vmax.f32 %v788, 0.0
  %v868 = vmax.f32 %v791, 0.0
  %v869 = vmax.f32 %v793, 0.0
  %v870 = vmax.f32 %v796, 0.0
  %v871 = vmax.f32 %v798, 0.0
  %v872 = vmax.f32 %v801, 0.0
  %v873 = vmax.f32 %v803, 0.0
  %v874 = vmax.f32 %v806, 0.0
  %v875 = vmax.f32 %v808, 0.0
  %v876 = vmax.f32 %v811, 0.0
  %v877 = vmax.f32 %v813, 0.0
  %v878 = vmax.f32 %v816, 0.0
  %v879 = vmax.f32 %v818, 0.0
  %v880 = vmax.f32 %v821, 0.0
  %v881 = vpack.c.bf16 %v824, %v824
  %v882 = vpack.c.bf16 %v825, %v825
  %v883 = vpack.c.bf16 %v826, %v826
  %v884 = vpack.c.bf16 %v827, %v827
  %v885 = vpack.c.bf16 %v828, %v828
  %v886 = vpack.c.bf16 %v829, %v829
  %v887 = vpack.c.bf16 %v830, %v830
  %v888 = vpack.c.bf16 %v831, %v831
  %v889 = vpack.c.bf16 %v832, %v832
  %v890 = vpack.c.bf16 %v833, %v833
  %v891 = vpack.c.bf16 %v834, %v834
  %v892 = vpack.c.bf16 %v835, %v835
  %v893 = vpack.c.bf16 %v836, %v836
  %v894 = vpack.c.bf16 %v837, %v837
  %v895 = vpack.c.bf16 %v838, %v838
  %v896 = vpack.c.bf16 %v839, %v839
  %v897 = vpack.c.bf16 %v840, %v840
  %v898 = vpack.c.bf16 %v841, %v841
  %v899 = vpack.c.bf16 %v842, %v842
  %v900 = vpack.c.bf16 %v843, %v843
  %v901 = vpack.c.bf16 %v844, %v844
  %v902 = vpack.c.bf16 %v845, %v845
  %v903 = vpack.c.bf16 %v846, %v846
  %v904 = vpack.c.bf16 %v847, %v847
  %v905 = vpack.c.bf16 %v848, %v848
  %v906 = vpack.c.bf16 %v849, %v849
  %v907 = vpack.c.bf16 %v850, %v850
  %v908 = vpack.c.bf16 %v851, %v851
  %v909 = vpack.c.bf16 %v852, %v852
  %v910 = vpack.c.bf16 %v853, %v853
  %v911 = vpack.c.bf16 %v854, %v854
  %v912 = vpack.c.bf16 %v855, %v855
  %v913 = vpack.c.bf16 %v856, %v856
  %v914 = vpack.c.bf16 %v857, %v857
  %v915 = vpack.c.bf16 %v858, %v858
  %v916 = vpack.c.bf16 %v859, %v859
  %v917 = vpack.c.bf16 %v860, %v860
  %v918 = vpack.c.bf16 %v861, %v861
  %v919 = vpack.c.bf16 %v862, %v862
  %v920 = vpack.c.bf16 %v863, %v863
  %v921 = vpack.c.bf16 %v864, %v864
  %v922 = vpack.c.bf16 %v865, %v865
  %v923 = vpack.c.bf16 %v866, %v866
  %v924 = vpack.c.bf16 %v867, %v867
  %v925 = vpack.c.bf16 %v868, %v868
  %v926 = vpack.c.bf16 %v869, %v869
  %v927 = vpack.c.bf16 %v870, %v870
  %v928 = vpack.c.bf16 %v871, %v871
  %v929 = vpack.c.bf16 %v872, %v872
  %v930 = vpack.c.bf16 %v873, %v873
  %v931 = vpack.c.bf16 %v874, %v874
  %v932 = vpack.c.bf16 %v875, %v875
  %v933 = vpack.c.bf16 %v876, %v876
  %v934 = vpack.c.bf16 %v877, %v877
  %v935 = vpack.c.bf16 %v878, %v878
  %v936 = vpack.c.bf16 %v879, %v879
  %v937 = vpack.c.bf16 %v880, %v880
  %938 = vst [vmem:[%s3] sm:$0xf] %v881
  %939 = vst [vmem:[%s3 + $0x4] sm:$0xf] %v882
  %940 = vst [vmem:[%s3 + $0x8] sm:$0xf] %v883
  %941 = vst [vmem:[%s3 + $0xc] sm:$0xf] %v884
  %942 = vst [vmem:[%s3 + $0x10] sm:$0xf] %v885
  %943 = vst [vmem:[%s3 + $0x14] sm:$0xf] %v886
  %944 = vst [vmem:[%s3 + $0x18] sm:$0xf] %v887
  %945 = vst [vmem:[%s3 + $0x1c] sm:$0xf] %v888
  %946 = vst [vmem:[%s3 + $0x20] sm:$0xf] %v889
  %947 = vst [vmem:[%s3 + $0x24] sm:$0xf] %v890
  %948 = vst [vmem:[%s3 + $0x28] sm:$0xf] %v891
  %949 = vst [vmem:[%s3 + $0x2c] sm:$0xf] %v892
  %950 = vst [vmem:[%s3 + $0x30] sm:$0xf] %v893
  %951 = vst [vmem:[%s3 + $0x34] sm:$0xf] %v894
  %952 = vst [vmem:[%s3 + $0x38] sm:$0xf] %v895
  %953 = vst [vmem:[%s3 + $0x3c] sm:$0xf] %v896
  %954 = vst [vmem:[%s3 + $0x40] sm:$0xf] %v897
  %955 = vst [vmem:[%s3 + $0x44] sm:$0xf] %v898
  %956 = vst [vmem:[%s3 + $0x48] sm:$0xf] %v899
  %957 = vst [vmem:[%s3 + $0x4c] sm:$0xf] %v900
  %958 = vst [vmem:[%s3 + $0x50] sm:$0xf] %v901
  %959 = vst [vmem:[%s3 + $0x54] sm:$0xf] %v902
  %960 = vst [vmem:[%s3 + $0x58] sm:$0xf] %v903
  %961 = vst [vmem:[%s3 + $0x5c] sm:$0xf] %v904
  %962 = vst [vmem:[%s3 + $0x60] sm:$0xf] %v905
  %963 = vst [vmem:[%s3 + $0x64] sm:$0xf] %v906
  %964 = vst [vmem:[%s3 + $0x68] sm:$0xf] %v907
  %965 = vst [vmem:[%s3 + $0x6c] sm:$0xf] %v908
  %966 = vst [vmem:[%s3 + $0x70] sm:$0xf] %v909
  %967 = vst [vmem:[%s3 + $0x74] sm:$0xf] %v910
  %968 = vst [vmem:[%s3 + $0x78] sm:$0xf] %v911
  %969 = vst [vmem:[%s3 + $0x7c] sm:$0xf] %v912
  %970 = vst [vmem:[%s3 + $0x80] sm:$0xf] %v913
  %971 = vst [vmem:[%s3 + $0x84] sm:$0xf] %v914
  %972 = vst [vmem:[%s3 + $0x88] sm:$0xf] %v915
  %973 = vst [vmem:[%s3 + $0x8c] sm:$0xf] %v916
  %974 = vst [vmem:[%s3 + $0x90] sm:$0xf] %v917
  %975 = vst [vmem:[%s3 + $0x94] sm:$0xf] %v918
  %976 = vst [vmem:[%s3 + $0x98] sm:$0xf] %v919
  %977 = vst [vmem:[%s3 + $0x9c] sm:$0xf] %v920
  %978 = vst [vmem:[%s3 + $0xa0] sm:$0xf] %v921
  %979 = vst [vmem:[%s3 + $0xa4] sm:$0xf] %v922
  %980 = vst [vmem:[%s3 + $0xa8] sm:$0xf] %v923
  %981 = vst [vmem:[%s3 + $0xac] sm:$0xf] %v924
  %982 = vst [vmem:[%s3 + $0xb0] sm:$0xf] %v925
  %983 = vst [vmem:[%s3 + $0xb4] sm:$0xf] %v926
  %984 = vst [vmem:[%s3 + $0xb8] sm:$0xf] %v927
  %985 = vst [vmem:[%s3 + $0xbc] sm:$0xf] %v928
  %986 = vst [vmem:[%s3 + $0xc0] sm:$0xf] %v929
  %987 = vst [vmem:[%s3 + $0xc4] sm:$0xf] %v930
  %988 = vst [vmem:[%s3 + $0xc8] sm:$0xf] %v931
  %989 = vst [vmem:[%s3 + $0xcc] sm:$0xf] %v932
  %990 = vst [vmem:[%s3 + $0xd0] sm:$0xf] %v933
  %991 = vst [vmem:[%s3 + $0xd4] sm:$0xf] %v934
  %992 = vst [vmem:[%s3 + $0xd8] sm:$0xf] %v935
  %993 = vst [vmem:[%s3 + $0xdc] sm:$0xf] %v936
  %994 = vst [vmem:[%s3 + $0xe0] sm:$0xf] %v937
  // Predicated region
  $region14: #{dqn_forward.4} parent=0 // pred_check
    _
  $region15: #{dqn_forward.4} parent=0 // pred_check_branch
    %996 = sbr.rel (0) target = $region17
  $region16: #{dqn_forward.4} parent=0 // pred_region
    _
  $region17: #{dqn_forward.4} parent=0 // pred_fallthru
    _
  // Predicated region
  $region18: #{dqn_forward.4} parent=0 // pred_check
    _
  $region19: #{dqn_forward.4} parent=0 // pred_check_branch
    %998 = sbr.rel (0) target = $region21
  $region20: #{dqn_forward.4} parent=0 // pred_region
    _
  $region21: #{dqn_forward.4} parent=0 // pred_fallthru
    _

// kernel: dqn_forward.5
$region0: #{dqn_forward.5}
  #allocation0 [shape = 'u32[]', space=smem, size = 0x4, offset = 0x4, fixed_abs, tag = 'smem constant byte address 0x4 - core index']
  #allocation1 [shape = 'u32[72,128]{1,0:T(1,128)}', space=vmem, size = 0x9000, scoped, tag = 'internal scratch']
  %s0 = inlined_call_operand.vmem [shape: bf16[72,512], index: 0, kind: input, shape index: {}]
  %s1 = inlined_call_operand.vmem [shape: bf16[512,128], index: 1, kind: input, shape index: {}]
  %s2 = inlined_call_operand.vmem [shape: f32[1,128], index: 2, kind: input, shape index: {}]
  %s3 = inlined_call_operand.vmem [shape: bf16[72,128], index: 3, kind: output, shape index: {}]
  %s4 = sld [smem:[#allocation0]]
  $region22: #{dqn_forward.5} parent=0
    _
  %s6 = ssub.s32 1, %s4
  %s7 = scalar_select 0, %s6, %s4
  // Predicated region
  $region2: #{dqn_forward.5} parent=0 // pred_check
    _
  $region3: #{dqn_forward.5} parent=0 // pred_check_branch
    %9 = sbr.rel (0) target = $region5
  $region4: #{dqn_forward.5} parent=0 // pred_region
    _
  $region5: #{dqn_forward.5} parent=0 // pred_fallthru
    _
  // Predicated region
  $region6: #{dqn_forward.5} parent=0 // pred_check
    _
  $region7: #{dqn_forward.5} parent=0 // pred_check_branch
    %11 = sbr.rel (0) target = $region9
  $region8: #{dqn_forward.5} parent=0 // pred_region
    _
  $region9: #{dqn_forward.5} parent=0 // pred_fallthru
    _
  // Predicated region
  $region10: #{dqn_forward.5} parent=0 // pred_check
    _
  $region11: #{dqn_forward.5} parent=0 // pred_check_branch
    %13 = sbr.rel (0) target = $region13
  $region12: #{dqn_forward.5} parent=0 // pred_region
    _
  $region13: #{dqn_forward.5} parent=0 // pred_fallthru
    _
  %v14 = vld [vmem:[%s0] sm:$0xff]
  %v15 = vld [vmem:[%s0 + $0x8] sm:$0xff]
  %v16 = vld [vmem:[%s0 + $0x10] sm:$0xff]
  %v17 = vld [vmem:[%s0 + $0x18] sm:$0xff]
  %v18 = vld [vmem:[%s0 + $0x20] sm:$0xff]
  %v19 = vld [vmem:[%s0 + $0x28] sm:$0xff]
  %v20 = vld [vmem:[%s0 + $0x30] sm:$0xff]
  %v21 = vld [vmem:[%s0 + $0x38] sm:$0xff]
  %v22 = vld [vmem:[%s0 + $0x40] sm:$0xff]
  %v23 = vld [vmem:[%s0 + $0x48] sm:$0xff]
  %v24 = vld [vmem:[%s0 + $0x50] sm:$0xff]
  %v25 = vld [vmem:[%s0 + $0x58] sm:$0xff]
  %v26 = vld [vmem:[%s0 + $0x60] sm:$0xff]
  %v27 = vld [vmem:[%s0 + $0x68] sm:$0xff]
  %v28 = vld [vmem:[%s0 + $0x70] sm:$0xff]
  %v29 = vld [vmem:[%s0 + $0x78] sm:$0xff]
  %v30 = vld [vmem:[%s0 + $0x80] sm:$0xff]
  %v31 = vld [vmem:[%s0 + $0x88] sm:$0xff]
  %v32 = vld [vmem:[%s1] sm:$0xf]
  %v33 = vld [vmem:[%s1 + $0x4] sm:$0xf]
  %v34 = vld [vmem:[%s1 + $0x8] sm:$0xf]
  %v35 = vld [vmem:[%s1 + $0xc] sm:$0xf]
  %v36 = vld [vmem:[%s1 + $0x10] sm:$0xf]
  %v37 = vld [vmem:[%s1 + $0x14] sm:$0xf]
  %v38 = vld [vmem:[%s1 + $0x18] sm:$0xf]
  %v39 = vld [vmem:[%s1 + $0x1c] sm:$0xf]
  %v40 = vld [vmem:[%s1 + $0x20] sm:$0xf]
  %v41 = vld [vmem:[%s1 + $0x24] sm:$0xf]
  %v42 = vld [vmem:[%s1 + $0x28] sm:$0xf]
  %v43 = vld [vmem:[%s1 + $0x2c] sm:$0xf]
  %v44 = vld [vmem:[%s1 + $0x30] sm:$0xf]
  %v45 = vld [vmem:[%s1 + $0x34] sm:$0xf]
  %v46 = vld [vmem:[%s1 + $0x38] sm:$0xf]
  %v47 = vld [vmem:[%s1 + $0x3c] sm:$0xf]
  %v48 = vld [vmem:[%s1 + $0x40] sm:$0xf]
  %v49 = vld [vmem:[%s1 + $0x44] sm:$0xf]
  %v50 = vld [vmem:[%s1 + $0x48] sm:$0xf]
  %v51 = vld [vmem:[%s1 + $0x4c] sm:$0xf]
  %v52 = vld [vmem:[%s1 + $0x50] sm:$0xf]
  %v53 = vld [vmem:[%s1 + $0x54] sm:$0xf]
  %v54 = vld [vmem:[%s1 + $0x58] sm:$0xf]
  %v55 = vld [vmem:[%s1 + $0x5c] sm:$0xf]
  %v56 = vld [vmem:[%s1 + $0x60] sm:$0xf]
  %v57 = vld [vmem:[%s1 + $0x64] sm:$0xf]
  %v58 = vld [vmem:[%s1 + $0x68] sm:$0xf]
  %v59 = vld [vmem:[%s1 + $0x6c] sm:$0xf]
  %v60 = vld [vmem:[%s1 + $0x70] sm:$0xf]
  %v61 = vld [vmem:[%s1 + $0x74] sm:$0xf]
  %v62 = vld [vmem:[%s1 + $0x78] sm:$0xf]
  %v63 = vld [vmem:[%s1 + $0x7c] sm:$0xf]
  %v64 = vld [vmem:[%s1 + $0x80] sm:$0xf]
  %v65 = vld [vmem:[%s1 + $0x84] sm:$0xf]
  %v66 = vld [vmem:[%s1 + $0x88] sm:$0xf]
  %v67 = vld [vmem:[%s1 + $0x8c] sm:$0xf]
  %v68 = vld [vmem:[%s1 + $0x90] sm:$0xf]
  %v69 = vld [vmem:[%s1 + $0x94] sm:$0xf]
  %v70 = vld [vmem:[%s1 + $0x98] sm:$0xf]
  %v71 = vld [vmem:[%s1 + $0x9c] sm:$0xf]
  %v72 = vld [vmem:[%s1 + $0xa0] sm:$0xf]
  %v73 = vld [vmem:[%s1 + $0xa4] sm:$0xf]
  %v74 = vld [vmem:[%s1 + $0xa8] sm:$0xf]
  %v75 = vld [vmem:[%s1 + $0xac] sm:$0xf]
  %v76 = vld [vmem:[%s1 + $0xb0] sm:$0xf]
  %v77 = vld [vmem:[%s1 + $0xb4] sm:$0xf]
  %v78 = vld [vmem:[%s1 + $0xb8] sm:$0xf]
  %v79 = vld [vmem:[%s1 + $0xbc] sm:$0xf]
  %v80 = vld [vmem:[%s1 + $0xc0] sm:$0xf]
  %v81 = vld [vmem:[%s1 + $0xc4] sm:$0xf]
  %v82 = vld [vmem:[%s1 + $0xc8] sm:$0xf]
  %v83 = vld [vmem:[%s1 + $0xcc] sm:$0xf]
  %v84 = vld [vmem:[%s1 + $0xd0] sm:$0xf]
  %v85 = vld [vmem:[%s1 + $0xd4] sm:$0xf]
  %v86 = vld [vmem:[%s1 + $0xd8] sm:$0xf]
  %v87 = vld [vmem:[%s1 + $0xdc] sm:$0xf]
  %v88 = vld [vmem:[%s1 + $0xe0] sm:$0xf]
  %v89 = vld [vmem:[%s1 + $0xe4] sm:$0xf]
  %v90 = vld [vmem:[%s1 + $0xe8] sm:$0xf]
  %v91 = vld [vmem:[%s1 + $0xec] sm:$0xf]
  %v92 = vld [vmem:[%s1 + $0xf0] sm:$0xf]
  %v93 = vld [vmem:[%s1 + $0xf4] sm:$0xf]
  %v94 = vld [vmem:[%s1 + $0xf8] sm:$0xf]
  %v95 = vld [vmem:[%s1 + $0xfc] sm:$0xf]
  %v96 = vld [vmem:[%s2] sm:$0x1]
  %v98 = vperm.slane %v96, 0
  %v118 = vunpack.c.l.b16 %v14
  %v119 = vunpack.c.h.b16 %v14
  %v120 = vunpack.c.l.b16 %v15
  %v121 = vunpack.c.h.b16 %v15
  %v122 = vunpack.c.l.b16 %v16
  %v123 = vunpack.c.h.b16 %v16
  %v124 = vunpack.c.l.b16 %v17
  %v125 = vunpack.c.h.b16 %v17
  %v126 = vunpack.c.l.b16 %v18
  %v127 = vunpack.c.h.b16 %v18
  %v128 = vunpack.c.l.b16 %v19
  %v129 = vunpack.c.h.b16 %v19
  %v130 = vunpack.c.l.b16 %v20
  %v131 = vunpack.c.h.b16 %v20
  %v132 = vunpack.c.l.b16 %v21
  %v133 = vunpack.c.h.b16 %v21
  %v134 = vunpack.c.l.b16 %v22
  %v135 = vunpack.c.h.b16 %v22
  %v136 = vunpack.c.l.b16 %v23
  %v137 = vunpack.c.h.b16 %v23
  %v138 = vunpack.c.l.b16 %v24
  %v139 = vunpack.c.h.b16 %v24
  %v140 = vunpack.c.l.b16 %v25
  %v141 = vunpack.c.h.b16 %v25
  %v142 = vunpack.c.l.b16 %v26
  %v143 = vunpack.c.h.b16 %v26
  %v144 = vunpack.c.l.b16 %v27
  %v145 = vunpack.c.h.b16 %v27
  %v146 = vunpack.c.l.b16 %v28
  %v147 = vunpack.c.h.b16 %v28
  %v148 = vunpack.c.l.b16 %v29
  %v149 = vunpack.c.h.b16 %v29
  %v150 = vunpack.c.l.b16 %v30
  %v151 = vunpack.c.h.b16 %v30
  %v152 = vunpack.c.l.b16 %v31
  %v153 = vunpack.c.h.b16 %v31
  %v154 = vpack.c.b16 %v122, %v118
  %v155 = vpack.c.b16 %v123, %v119
  %v156 = vpack.c.b16 %v124, %v120
  %v157 = vpack.c.b16 %v125, %v121
  %v158 = vpack.c.b16 %v130, %v126
  %v159 = vpack.c.b16 %v131, %v127
  %v160 = vpack.c.b16 %v132, %v128
  %v161 = vpack.c.b16 %v133, %v129
  %v162 = vpack.c.b16 %v138, %v134
  %v163 = vpack.c.b16 %v139, %v135
  %v164 = vpack.c.b16 %v140, %v136
  %v165 = vpack.c.b16 %v141, %v137
  %v166 = vpack.c.b16 %v146, %v142
  %v167 = vpack.c.b16 %v147, %v143
  %v168 = vpack.c.b16 %v148, %v144
  %v169 = vpack.c.b16 %v149, %v145
  %v170 = vpack.c.b16 %v150, %v150
  %v171 = vpack.c.b16 %v151, %v151
  %v172 = vpack.c.b16 %v152, %v152
  %v173 = vpack.c.b16 %v153, %v153
  %v258 = vunpack.c.l.b16 %v32
  %v259 = vunpack.c.l.b16 %v33
  %v260 = vunpack.c.l.b16 %v34
  %v261 = vunpack.c.l.b16 %v35
  %v262 = vunpack.c.l.b16 %v36
  %v263 = vunpack.c.l.b16 %v37
  %v264 = vunpack.c.l.b16 %v38
  %v265 = vunpack.c.l.b16 %v39
  %v266 = vunpack.c.l.b16 %v40
  %v267 = vunpack.c.l.b16 %v41
  %v268 = vunpack.c.l.b16 %v42
  %v269 = vunpack.c.l.b16 %v43
  %v270 = vunpack.c.l.b16 %v44
  %v271 = vunpack.c.l.b16 %v45
  %v272 = vunpack.c.l.b16 %v46
  %v273 = vunpack.c.l.b16 %v47
  %v274 = vunpack.c.l.b16 %v48
  %v275 = vunpack.c.l.b16 %v49
  %v276 = vunpack.c.l.b16 %v50
  %v277 = vunpack.c.l.b16 %v51
  %v278 = vunpack.c.l.b16 %v52
  %v279 = vunpack.c.l.b16 %v53
  %v280 = vunpack.c.l.b16 %v54
  %v281 = vunpack.c.l.b16 %v55
  %v282 = vunpack.c.l.b16 %v56
  %v283 = vunpack.c.l.b16 %v57
  %v284 = vunpack.c.l.b16 %v58
  %v285 = vunpack.c.l.b16 %v59
  %v286 = vunpack.c.l.b16 %v60
  %v287 = vunpack.c.l.b16 %v61
  %v288 = vunpack.c.l.b16 %v62
  %v289 = vunpack.c.l.b16 %v63
  %v290 = vunpack.c.l.b16 %v64
  %v291 = vunpack.c.l.b16 %v65
  %v292 = vunpack.c.l.b16 %v66
  %v293 = vunpack.c.l.b16 %v67
  %v294 = vunpack.c.l.b16 %v68
  %v295 = vunpack.c.l.b16 %v69
  %v296 = vunpack.c.l.b16 %v70
  %v297 = vunpack.c.l.b16 %v71
  %v298 = vunpack.c.l.b16 %v72
  %v299 = vunpack.c.l.b16 %v73
  %v300 = vunpack.c.l.b16 %v74
  %v301 = vunpack.c.l.b16 %v75
  %v302 = vunpack.c.l.b16 %v76
  %v303 = vunpack.c.l.b16 %v77
  %v304 = vunpack.c.l.b16 %v78
  %v305 = vunpack.c.l.b16 %v79
  %v306 = vunpack.c.l.b16 %v80
  %v307 = vunpack.c.l.b16 %v81
  %v308 = vunpack.c.l.b16 %v82
  %v309 = vunpack.c.l.b16 %v83
  %v310 = vunpack.c.l.b16 %v84
  %v311 = vunpack.c.l.b16 %v85
  %v312 = vunpack.c.l.b16 %v86
  %v313 = vunpack.c.l.b16 %v87
  %v314 = vunpack.c.l.b16 %v88
  %v315 = vunpack.c.l.b16 %v89
  %v316 = vunpack.c.l.b16 %v90
  %v317 = vunpack.c.l.b16 %v91
  %v318 = vunpack.c.l.b16 %v92
  %v319 = vunpack.c.l.b16 %v93
  %v320 = vunpack.c.l.b16 %v94
  %v321 = vunpack.c.l.b16 %v95
  %v322 = vpack.c.b16 %v259, %v258
  %v323 = vpack.c.b16 %v261, %v260
  %v324 = vpack.c.b16 %v263, %v262
  %v325 = vpack.c.b16 %v265, %v264
  %v326 = vpack.c.b16 %v267, %v266
  %v327 = vpack.c.b16 %v269, %v268
  %v328 = vpack.c.b16 %v271, %v270
  %v329 = vpack.c.b16 %v273, %v272
  %v330 = vpack.c.b16 %v275, %v274
  %v331 = vpack.c.b16 %v277, %v276
  %v332 = vpack.c.b16 %v279, %v278
  %v333 = vpack.c.b16 %v281, %v280
  %v334 = vpack.c.b16 %v283, %v282
  %v335 = vpack.c.b16 %v285, %v284
  %v336 = vpack.c.b16 %v287, %v286
  %v337 = vpack.c.b16 %v289, %v288
  %v338 = vpack.c.b16 %v291, %v290
  %v339 = vpack.c.b16 %v293, %v292
  %v340 = vpack.c.b16 %v295, %v294
  %v341 = vpack.c.b16 %v297, %v296
  %v342 = vpack.c.b16 %v299, %v298
  %v343 = vpack.c.b16 %v301, %v300
  %v344 = vpack.c.b16 %v303, %v302
  %v345 = vpack.c.b16 %v305, %v304
  %v346 = vpack.c.b16 %v307, %v306
  %v347 = vpack.c.b16 %v309, %v308
  %v348 = vpack.c.b16 %v311, %v310
  %v349 = vpack.c.b16 %v313, %v312
  %v350 = vpack.c.b16 %v315, %v314
  %v351 = vpack.c.b16 %v317, %v316
  %v352 = vpack.c.b16 %v319, %v318
  %v353 = vpack.c.b16 %v321, %v320
  %386 = vmatpush.bf16.msra.mxu0 %v329
  %387 = vmatpush.bf16.msra.mxu0 %v328
  %388 = vmatpush.bf16.msra.mxu0 %v327
  %389 = vmatpush.bf16.msra.mxu0 %v326
  %390 = vmatpush.bf16.msra.mxu0 %v325
  %391 = vmatpush.bf16.msra.mxu0 %v324
  %392 = vmatpush.bf16.msra.mxu0 %v323
  %393 = vmatpush.bf16.msra.mxu0 %v322
  %394 = vmatmul.bf16.gmra.mxu0 %v154
  %v395 = vpop.f32.mrf.mxu0
  %v396 = vadd.f32 %v98, %v395
  %v397 = vpop.f32.mrf.mxu0
  %v398 = vadd.f32 %v98, %v397
  %399 = vmatmul.bf16.gmra.mxu0 %v158
  %v400 = vpop.f32.mrf.mxu0
  %v401 = vadd.f32 %v98, %v400
  %v402 = vpop.f32.mrf.mxu0
  %v403 = vadd.f32 %v98, %v402
  %404 = vmatmul.bf16.gmra.mxu0 %v162
  %v405 = vpop.f32.mrf.mxu0
  %v406 = vadd.f32 %v98, %v405
  %v407 = vpop.f32.mrf.mxu0
  %v408 = vadd.f32 %v98, %v407
  %409 = vmatmul.bf16.gmra.mxu0 %v166
  %v410 = vpop.f32.mrf.mxu0
  %v411 = vadd.f32 %v98, %v410
  %v412 = vpop.f32.mrf.mxu0
  %v413 = vadd.f32 %v98, %v412
  %414 = vmatmul.bf16.gmra.mxu0 %v170
  %v415 = vpop.f32.mrf.mxu0
  %v416 = vadd.f32 %v98, %v415
  %v417 = vpop.f32.mrf.mxu0
  %418 = vdwg.mxu0
  %419 = vmatpush.bf16.msra.mxu0 %v337
  %420 = vmatpush.bf16.msra.mxu0 %v336
  %421 = vmatpush.bf16.msra.mxu0 %v335
  %422 = vmatpush.bf16.msra.mxu0 %v334
  %423 = vmatpush.bf16.msra.mxu0 %v333
  %424 = vmatpush.bf16.msra.mxu0 %v332
  %425 = vmatpush.bf16.msra.mxu0 %v331
  %426 = vmatpush.bf16.msra.mxu0 %v330
  %427 = vmatmul.bf16.gmra.mxu0 %v155
  %v428 = vpop.f32.mrf.mxu0
  %v429 = vadd.f32 %v396, %v428
  %v430 = vpop.f32.mrf.mxu0
  %v431 = vadd.f32 %v398, %v430
  %432 = vmatmul.bf16.gmra.mxu0 %v159
  %v433 = vpop.f32.mrf.mxu0
  %v434 = vadd.f32 %v401, %v433
  %v435 = vpop.f32.mrf.mxu0
  %v436 = vadd.f32 %v403, %v435
  %437 = vmatmul.bf16.gmra.mxu0 %v163
  %v438 = vpop.f32.mrf.mxu0
  %v439 = vadd.f32 %v406, %v438
  %v440 = vpop.f32.mrf.mxu0
  %v441 = vadd.f32 %v408, %v440
  %442 = vmatmul.bf16.gmra.mxu0 %v167
  %v443 = vpop.f32.mrf.mxu0
  %v444 = vadd.f32 %v411, %v443
  %v445 = vpop.f32.mrf.mxu0
  %v446 = vadd.f32 %v413, %v445
  %447 = vmatmul.bf16.gmra.mxu0 %v171
  %v448 = vpop.f32.mrf.mxu0
  %v449 = vadd.f32 %v416, %v448
  %v450 = vpop.f32.mrf.mxu0
  %451 = vdwg.mxu0
  %452 = vmatpush.bf16.msra.mxu0 %v345
  %453 = vmatpush.bf16.msra.mxu0 %v344
  %454 = vmatpush.bf16.msra.mxu0 %v343
  %455 = vmatpush.bf16.msra.mxu0 %v342
  %456 = vmatpush.bf16.msra.mxu0 %v341
  %457 = vmatpush.bf16.msra.mxu0 %v340
  %458 = vmatpush.bf16.msra.mxu0 %v339
  %459 = vmatpush.bf16.msra.mxu0 %v338
  %460 = vmatmul.bf16.gmra.mxu0 %v156
  %v461 = vpop.f32.mrf.mxu0
  %v462 = vadd.f32 %v429, %v461
  %v463 = vpop.f32.mrf.mxu0
  %v464 = vadd.f32 %v431, %v463
  %465 = vmatmul.bf16.gmra.mxu0 %v160
  %v466 = vpop.f32.mrf.mxu0
  %v467 = vadd.f32 %v434, %v466
  %v468 = vpop.f32.mrf.mxu0
  %v469 = vadd.f32 %v436, %v468
  %470 = vmatmul.bf16.gmra.mxu0 %v164
  %v471 = vpop.f32.mrf.mxu0
  %v472 = vadd.f32 %v439, %v471
  %v473 = vpop.f32.mrf.mxu0
  %v474 = vadd.f32 %v441, %v473
  %475 = vmatmul.bf16.gmra.mxu0 %v168
  %v476 = vpop.f32.mrf.mxu0
  %v477 = vadd.f32 %v444, %v476
  %v478 = vpop.f32.mrf.mxu0
  %v479 = vadd.f32 %v446, %v478
  %480 = vmatmul.bf16.gmra.mxu0 %v172
  %v481 = vpop.f32.mrf.mxu0
  %v482 = vadd.f32 %v449, %v481
  %v483 = vpop.f32.mrf.mxu0
  %484 = vdwg.mxu0
  %485 = vmatpush.bf16.msra.mxu0 %v353
  %486 = vmatpush.bf16.msra.mxu0 %v352
  %487 = vmatpush.bf16.msra.mxu0 %v351
  %488 = vmatpush.bf16.msra.mxu0 %v350
  %489 = vmatpush.bf16.msra.mxu0 %v349
  %490 = vmatpush.bf16.msra.mxu0 %v348
  %491 = vmatpush.bf16.msra.mxu0 %v347
  %492 = vmatpush.bf16.msra.mxu0 %v346
  %493 = vmatmul.bf16.gmra.mxu0 %v157
  %v494 = vpop.f32.mrf.mxu0
  %v495 = vadd.f32 %v462, %v494
  %v496 = vpop.f32.mrf.mxu0
  %v497 = vadd.f32 %v464, %v496
  %498 = vmatmul.bf16.gmra.mxu0 %v161
  %v499 = vpop.f32.mrf.mxu0
  %v500 = vadd.f32 %v467, %v499
  %v501 = vpop.f32.mrf.mxu0
  %v502 = vadd.f32 %v469, %v501
  %503 = vmatmul.bf16.gmra.mxu0 %v165
  %v504 = vpop.f32.mrf.mxu0
  %v505 = vadd.f32 %v472, %v504
  %v506 = vpop.f32.mrf.mxu0
  %v507 = vadd.f32 %v474, %v506
  %508 = vmatmul.bf16.gmra.mxu0 %v169
  %v509 = vpop.f32.mrf.mxu0
  %v510 = vadd.f32 %v477, %v509
  %v511 = vpop.f32.mrf.mxu0
  %v512 = vadd.f32 %v479, %v511
  %513 = vmatmul.bf16.gmra.mxu0 %v173
  %v514 = vpop.f32.mrf.mxu0
  %v515 = vadd.f32 %v482, %v514
  %v516 = vpop.f32.mrf.mxu0
  %517 = vdwg.mxu0
  %v518 = vmax.f32 %v495, 0.0
  %v519 = vmax.f32 %v497, 0.0
  %v520 = vmax.f32 %v500, 0.0
  %v521 = vmax.f32 %v502, 0.0
  %v522 = vmax.f32 %v505, 0.0
  %v523 = vmax.f32 %v507, 0.0
  %v524 = vmax.f32 %v510, 0.0
  %v525 = vmax.f32 %v512, 0.0
  %v526 = vmax.f32 %v515, 0.0
  %v527 = vpack.c.bf16 %v518, %v518
  %v528 = vpack.c.bf16 %v519, %v519
  %v529 = vpack.c.bf16 %v520, %v520
  %v530 = vpack.c.bf16 %v521, %v521
  %v531 = vpack.c.bf16 %v522, %v522
  %v532 = vpack.c.bf16 %v523, %v523
  %v533 = vpack.c.bf16 %v524, %v524
  %v534 = vpack.c.bf16 %v525, %v525
  %v535 = vpack.c.bf16 %v526, %v526
  %536 = vst [vmem:[%s3] sm:$0xf] %v527
  %537 = vst [vmem:[%s3 + $0x4] sm:$0xf] %v528
  %538 = vst [vmem:[%s3 + $0x8] sm:$0xf] %v529
  %539 = vst [vmem:[%s3 + $0xc] sm:$0xf] %v530
  %540 = vst [vmem:[%s3 + $0x10] sm:$0xf] %v531
  %541 = vst [vmem:[%s3 + $0x14] sm:$0xf] %v532
  %542 = vst [vmem:[%s3 + $0x18] sm:$0xf] %v533
  %543 = vst [vmem:[%s3 + $0x1c] sm:$0xf] %v534
  %544 = vst [vmem:[%s3 + $0x20] sm:$0xf] %v535
  // Predicated region
  $region14: #{dqn_forward.5} parent=0 // pred_check
    _
  $region15: #{dqn_forward.5} parent=0 // pred_check_branch
    %546 = sbr.rel (0) target = $region17
  $region16: #{dqn_forward.5} parent=0 // pred_region
    _
  $region17: #{dqn_forward.5} parent=0 // pred_fallthru
    _
  // Predicated region
  $region18: #{dqn_forward.5} parent=0 // pred_check
    _
  $region19: #{dqn_forward.5} parent=0 // pred_check_branch
    %548 = sbr.rel (0) target = $region21
  $region20: #{dqn_forward.5} parent=0 // pred_region
    _
  $region21: #{dqn_forward.5} parent=0 // pred_fallthru
    _

// kernel: dqn_forward.6
$region0: #{dqn_forward.6}
  #allocation0 [shape = 'u32[]', space=smem, size = 0x4, offset = 0x4, fixed_abs, tag = 'smem constant byte address 0x4 - core index']
  #allocation1 [shape = 'u32[72,128]{1,0:T(1,128)}', space=vmem, size = 0x9000, scoped, tag = 'internal scratch']
  %s0 = inlined_call_operand.vmem [shape: bf16[32,576], index: 0, kind: input, shape index: {}]
  %s1 = inlined_call_operand.vmem [shape: bf16[576,128], index: 1, kind: input, shape index: {}]
  %s2 = inlined_call_operand.vmem [shape: f32[1,128], index: 2, kind: input, shape index: {}]
  %s3 = inlined_call_operand.vmem [shape: bf16[32,128], index: 3, kind: output, shape index: {}]
  %s4 = sld [smem:[#allocation0]]
  $region22: #{dqn_forward.6} parent=0
    _
  %s6 = ssub.s32 1, %s4
  %s7 = scalar_select 0, %s6, %s4
  // Predicated region
  $region2: #{dqn_forward.6} parent=0 // pred_check
    _
  $region3: #{dqn_forward.6} parent=0 // pred_check_branch
    %9 = sbr.rel (0) target = $region5
  $region4: #{dqn_forward.6} parent=0 // pred_region
    _
  $region5: #{dqn_forward.6} parent=0 // pred_fallthru
    _
  // Predicated region
  $region6: #{dqn_forward.6} parent=0 // pred_check
    _
  $region7: #{dqn_forward.6} parent=0 // pred_check_branch
    %11 = sbr.rel (0) target = $region9
  $region8: #{dqn_forward.6} parent=0 // pred_region
    _
  $region9: #{dqn_forward.6} parent=0 // pred_fallthru
    _
  // Predicated region
  $region10: #{dqn_forward.6} parent=0 // pred_check
    _
  $region11: #{dqn_forward.6} parent=0 // pred_check_branch
    %13 = sbr.rel (0) target = $region13
  $region12: #{dqn_forward.6} parent=0 // pred_region
    _
  $region13: #{dqn_forward.6} parent=0 // pred_fallthru
    _
  %v15 = vld [vmem:[%s0] sm:$0xff]
  %v16 = vld [vmem:[%s0 + $0x8] sm:$0xff]
  %v17 = vld [vmem:[%s0 + $0x10] sm:$0xf]
  %v18 = vld [vmem:[%s0 + $0x14] sm:$0xff]
  %v19 = vld [vmem:[%s0 + $0x1c] sm:$0xff]
  %v20 = vld [vmem:[%s0 + $0x24] sm:$0xf]
  %v21 = vld [vmem:[%s0 + $0x28] sm:$0xff]
  %v22 = vld [vmem:[%s0 + $0x30] sm:$0xff]
  %v23 = vld [vmem:[%s0 + $0x38] sm:$0xf]
  %v24 = vld [vmem:[%s0 + $0x3c] sm:$0xff]
  %v25 = vld [vmem:[%s0 + $0x44] sm:$0xff]
  %v26 = vld [vmem:[%s0 + $0x4c] sm:$0xf]
  %v27 = vld [vmem:[%s1] sm:$0xf]
  %v28 = vld [vmem:[%s1 + $0x4] sm:$0xf]
  %v29 = vld [vmem:[%s1 + $0x8] sm:$0xf]
  %v30 = vld [vmem:[%s1 + $0xc] sm:$0xf]
  %v31 = vld [vmem:[%s1 + $0x10] sm:$0xf]
  %v32 = vld [vmem:[%s1 + $0x14] sm:$0xf]
  %v33 = vld [vmem:[%s1 + $0x18] sm:$0xf]
  %v34 = vld [vmem:[%s1 + $0x1c] sm:$0xf]
  %v35 = vld [vmem:[%s1 + $0x20] sm:$0xf]
  %v36 = vld [vmem:[%s1 + $0x24] sm:$0xf]
  %v37 = vld [vmem:[%s1 + $0x28] sm:$0xf]
  %v38 = vld [vmem:[%s1 + $0x2c] sm:$0xf]
  %v39 = vld [vmem:[%s1 + $0x30] sm:$0xf]
  %v40 = vld [vmem:[%s1 + $0x34] sm:$0xf]
  %v41 = vld [vmem:[%s1 + $0x38] sm:$0xf]
  %v42 = vld [vmem:[%s1 + $0x3c] sm:$0xf]
  %v43 = vld [vmem:[%s1 + $0x40] sm:$0xf]
  %v44 = vld [vmem:[%s1 + $0x44] sm:$0xf]
  %v45 = vld [vmem:[%s1 + $0x48] sm:$0xf]
  %v46 = vld [vmem:[%s1 + $0x4c] sm:$0xf]
  %v47 = vld [vmem:[%s1 + $0x50] sm:$0xf]
  %v48 = vld [vmem:[%s1 + $0x54] sm:$0xf]
  %v49 = vld [vmem:[%s1 + $0x58] sm:$0xf]
  %v50 = vld [vmem:[%s1 + $0x5c] sm:$0xf]
  %v51 = vld [vmem:[%s1 + $0x60] sm:$0xf]
  %v52 = vld [vmem:[%s1 + $0x64] sm:$0xf]
  %v53 = vld [vmem:[%s1 + $0x68] sm:$0xf]
  %v54 = vld [vmem:[%s1 + $0x6c] sm:$0xf]
  %v55 = vld [vmem:[%s1 + $0x70] sm:$0xf]
  %v56 = vld [vmem:[%s1 + $0x74] sm:$0xf]
  %v57 = vld [vmem:[%s1 + $0x78] sm:$0xf]
  %v58 = vld [vmem:[%s1 + $0x7c] sm:$0xf]
  %v59 = vld [vmem:[%s1 + $0x80] sm:$0xf]
  %v60 = vld [vmem:[%s1 + $0x84] sm:$0xf]
  %v61 = vld [vmem:[%s1 + $0x88] sm:$0xf]
  %v62 = vld [vmem:[%s1 + $0x8c] sm:$0xf]
  %v63 = vld [vmem:[%s1 + $0x90] sm:$0xf]
  %v64 = vld [vmem:[%s1 + $0x94] sm:$0xf]
  %v65 = vld [vmem:[%s1 + $0x98] sm:$0xf]
  %v66 = vld [vmem:[%s1 + $0x9c] sm:$0xf]
  %v67 = vld [vmem:[%s1 + $0xa0] sm:$0xf]
  %v68 = vld [vmem:[%s1 + $0xa4] sm:$0xf]
  %v69 = vld [vmem:[%s1 + $0xa8] sm:$0xf]
  %v70 = vld [vmem:[%s1 + $0xac] sm:$0xf]
  %v71 = vld [vmem:[%s1 + $0xb0] sm:$0xf]
  %v72 = vld [vmem:[%s1 + $0xb4] sm:$0xf]
  %v73 = vld [vmem:[%s1 + $0xb8] sm:$0xf]
  %v74 = vld [vmem:[%s1 + $0xbc] sm:$0xf]
  %v75 = vld [vmem:[%s1 + $0xc0] sm:$0xf]
  %v76 = vld [vmem:[%s1 + $0xc4] sm:$0xf]
  %v77 = vld [vmem:[%s1 + $0xc8] sm:$0xf]
  %v78 = vld [vmem:[%s1 + $0xcc] sm:$0xf]
  %v79 = vld [vmem:[%s1 + $0xd0] sm:$0xf]
  %v80 = vld [vmem:[%s1 + $0xd4] sm:$0xf]
  %v81 = vld [vmem:[%s1 + $0xd8] sm:$0xf]
  %v82 = vld [vmem:[%s1 + $0xdc] sm:$0xf]
  %v83 = vld [vmem:[%s1 + $0xe0] sm:$0xf]
  %v84 = vld [vmem:[%s1 + $0xe4] sm:$0xf]
  %v85 = vld [vmem:[%s1 + $0xe8] sm:$0xf]
  %v86 = vld [vmem:[%s1 + $0xec] sm:$0xf]
  %v87 = vld [vmem:[%s1 + $0xf0] sm:$0xf]
  %v88 = vld [vmem:[%s1 + $0xf4] sm:$0xf]
  %v89 = vld [vmem:[%s1 + $0xf8] sm:$0xf]
  %v90 = vld [vmem:[%s1 + $0xfc] sm:$0xf]
  %v91 = vld [vmem:[%s1 + $0x100] sm:$0xf]
  %v92 = vld [vmem:[%s1 + $0x104] sm:$0xf]
  %v93 = vld [vmem:[%s1 + $0x108] sm:$0xf]
  %v94 = vld [vmem:[%s1 + $0x10c] sm:$0xf]
  %v95 = vld [vmem:[%s1 + $0x110] sm:$0xf]
  %v96 = vld [vmem:[%s1 + $0x114] sm:$0xf]
  %v97 = vld [vmem:[%s1 + $0x118] sm:$0xf]
  %v98 = vld [vmem:[%s1 + $0x11c] sm:$0xf]
  %v99 = vld [vmem:[%s2] sm:$0x1]
  %v101 = vperm.slane %v99, 0
  %v115 = vunpack.c.l.b16 %v15
  %v116 = vunpack.c.h.b16 %v15
  %v117 = vunpack.c.l.b16 %v16
  %v118 = vunpack.c.h.b16 %v16
  %v119 = vunpack.c.l.b16 %v17
  %v120 = vunpack.c.l.b16 %v18
  %v121 = vunpack.c.h.b16 %v18
  %v122 = vunpack.c.l.b16 %v19
  %v123 = vunpack.c.h.b16 %v19
  %v124 = vunpack.c.l.b16 %v20
  %v125 = vunpack.c.l.b16 %v21
  %v126 = vunpack.c.h.b16 %v21
  %v127 = vunpack.c.l.b16 %v22
  %v128 = vunpack.c.h.b16 %v22
  %v129 = vunpack.c.l.b16 %v23
  %v130 = vunpack.c.l.b16 %v24
  %v131 = vunpack.c.h.b16 %v24
  %v132 = vunpack.c.l.b16 %v25
  %v133 = vunpack.c.h.b16 %v25
  %v134 = vunpack.c.l.b16 %v26
  %v135 = vpack.c.b16 %v120, %v115
  %v136 = vpack.c.b16 %v121, %v116
  %v137 = vpack.c.b16 %v122, %v117
  %v138 = vpack.c.b16 %v123, %v118
  %v139 = vpack.c.b16 %v124, %v119
  %v140 = vpack.c.b16 %v130, %v125
  %v141 = vpack.c.b16 %v131, %v126
  %v142 = vpack.c.b16 %v132, %v127
  %v143 = vpack.c.b16 %v133, %v128
  %v144 = vpack.c.b16 %v134, %v129
  %v225 = vunpack.c.l.b16 %v27
  %v226 = vunpack.c.l.b16 %v28
  %v227 = vunpack.c.l.b16 %v29
  %v228 = vunpack.c.l.b16 %v30
  %v229 = vunpack.c.l.b16 %v31
  %v230 = vunpack.c.l.b16 %v32
  %v231 = vunpack.c.l.b16 %v33
  %v232 = vunpack.c.l.b16 %v34
  %v233 = vunpack.c.l.b16 %v35
  %v234 = vunpack.c.l.b16 %v36
  %v235 = vunpack.c.l.b16 %v37
  %v236 = vunpack.c.l.b16 %v38
  %v237 = vunpack.c.l.b16 %v39
  %v238 = vunpack.c.l.b16 %v40
  %v239 = vunpack.c.l.b16 %v41
  %v240 = vunpack.c.l.b16 %v42
  %v241 = vunpack.c.l.b16 %v43
  %v242 = vunpack.c.l.b16 %v44
  %v243 = vunpack.c.l.b16 %v45
  %v244 = vunpack.c.l.b16 %v46
  %v245 = vunpack.c.l.b16 %v47
  %v246 = vunpack.c.l.b16 %v48
  %v247 = vunpack.c.l.b16 %v49
  %v248 = vunpack.c.l.b16 %v50
  %v249 = vunpack.c.l.b16 %v51
  %v250 = vunpack.c.l.b16 %v52
  %v251 = vunpack.c.l.b16 %v53
  %v252 = vunpack.c.l.b16 %v54
  %v253 = vunpack.c.l.b16 %v55
  %v254 = vunpack.c.l.b16 %v56
  %v255 = vunpack.c.l.b16 %v57
  %v256 = vunpack.c.l.b16 %v58
  %v257 = vunpack.c.l.b16 %v59
  %v258 = vunpack.c.l.b16 %v60
  %v259 = vunpack.c.l.b16 %v61
  %v260 = vunpack.c.l.b16 %v62
  %v261 = vunpack.c.l.b16 %v63
  %v262 = vunpack.c.l.b16 %v64
  %v263 = vunpack.c.l.b16 %v65
  %v264 = vunpack.c.l.b16 %v66
  %v265 = vunpack.c.l.b16 %v67
  %v266 = vunpack.c.l.b16 %v68
  %v267 = vunpack.c.l.b16 %v69
  %v268 = vunpack.c.l.b16 %v70
  %v269 = vunpack.c.l.b16 %v71
  %v270 = vunpack.c.l.b16 %v72
  %v271 = vunpack.c.l.b16 %v73
  %v272 = vunpack.c.l.b16 %v74
  %v273 = vunpack.c.l.b16 %v75
  %v274 = vunpack.c.l.b16 %v76
  %v275 = vunpack.c.l.b16 %v77
  %v276 = vunpack.c.l.b16 %v78
  %v277 = vunpack.c.l.b16 %v79
  %v278 = vunpack.c.l.b16 %v80
  %v279 = vunpack.c.l.b16 %v81
  %v280 = vunpack.c.l.b16 %v82
  %v281 = vunpack.c.l.b16 %v83
  %v282 = vunpack.c.l.b16 %v84
  %v283 = vunpack.c.l.b16 %v85
  %v284 = vunpack.c.l.b16 %v86
  %v285 = vunpack.c.l.b16 %v87
  %v286 = vunpack.c.l.b16 %v88
  %v287 = vunpack.c.l.b16 %v89
  %v288 = vunpack.c.l.b16 %v90
  %v289 = vunpack.c.l.b16 %v91
  %v290 = vunpack.c.l.b16 %v92
  %v291 = vunpack.c.l.b16 %v93
  %v292 = vunpack.c.l.b16 %v94
  %v293 = vunpack.c.l.b16 %v95
  %v294 = vunpack.c.l.b16 %v96
  %v295 = vunpack.c.l.b16 %v97
  %v296 = vunpack.c.l.b16 %v98
  %v297 = vpack.c.b16 %v226, %v225
  %v298 = vpack.c.b16 %v228, %v227
  %v299 = vpack.c.b16 %v230, %v229
  %v300 = vpack.c.b16 %v232, %v231
  %v301 = vpack.c.b16 %v234, %v233
  %v302 = vpack.c.b16 %v236, %v235
  %v303 = vpack.c.b16 %v238, %v237
  %v304 = vpack.c.b16 %v240, %v239
  %v305 = vpack.c.b16 %v242, %v241
  %v306 = vpack.c.b16 %v244, %v243
  %v307 = vpack.c.b16 %v246, %v245
  %v308 = vpack.c.b16 %v248, %v247
  %v309 = vpack.c.b16 %v250, %v249
  %v310 = vpack.c.b16 %v252, %v251
  %v311 = vpack.c.b16 %v254, %v253
  %v312 = vpack.c.b16 %v256, %v255
  %v313 = vpack.c.b16 %v258, %v257
  %v314 = vpack.c.b16 %v260, %v259
  %v315 = vpack.c.b16 %v262, %v261
  %v316 = vpack.c.b16 %v264, %v263
  %v317 = vpack.c.b16 %v266, %v265
  %v318 = vpack.c.b16 %v268, %v267
  %v319 = vpack.c.b16 %v270, %v269
  %v320 = vpack.c.b16 %v272, %v271
  %v321 = vpack.c.b16 %v274, %v273
  %v322 = vpack.c.b16 %v276, %v275
  %v323 = vpack.c.b16 %v278, %v277
  %v324 = vpack.c.b16 %v280, %v279
  %v325 = vpack.c.b16 %v282, %v281
  %v326 = vpack.c.b16 %v284, %v283
  %v327 = vpack.c.b16 %v286, %v285
  %v328 = vpack.c.b16 %v288, %v287
  %v329 = vpack.c.b16 %v290, %v289
  %v330 = vpack.c.b16 %v292, %v291
  %v331 = vpack.c.b16 %v294, %v293
  %v332 = vpack.c.b16 %v296, %v295
  %vm369 = vcmask 523264
  %v371 = vsel %vm369, %v139, 0
  %v374 = vsel %vm369, %v144, 0
  %376 = vmatpush.bf16.msra.mxu0 %v304
  %377 = vmatpush.bf16.msra.mxu0 %v303
  %378 = vmatpush.bf16.msra.mxu0 %v302
  %379 = vmatpush.bf16.msra.mxu0 %v301
  %380 = vmatpush.bf16.msra.mxu0 %v300
  %381 = vmatpush.bf16.msra.mxu0 %v299
  %382 = vmatpush.bf16.msra.mxu0 %v298
  %383 = vmatpush.bf16.msra.mxu0 %v297
  %384 = vmatmul.bf16.gmra.mxu0 %v135
  %v385 = vpop.f32.mrf.mxu0
  %v386 = vadd.f32 %v101, %v385
  %v387 = vpop.f32.mrf.mxu0
  %v388 = vadd.f32 %v101, %v387
  %389 = vmatmul.bf16.gmra.mxu0 %v140
  %v390 = vpop.f32.mrf.mxu0
  %v391 = vadd.f32 %v101, %v390
  %v392 = vpop.f32.mrf.mxu0
  %v393 = vadd.f32 %v101, %v392
  %394 = vdwg.mxu0
  %395 = vmatpush.bf16.msra.mxu0 %v312
  %396 = vmatpush.bf16.msra.mxu0 %v311
  %397 = vmatpush.bf16.msra.mxu0 %v310
  %398 = vmatpush.bf16.msra.mxu0 %v309
  %399 = vmatpush.bf16.msra.mxu0 %v308
  %400 = vmatpush.bf16.msra.mxu0 %v307
  %401 = vmatpush.bf16.msra.mxu0 %v306
  %402 = vmatpush.bf16.msra.mxu0 %v305
  %403 = vmatmul.bf16.gmra.mxu0 %v136
  %v404 = vpop.f32.mrf.mxu0
  %v405 = vadd.f32 %v386, %v404
  %v406 = vpop.f32.mrf.mxu0
  %v407 = vadd.f32 %v388, %v406
  %408 = vmatmul.bf16.gmra.mxu0 %v141
  %v409 = vpop.f32.mrf.mxu0
  %v410 = vadd.f32 %v391, %v409
  %v411 = vpop.f32.mrf.mxu0
  %v412 = vadd.f32 %v393, %v411
  %413 = vdwg.mxu0
  %414 = vmatpush.bf16.msra.mxu0 %v320
  %415 = vmatpush.bf16.msra.mxu0 %v319
  %416 = vmatpush.bf16.msra.mxu0 %v318
  %417 = vmatpush.bf16.msra.mxu0 %v317
  %418 = vmatpush.bf16.msra.mxu0 %v316
  %419 = vmatpush.bf16.msra.mxu0 %v315
  %420 = vmatpush.bf16.msra.mxu0 %v314
  %421 = vmatpush.bf16.msra.mxu0 %v313
  %422 = vmatmul.bf16.gmra.mxu0 %v137
  %v423 = vpop.f32.mrf.mxu0
  %v424 = vadd.f32 %v405, %v423
  %v425 = vpop.f32.mrf.mxu0
  %v426 = vadd.f32 %v407, %v425
  %427 = vmatmul.bf16.gmra.mxu0 %v142
  %v428 = vpop.f32.mrf.mxu0
  %v429 = vadd.f32 %v410, %v428
  %v430 = vpop.f32.mrf.mxu0
  %v431 = vadd.f32 %v412, %v430
  %432 = vdwg.mxu0
  %433 = vmatpush.bf16.msra.mxu0 %v328
  %434 = vmatpush.bf16.msra.mxu0 %v327
  %435 = vmatpush.bf16.msra.mxu0 %v326
  %436 = vmatpush.bf16.msra.mxu0 %v325
  %437 = vmatpush.bf16.msra.mxu0 %v324
  %438 = vmatpush.bf16.msra.mxu0 %v323
  %439 = vmatpush.bf16.msra.mxu0 %v322
  %440 = vmatpush.bf16.msra.mxu0 %v321
  %441 = vmatmul.bf16.gmra.mxu0 %v138
  %v442 = vpop.f32.mrf.mxu0
  %v443 = vadd.f32 %v424, %v442
  %v444 = vpop.f32.mrf.mxu0
  %v445 = vadd.f32 %v426, %v444
  %446 = vmatmul.bf16.gmra.mxu0 %v143
  %v447 = vpop.f32.mrf.mxu0
  %v448 = vadd.f32 %v429, %v447
  %v449 = vpop.f32.mrf.mxu0
  %v450 = vadd.f32 %v431, %v449
  %451 = vdwg.mxu0
  %452 = vmatpush.bf16.msra.mxu0 0
  %453 = vmatpush.bf16.msra.mxu0 0
  %454 = vmatpush.bf16.msra.mxu0 0
  %455 = vmatpush.bf16.msra.mxu0 0
  %456 = vmatpush.bf16.msra.mxu0 %v332
  %457 = vmatpush.bf16.msra.mxu0 %v331
  %458 = vmatpush.bf16.msra.mxu0 %v330
  %459 = vmatpush.bf16.msra.mxu0 %v329
  %460 = vmatmul.bf16.gmra.mxu0 %v371
  %v461 = vpop.f32.mrf.mxu0
  %v462 = vadd.f32 %v443, %v461
  %v463 = vpop.f32.mrf.mxu0
  %v464 = vadd.f32 %v445, %v463
  %465 = vmatmul.bf16.gmra.mxu0 %v374
  %v466 = vpop.f32.mrf.mxu0
  %v467 = vadd.f32 %v448, %v466
  %v468 = vpop.f32.mrf.mxu0
  %v469 = vadd.f32 %v450, %v468
  %470 = vdwg.mxu0
  %v471 = vmax.f32 %v462, 0.0
  %v472 = vmax.f32 %v464, 0.0
  %v473 = vmax.f32 %v467, 0.0
  %v474 = vmax.f32 %v469, 0.0
  %v475 = vpack.c.bf16 %v471, %v471
  %v476 = vpack.c.bf16 %v472, %v472
  %v477 = vpack.c.bf16 %v473, %v473
  %v478 = vpack.c.bf16 %v474, %v474
  %479 = vst [vmem:[%s3] sm:$0xf] %v475
  %480 = vst [vmem:[%s3 + $0x4] sm:$0xf] %v476
  %481 = vst [vmem:[%s3 + $0x8] sm:$0xf] %v477
  %482 = vst [vmem:[%s3 + $0xc] sm:$0xf] %v478
  // Predicated region
  $region14: #{dqn_forward.6} parent=0 // pred_check
    _
  $region15: #{dqn_forward.6} parent=0 // pred_check_branch
    %484 = sbr.rel (0) target = $region17
  $region16: #{dqn_forward.6} parent=0 // pred_region
    _
  $region17: #{dqn_forward.6} parent=0 // pred_fallthru
    _
  // Predicated region
  $region18: #{dqn_forward.6} parent=0 // pred_check
    _
  $region19: #{dqn_forward.6} parent=0 // pred_check_branch
    %486 = sbr.rel (0) target = $region21
  $region20: #{dqn_forward.6} parent=0 // pred_region
    _
  $region21: #{dqn_forward.6} parent=0 // pred_fallthru
    _

// kernel: dqn_forward.7
$region0: #{dqn_forward.7}
  #allocation0 [shape = 'u32[]', space=smem, size = 0x4, offset = 0x4, fixed_abs, tag = 'smem constant byte address 0x4 - core index']
  #allocation1 [shape = 'u32[72,128]{1,0:T(1,128)}', space=vmem, size = 0x9000, scoped, tag = 'internal scratch']
  %s0 = inlined_call_operand.vmem [shape: bf16[8,1024], index: 0, kind: input, shape index: {}]
  %s1 = inlined_call_operand.vmem [shape: bf16[1024,512], index: 1, kind: input, shape index: {}]
  %s2 = inlined_call_operand.vmem [shape: f32[1,512], index: 2, kind: input, shape index: {}]
  %s3 = inlined_call_operand.vmem [shape: bf16[512,128], index: 3, kind: input, shape index: {}]
  %s4 = inlined_call_operand.vmem [shape: f32[1,128], index: 4, kind: input, shape index: {}]
  %s5 = inlined_call_operand.vmem [shape: f32[8,128], index: 5, kind: output, shape index: {}]
  %s6 = sld [smem:[#allocation0]]
  $region30: #{dqn_forward.7} parent=0
    _
  %s8 = ssub.s32 1, %s6
  %s9 = scalar_select 0, %s8, %s6
  // Predicated region
  $region2: #{dqn_forward.7} parent=0 // pred_check
    _
  $region3: #{dqn_forward.7} parent=0 // pred_check_branch
    %11 = sbr.rel (0) target = $region5
  $region4: #{dqn_forward.7} parent=0 // pred_region
    _
  $region5: #{dqn_forward.7} parent=0 // pred_fallthru
    _
  // Predicated region
  $region6: #{dqn_forward.7} parent=0 // pred_check
    _
  $region7: #{dqn_forward.7} parent=0 // pred_check_branch
    %13 = sbr.rel (0) target = $region9
  $region8: #{dqn_forward.7} parent=0 // pred_region
    _
  $region9: #{dqn_forward.7} parent=0 // pred_fallthru
    _
  // Predicated region
  $region10: #{dqn_forward.7} parent=0 // pred_check
    _
  $region11: #{dqn_forward.7} parent=0 // pred_check_branch
    %15 = sbr.rel (0) target = $region13
  $region12: #{dqn_forward.7} parent=0 // pred_region
    _
  $region13: #{dqn_forward.7} parent=0 // pred_fallthru
    _
  // Predicated region
  $region14: #{dqn_forward.7} parent=0 // pred_check
    _
  $region15: #{dqn_forward.7} parent=0 // pred_check_branch
    %17 = sbr.rel (0) target = $region17
  $region16: #{dqn_forward.7} parent=0 // pred_region
    _
  $region17: #{dqn_forward.7} parent=0 // pred_fallthru
    _
  // Predicated region
  $region18: #{dqn_forward.7} parent=0 // pred_check
    _
  $region19: #{dqn_forward.7} parent=0 // pred_check_branch
    %19 = sbr.rel (0) target = $region21
  $region20: #{dqn_forward.7} parent=0 // pred_region
    _
  $region21: #{dqn_forward.7} parent=0 // pred_fallthru
    _
  %v20 = vld [vmem:[%s0] sm:$0xff]
  %v21 = vld [vmem:[%s0 + $0x8] sm:$0xff]
  %v22 = vld [vmem:[%s0 + $0x10] sm:$0xff]
  %v23 = vld [vmem:[%s0 + $0x18] sm:$0xff]
  %v24 = vld [vmem:[%s1] sm:$0xff]
  %v25 = vld [vmem:[%s1 + $0x8] sm:$0xff]
  %v26 = vld [vmem:[%s1 + $0x10] sm:$0xff]
  %v27 = vld [vmem:[%s1 + $0x18] sm:$0xff]
  %v28 = vld [vmem:[%s1 + $0x20] sm:$0xff]
  %v29 = vld [vmem:[%s1 + $0x28] sm:$0xff]
  %v30 = vld [vmem:[%s1 + $0x30] sm:$0xff]
  %v31 = vld [vmem:[%s1 + $0x38] sm:$0xff]
  %v32 = vld [vmem:[%s1 + $0x40] sm:$0xff]
  %v33 = vld [vmem:[%s1 + $0x48] sm:$0xff]
  %v34 = vld [vmem:[%s1 + $0x50] sm:$0xff]
  %v35 = vld [vmem:[%s1 + $0x58] sm:$0xff]
  %v36 = vld [vmem:[%s1 + $0x60] sm:$0xff]
  %v37 = vld [vmem:[%s1 + $0x68] sm:$0xff]
  %v38 = vld [vmem:[%s1 + $0x70] sm:$0xff]
  %v39 = vld [vmem:[%s1 + $0x78] sm:$0xff]
  %v40 = vld [vmem:[%s1 + $0x80] sm:$0xff]
  %v41 = vld [vmem:[%s1 + $0x88] sm:$0xff]
  %v42 = vld [vmem:[%s1 + $0x90] sm:$0xff]
  %v43 = vld [vmem:[%s1 + $0x98] sm:$0xff]
  %v44 = vld [vmem:[%s1 + $0xa0] sm:$0xff]
  %v45 = vld [vmem:[%s1 + $0xa8] sm:$0xff]
  %v46 = vld [vmem:[%s1 + $0xb0] sm:$0xff]
  %v47 = vld [vmem:[%s1 + $0xb8] sm:$0xff]
  %v48 = vld [vmem:[%s1 + $0xc0] sm:$0xff]
  %v49 = vld [vmem:[%s1 + $0xc8] sm:$0xff]
  %v50 = vld [vmem:[%s1 + $0xd0] sm:$0xff]
  %v51 = vld [vmem:[%s1 + $0xd8] sm:$0xff]
  %v52 = vld [vmem:[%s1 + $0xe0] sm:$0xff]
  %v53 = vld [vmem:[%s1 + $0xe8] sm:$0xff]
  %v54 = vld [vmem:[%s1 + $0xf0] sm:$0xff]
  %v55 = vld [vmem:[%s1 + $0xf8] sm:$0xff]
  %v56 = vld [vmem:[%s1 + $0x100] sm:$0xff]
  %v57 = vld [vmem:[%s1 + $0x108] sm:$0xff]
  %v58 = vld [vmem:[%s1 + $0x110] sm:$0xff]
  %v59 = vld [vmem:[%s1 + $0x118] sm:$0xff]
  %v60 = vld [vmem:[%s1 + $0x120] sm:$0xff]
  %v61 = vld [vmem:[%s1 + $0x128] sm:$0xff]
  %v62 = vld [vmem:[%s1 + $0x130] sm:$0xff]
  %v63 = vld [vmem:[%s1 + $0x138] sm:$0xff]
  %v64 = vld [vmem:[%s1 + $0x140] sm:$0xff]
  %v65 = vld [vmem:[%s1 + $0x148] sm:$0xff]
  %v66 = vld [vmem:[%s1 + $0x150] sm:$0xff]
  %v67 = vld [vmem:[%s1 + $0x158] sm:$0xff]
  %v68 = vld [vmem:[%s1 + $0x160] sm:$0xff]
  %v69 = vld [vmem:[%s1 + $0x168] sm:$0xff]
  %v70 = vld [vmem:[%s1 + $0x170] sm:$0xff]
  %v71 = vld [vmem:[%s1 + $0x178] sm:$0xff]
  %v72 = vld [vmem:[%s1 + $0x180] sm:$0xff]
  %v73 = vld [vmem:[%s1 + $0x188] sm:$0xff]
  %v74 = vld [vmem:[%s1 + $0x190] sm:$0xff]
  %v75 = vld [vmem:[%s1 + $0x198] sm:$0xff]
  %v76 = vld [vmem:[%s1 + $0x1a0] sm:$0xff]
  %v77 = vld [vmem:[%s1 + $0x1a8] sm:$0xff]
  %v78 = vld [vmem:[%s1 + $0x1b0] sm:$0xff]
  %v79 = vld [vmem:[%s1 + $0x1b8] sm:$0xff]
  %v80 = vld [vmem:[%s1 + $0x1c0] sm:$0xff]
  %v81 = vld [vmem:[%s1 + $0x1c8] sm:$0xff]
  %v82 = vld [vmem:[%s1 + $0x1d0] sm:$0xff]
  %v83 = vld [vmem:[%s1 + $0x1d8] sm:$0xff]
  %v84 = vld [vmem:[%s1 + $0x1e0] sm:$0xff]
  %v85 = vld [vmem:[%s1 + $0x1e8] sm:$0xff]
  %v86 = vld [vmem:[%s1 + $0x1f0] sm:$0xff]
  %v87 = vld [vmem:[%s1 + $0x1f8] sm:$0xff]
  %v88 = vld [vmem:[%s1 + $0x200] sm:$0xff]
  %v89 = vld [vmem:[%s1 + $0x208] sm:$0xff]
  %v90 = vld [vmem:[%s1 + $0x210] sm:$0xff]
  %v91 = vld [vmem:[%s1 + $0x218] sm:$0xff]
  %v92 = vld [vmem:[%s1 + $0x220] sm:$0xff]
  %v93 = vld [vmem:[%s1 + $0x228] sm:$0xff]
  %v94 = vld [vmem:[%s1 + $0x230] sm:$0xff]
  %v95 = vld [vmem:[%s1 + $0x238] sm:$0xff]
  %v96 = vld [vmem:[%s1 + $0x240] sm:$0xff]
  %v97 = vld [vmem:[%s1 + $0x248] sm:$0xff]
  %v98 = vld [vmem:[%s1 + $0x250] sm:$0xff]
  %v99 = vld [vmem:[%s1 + $0x258] sm:$0xff]
  %v100 = vld [vmem:[%s1 + $0x260] sm:$0xff]
  %v101 = vld [vmem:[%s1 + $0x268] sm:$0xff]
  %v102 = vld [vmem:[%s1 + $0x270] sm:$0xff]
  %v103 = vld [vmem:[%s1 + $0x278] sm:$0xff]
  %v104 = vld [vmem:[%s1 + $0x280] sm:$0xff]
  %v105 = vld [vmem:[%s1 + $0x288] sm:$0xff]
  %v106 = vld [vmem:[%s1 + $0x290] sm:$0xff]
  %v107 = vld [vmem:[%s1 + $0x298] sm:$0xff]
  %v108 = vld [vmem:[%s1 + $0x2a0] sm:$0xff]
  %v109 = vld [vmem:[%s1 + $0x2a8] sm:$0xff]
  %v110 = vld [vmem:[%s1 + $0x2b0] sm:$0xff]
  %v111 = vld [vmem:[%s1 + $0x2b8] sm:$0xff]
  %v112 = vld [vmem:[%s1 + $0x2c0] sm:$0xff]
  %v113 = vld [vmem:[%s1 + $0x2c8] sm:$0xff]
  %v114 = vld [vmem:[%s1 + $0x2d0] sm:$0xff]
  %v115 = vld [vmem:[%s1 + $0x2d8] sm:$0xff]
  %v116 = vld [vmem:[%s1 + $0x2e0] sm:$0xff]
  %v117 = vld [vmem:[%s1 + $0x2e8] sm:$0xff]
  %v118 = vld [vmem:[%s1 + $0x2f0] sm:$0xff]
  %v119 = vld [vmem:[%s1 + $0x2f8] sm:$0xff]
  %v120 = vld [vmem:[%s1 + $0x300] sm:$0xff]
  %v121 = vld [vmem:[%s1 + $0x308] sm:$0xff]
  %v122 = vld [vmem:[%s1 + $0x310] sm:$0xff]
  %v123 = vld [vmem:[%s1 + $0x318] sm:$0xff]
  %v124 = vld [vmem:[%s1 + $0x320] sm:$0xff]
  %v125 = vld [vmem:[%s1 + $0x328] sm:$0xff]
  %v126 = vld [vmem:[%s1 + $0x330] sm:$0xff]
  %v127 = vld [vmem:[%s1 + $0x338] sm:$0xff]
  %v128 = vld [vmem:[%s1 + $0x340] sm:$0xff]
  %v129 = vld [vmem:[%s1 + $0x348] sm:$0xff]
  %v130 = vld [vmem:[%s1 + $0x350] sm:$0xff]
  %v131 = vld [vmem:[%s1 + $0x358] sm:$0xff]
  %v132 = vld [vmem:[%s1 + $0x360] sm:$0xff]
  %v133 = vld [vmem:[%s1 + $0x368] sm:$0xff]
  %v134 = vld [vmem:[%s1 + $0x370] sm:$0xff]
  %v135 = vld [vmem:[%s1 + $0x378] sm:$0xff]
  %v136 = vld [vmem:[%s1 + $0x380] sm:$0xff]
  %v137 = vld [vmem:[%s1 + $0x388] sm:$0xff]
  %v138 = vld [vmem:[%s1 + $0x390] sm:$0xff]
  %v139 = vld [vmem:[%s1 + $0x398] sm:$0xff]
  %v140 = vld [vmem:[%s1 + $0x3a0] sm:$0xff]
  %v141 = vld [vmem:[%s1 + $0x3a8] sm:$0xff]
  %v142 = vld [vmem:[%s1 + $0x3b0] sm:$0xff]
  %v143 = vld [vmem:[%s1 + $0x3b8] sm:$0xff]
  %v144 = vld [vmem:[%s1 + $0x3c0] sm:$0xff]
  %v145 = vld [vmem:[%s1 + $0x3c8] sm:$0xff]
  %v146 = vld [vmem:[%s1 + $0x3d0] sm:$0xff]
  %v147 = vld [vmem:[%s1 + $0x3d8] sm:$0xff]
  %v148 = vld [vmem:[%s1 + $0x3e0] sm:$0xff]
  %v149 = vld [vmem:[%s1 + $0x3e8] sm:$0xff]
  %v150 = vld [vmem:[%s1 + $0x3f0] sm:$0xff]
  %v151 = vld [vmem:[%s1 + $0x3f8] sm:$0xff]
  %v152 = vld [vmem:[%s1 + $0x400] sm:$0xff]
  %v153 = vld [vmem:[%s1 + $0x408] sm:$0xff]
  %v154 = vld [vmem:[%s1 + $0x410] sm:$0xff]
  %v155 = vld [vmem:[%s1 + $0x418] sm:$0xff]
  %v156 = vld [vmem:[%s1 + $0x420] sm:$0xff]
  %v157 = vld [vmem:[%s1 + $0x428] sm:$0xff]
  %v158 = vld [vmem:[%s1 + $0x430] sm:$0xff]
  %v159 = vld [vmem:[%s1 + $0x438] sm:$0xff]
  %v160 = vld [vmem:[%s1 + $0x440] sm:$0xff]
  %v161 = vld [vmem:[%s1 + $0x448] sm:$0xff]
  %v162 = vld [vmem:[%s1 + $0x450] sm:$0xff]
  %v163 = vld [vmem:[%s1 + $0x458] sm:$0xff]
  %v164 = vld [vmem:[%s1 + $0x460] sm:$0xff]
  %v165 = vld [vmem:[%s1 + $0x468] sm:$0xff]
  %v166 = vld [vmem:[%s1 + $0x470] sm:$0xff]
  %v167 = vld [vmem:[%s1 + $0x478] sm:$0xff]
  %v168 = vld [vmem:[%s1 + $0x480] sm:$0xff]
  %v169 = vld [vmem:[%s1 + $0x488] sm:$0xff]
  %v170 = vld [vmem:[%s1 + $0x490] sm:$0xff]
  %v171 = vld [vmem:[%s1 + $0x498] sm:$0xff]
  %v172 = vld [vmem:[%s1 + $0x4a0] sm:$0xff]
  %v173 = vld [vmem:[%s1 + $0x4a8] sm:$0xff]
  %v174 = vld [vmem:[%s1 + $0x4b0] sm:$0xff]
  %v175 = vld [vmem:[%s1 + $0x4b8] sm:$0xff]
  %v176 = vld [vmem:[%s1 + $0x4c0] sm:$0xff]
  %v177 = vld [vmem:[%s1 + $0x4c8] sm:$0xff]
  %v178 = vld [vmem:[%s1 + $0x4d0] sm:$0xff]
  %v179 = vld [vmem:[%s1 + $0x4d8] sm:$0xff]
  %v180 = vld [vmem:[%s1 + $0x4e0] sm:$0xff]
  %v181 = vld [vmem:[%s1 + $0x4e8] sm:$0xff]
  %v182 = vld [vmem:[%s1 + $0x4f0] sm:$0xff]
  %v183 = vld [vmem:[%s1 + $0x4f8] sm:$0xff]
  %v184 = vld [vmem:[%s1 + $0x500] sm:$0xff]
  %v185 = vld [vmem:[%s1 + $0x508] sm:$0xff]
  %v186 = vld [vmem:[%s1 + $0x510] sm:$0xff]
  %v187 = vld [vmem:[%s1 + $0x518] sm:$0xff]
  %v188 = vld [vmem:[%s1 + $0x520] sm:$0xff]
  %v189 = vld [vmem:[%s1 + $0x528] sm:$0xff]
  %v190 = vld [vmem:[%s1 + $0x530] sm:$0xff]
  %v191 = vld [vmem:[%s1 + $0x538] sm:$0xff]
  %v192 = vld [vmem:[%s1 + $0x540] sm:$0xff]
  %v193 = vld [vmem:[%s1 + $0x548] sm:$0xff]
  %v194 = vld [vmem:[%s1 + $0x550] sm:$0xff]
  %v195 = vld [vmem:[%s1 + $0x558] sm:$0xff]
  %v196 = vld [vmem:[%s1 + $0x560] sm:$0xff]
  %v197 = vld [vmem:[%s1 + $0x568] sm:$0xff]
  %v198 = vld [vmem:[%s1 + $0x570] sm:$0xff]
  %v199 = vld [vmem:[%s1 + $0x578] sm:$0xff]
  %v200 = vld [vmem:[%s1 + $0x580] sm:$0xff]
  %v201 = vld [vmem:[%s1 + $0x588] sm:$0xff]
  %v202 = vld [vmem:[%s1 + $0x590] sm:$0xff]
  %v203 = vld [vmem:[%s1 + $0x598] sm:$0xff]
  %v204 = vld [vmem:[%s1 + $0x5a0] sm:$0xff]
  %v205 = vld [vmem:[%s1 + $0x5a8] sm:$0xff]
  %v206 = vld [vmem:[%s1 + $0x5b0] sm:$0xff]
  %v207 = vld [vmem:[%s1 + $0x5b8] sm:$0xff]
  %v208 = vld [vmem:[%s1 + $0x5c0] sm:$0xff]
  %v209 = vld [vmem:[%s1 + $0x5c8] sm:$0xff]
  %v210 = vld [vmem:[%s1 + $0x5d0] sm:$0xff]
  %v211 = vld [vmem:[%s1 + $0x5d8] sm:$0xff]
  %v212 = vld [vmem:[%s1 + $0x5e0] sm:$0xff]
  %v213 = vld [vmem:[%s1 + $0x5e8] sm:$0xff]
  %v214 = vld [vmem:[%s1 + $0x5f0] sm:$0xff]
  %v215 = vld [vmem:[%s1 + $0x5f8] sm:$0xff]
  %v216 = vld [vmem:[%s1 + $0x600] sm:$0xff]
  %v217 = vld [vmem:[%s1 + $0x608] sm:$0xff]
  %v218 = vld [vmem:[%s1 + $0x610] sm:$0xff]
  %v219 = vld [vmem:[%s1 + $0x618] sm:$0xff]
  %v220 = vld [vmem:[%s1 + $0x620] sm:$0xff]
  %v221 = vld [vmem:[%s1 + $0x628] sm:$0xff]
  %v222 = vld [vmem:[%s1 + $0x630] sm:$0xff]
  %v223 = vld [vmem:[%s1 + $0x638] sm:$0xff]
  %v224 = vld [vmem:[%s1 + $0x640] sm:$0xff]
  %v225 = vld [vmem:[%s1 + $0x648] sm:$0xff]
  %v226 = vld [vmem:[%s1 + $0x650] sm:$0xff]
  %v227 = vld [vmem:[%s1 + $0x658] sm:$0xff]
  %v228 = vld [vmem:[%s1 + $0x660] sm:$0xff]
  %v229 = vld [vmem:[%s1 + $0x668] sm:$0xff]
  %v230 = vld [vmem:[%s1 + $0x670] sm:$0xff]
  %v231 = vld [vmem:[%s1 + $0x678] sm:$0xff]
  %v232 = vld [vmem:[%s1 + $0x680] sm:$0xff]
  %v233 = vld [vmem:[%s1 + $0x688] sm:$0xff]
  %v234 = vld [vmem:[%s1 + $0x690] sm:$0xff]
  %v235 = vld [vmem:[%s1 + $0x698] sm:$0xff]
  %v236 = vld [vmem:[%s1 + $0x6a0] sm:$0xff]
  %v237 = vld [vmem:[%s1 + $0x6a8] sm:$0xff]
  %v238 = vld [vmem:[%s1 + $0x6b0] sm:$0xff]
  %v239 = vld [vmem:[%s1 + $0x6b8] sm:$0xff]
  %v240 = vld [vmem:[%s1 + $0x6c0] sm:$0xff]
  %v241 = vld [vmem:[%s1 + $0x6c8] sm:$0xff]
  %v242 = vld [vmem:[%s1 + $0x6d0] sm:$0xff]
  %v243 = vld [vmem:[%s1 + $0x6d8] sm:$0xff]
  %v244 = vld [vmem:[%s1 + $0x6e0] sm:$0xff]
  %v245 = vld [vmem:[%s1 + $0x6e8] sm:$0xff]
  %v246 = vld [vmem:[%s1 + $0x6f0] sm:$0xff]
  %v247 = vld [vmem:[%s1 + $0x6f8] sm:$0xff]
  %v248 = vld [vmem:[%s1 + $0x700] sm:$0xff]
  %v249 = vld [vmem:[%s1 + $0x708] sm:$0xff]
  %v250 = vld [vmem:[%s1 + $0x710] sm:$0xff]
  %v251 = vld [vmem:[%s1 + $0x718] sm:$0xff]
  %v252 = vld [vmem:[%s1 + $0x720] sm:$0xff]
  %v253 = vld [vmem:[%s1 + $0x728] sm:$0xff]
  %v254 = vld [vmem:[%s1 + $0x730] sm:$0xff]
  %v255 = vld [vmem:[%s1 + $0x738] sm:$0xff]
  %v256 = vld [vmem:[%s1 + $0x740] sm:$0xff]
  %v257 = vld [vmem:[%s1 + $0x748] sm:$0xff]
  %v258 = vld [vmem:[%s1 + $0x750] sm:$0xff]
  %v259 = vld [vmem:[%s1 + $0x758] sm:$0xff]
  %v260 = vld [vmem:[%s1 + $0x760] sm:$0xff]
  %v261 = vld [vmem:[%s1 + $0x768] sm:$0xff]
  %v262 = vld [vmem:[%s1 + $0x770] sm:$0xff]
  %v263 = vld [vmem:[%s1 + $0x778] sm:$0xff]
  %v264 = vld [vmem:[%s1 + $0x780] sm:$0xff]
  %v265 = vld [vmem:[%s1 + $0x788] sm:$0xff]
  %v266 = vld [vmem:[%s1 + $0x790] sm:$0xff]
  %v267 = vld [vmem:[%s1 + $0x798] sm:$0xff]
  %v268 = vld [vmem:[%s1 + $0x7a0] sm:$0xff]
  %v269 = vld [vmem:[%s1 + $0x7a8] sm:$0xff]
  %v270 = vld [vmem:[%s1 + $0x7b0] sm:$0xff]
  %v271 = vld [vmem:[%s1 + $0x7b8] sm:$0xff]
  %v272 = vld [vmem:[%s1 + $0x7c0] sm:$0xff]
  %v273 = vld [vmem:[%s1 + $0x7c8] sm:$0xff]
  %v274 = vld [vmem:[%s1 + $0x7d0] sm:$0xff]
  %v275 = vld [vmem:[%s1 + $0x7d8] sm:$0xff]
  %v276 = vld [vmem:[%s1 + $0x7e0] sm:$0xff]
  %v277 = vld [vmem:[%s1 + $0x7e8] sm:$0xff]
  %v278 = vld [vmem:[%s1 + $0x7f0] sm:$0xff]
  %v279 = vld [vmem:[%s1 + $0x7f8] sm:$0xff]
  %v280 = vld [vmem:[%s2] sm:$0xf]
  %v282 = vperm.slane %v280, 0
  %v283 = vperm.slane %v280, 1
  %v284 = vperm.slane %v280, 2
  %v285 = vperm.slane %v280, 3
  %v294 = vunpack.c.l.b16 %v20
  %v295 = vunpack.c.h.b16 %v20
  %v296 = vunpack.c.l.b16 %v21
  %v297 = vunpack.c.h.b16 %v21
  %v298 = vunpack.c.l.b16 %v22
  %v299 = vunpack.c.h.b16 %v22
  %v300 = vunpack.c.l.b16 %v23
  %v301 = vunpack.c.h.b16 %v23
  %v302 = vpack.c.b16 %v294, %v294
  %v303 = vpack.c.b16 %v295, %v295
  %v304 = vpack.c.b16 %v296, %v296
  %v305 = vpack.c.b16 %v297, %v297
  %v306 = vpack.c.b16 %v298, %v298
  %v307 = vpack.c.b16 %v299, %v299
  %v308 = vpack.c.b16 %v300, %v300
  %v309 = vpack.c.b16 %v301, %v301
  %v574 = vunpack.c.l.b16 %v24
  %v575 = vunpack.c.h.b16 %v24
  %v576 = vunpack.c.l.b16 %v25
  %v577 = vunpack.c.h.b16 %v25
  %v578 = vunpack.c.l.b16 %v26
  %v579 = vunpack.c.h.b16 %v26
  %v580 = vunpack.c.l.b16 %v27
  %v581 = vunpack.c.h.b16 %v27
  %v582 = vunpack.c.l.b16 %v28
  %v583 = vunpack.c.h.b16 %v28
  %v584 = vunpack.c.l.b16 %v29
  %v585 = vunpack.c.h.b16 %v29
  %v586 = vunpack.c.l.b16 %v30
  %v587 = vunpack.c.h.b16 %v30
  %v588 = vunpack.c.l.b16 %v31
  %v589 = vunpack.c.h.b16 %v31
  %v590 = vunpack.c.l.b16 %v32
  %v591 = vunpack.c.h.b16 %v32
  %v592 = vunpack.c.l.b16 %v33
  %v593 = vunpack.c.h.b16 %v33
  %v594 = vunpack.c.l.b16 %v34
  %v595 = vunpack.c.h.b16 %v34
  %v596 = vunpack.c.l.b16 %v35
  %v597 = vunpack.c.h.b16 %v35
  %v598 = vunpack.c.l.b16 %v36
  %v599 = vunpack.c.h.b16 %v36
  %v600 = vunpack.c.l.b16 %v37
  %v601 = vunpack.c.h.b16 %v37
  %v602 = vunpack.c.l.b16 %v38
  %v603 = vunpack.c.h.b16 %v38
  %v604 = vunpack.c.l.b16 %v39
  %v605 = vunpack.c.h.b16 %v39
  %v606 = vunpack.c.l.b16 %v40
  %v607 = vunpack.c.h.b16 %v40
  %v608 = vunpack.c.l.b16 %v41
  %v609 = vunpack.c.h.b16 %v41
  %v610 = vunpack.c.l.b16 %v42
  %v611 = vunpack.c.h.b16 %v42
  %v612 = vunpack.c.l.b16 %v43
  %v613 = vunpack.c.h.b16 %v43
  %v614 = vunpack.c.l.b16 %v44
  %v615 = vunpack.c.h.b16 %v44
  %v616 = vunpack.c.l.b16 %v45
  %v617 = vunpack.c.h.b16 %v45
  %v618 = vunpack.c.l.b16 %v46
  %v619 = vunpack.c.h.b16 %v46
  %v620 = vunpack.c.l.b16 %v47
  %v621 = vunpack.c.h.b16 %v47
  %v622 = vunpack.c.l.b16 %v48
  %v623 = vunpack.c.h.b16 %v48
  %v624 = vunpack.c.l.b16 %v49
  %v625 = vunpack.c.h.b16 %v49
  %v626 = vunpack.c.l.b16 %v50
  %v627 = vunpack.c.h.b16 %v50
  %v628 = vunpack.c.l.b16 %v51
  %v629 = vunpack.c.h.b16 %v51
  %v630 = vunpack.c.l.b16 %v52
  %v631 = vunpack.c.h.b16 %v52
  %v632 = vunpack.c.l.b16 %v53
  %v633 = vunpack.c.h.b16 %v53
  %v634 = vunpack.c.l.b16 %v54
  %v635 = vunpack.c.h.b16 %v54
  %v636 = vunpack.c.l.b16 %v55
  %v637 = vunpack.c.h.b16 %v55
  %v638 = vunpack.c.l.b16 %v56
  %v639 = vunpack.c.h.b16 %v56
  %v640 = vunpack.c.l.b16 %v57
  %v641 = vunpack.c.h.b16 %v57
  %v642 = vunpack.c.l.b16 %v58
  %v643 = vunpack.c.h.b16 %v58
  %v644 = vunpack.c.l.b16 %v59
  %v645 = vunpack.c.h.b16 %v59
  %v646 = vunpack.c.l.b16 %v60
  %v647 = vunpack.c.h.b16 %v60
  %v648 = vunpack.c.l.b16 %v61
  %v649 = vunpack.c.h.b16 %v61
  %v650 = vunpack.c.l.b16 %v62
  %v651 = vunpack.c.h.b16 %v62
  %v652 = vunpack.c.l.b16 %v63
  %v653 = vunpack.c.h.b16 %v63
  %v654 = vunpack.c.l.b16 %v64
  %v655 = vunpack.c.h.b16 %v64
  %v656 = vunpack.c.l.b16 %v65
  %v657 = vunpack.c.h.b16 %v65
  %v658 = vunpack.c.l.b16 %v66
  %v659 = vunpack.c.h.b16 %v66
  %v660 = vunpack.c.l.b16 %v67
  %v661 = vunpack.c.h.b16 %v67
  %v662 = vunpack.c.l.b16 %v68
  %v663 = vunpack.c.h.b16 %v68
  %v664 = vunpack.c.l.b16 %v69
  %v665 = vunpack.c.h.b16 %v69
  %v666 = vunpack.c.l.b16 %v70
  %v667 = vunpack.c.h.b16 %v70
  %v668 = vunpack.c.l.b16 %v71
  %v669 = vunpack.c.h.b16 %v71
  %v670 = vunpack.c.l.b16 %v72
  %v671 = vunpack.c.h.b16 %v72
  %v672 = vunpack.c.l.b16 %v73
  %v673 = vunpack.c.h.b16 %v73
  %v674 = vunpack.c.l.b16 %v74
  %v675 = vunpack.c.h.b16 %v74
  %v676 = vunpack.c.l.b16 %v75
  %v677 = vunpack.c.h.b16 %v75
  %v678 = vunpack.c.l.b16 %v76
  %v679 = vunpack.c.h.b16 %v76
  %v680 = vunpack.c.l.b16 %v77
  %v681 = vunpack.c.h.b16 %v77
  %v682 = vunpack.c.l.b16 %v78
  %v683 = vunpack.c.h.b16 %v78
  %v684 = vunpack.c.l.b16 %v79
  %v685 = vunpack.c.h.b16 %v79
  %v686 = vunpack.c.l.b16 %v80
  %v687 = vunpack.c.h.b16 %v80
  %v688 = vunpack.c.l.b16 %v81
  %v689 = vunpack.c.h.b16 %v81
  %v690 = vunpack.c.l.b16 %v82
  %v691 = vunpack.c.h.b16 %v82
  %v692 = vunpack.c.l.b16 %v83
  %v693 = vunpack.c.h.b16 %v83
  %v694 = vunpack.c.l.b16 %v84
  %v695 = vunpack.c.h.b16 %v84
  %v696 = vunpack.c.l.b16 %v85
  %v697 = vunpack.c.h.b16 %v85
  %v698 = vunpack.c.l.b16 %v86
  %v699 = vunpack.c.h.b16 %v86
  %v700 = vunpack.c.l.b16 %v87
  %v701 = vunpack.c.h.b16 %v87
  %v702 = vunpack.c.l.b16 %v88
  %v703 = vunpack.c.h.b16 %v88
  %v704 = vunpack.c.l.b16 %v89
  %v705 = vunpack.c.h.b16 %v89
  %v706 = vunpack.c.l.b16 %v90
  %v707 = vunpack.c.h.b16 %v90
  %v708 = vunpack.c.l.b16 %v91
  %v709 = vunpack.c.h.b16 %v91
  %v710 = vunpack.c.l.b16 %v92
  %v711 = vunpack.c.h.b16 %v92
  %v712 = vunpack.c.l.b16 %v93
  %v713 = vunpack.c.h.b16 %v93
  %v714 = vunpack.c.l.b16 %v94
  %v715 = vunpack.c.h.b16 %v94
  %v716 = vunpack.c.l.b16 %v95
  %v717 = vunpack.c.h.b16 %v95
  %v718 = vunpack.c.l.b16 %v96
  %v719 = vunpack.c.h.b16 %v96
  %v720 = vunpack.c.l.b16 %v97
  %v721 = vunpack.c.h.b16 %v97
  %v722 = vunpack.c.l.b16 %v98
  %v723 = vunpack.c.h.b16 %v98
  %v724 = vunpack.c.l.b16 %v99
  %v725 = vunpack.c.h.b16 %v99
  %v726 = vunpack.c.l.b16 %v100
  %v727 = vunpack.c.h.b16 %v100
  %v728 = vunpack.c.l.b16 %v101
  %v729 = vunpack.c.h.b16 %v101
  %v730 = vunpack.c.l.b16 %v102
  %v731 = vunpack.c.h.b16 %v102
  %v732 = vunpack.c.l.b16 %v103
  %v733 = vunpack.c.h.b16 %v103
  %v734 = vunpack.c.l.b16 %v104
  %v735 = vunpack.c.h.b16 %v104
  %v736 = vunpack.c.l.b16 %v105
  %v737 = vunpack.c.h.b16 %v105
  %v738 = vunpack.c.l.b16 %v106
  %v739 = vunpack.c.h.b16 %v106
  %v740 = vunpack.c.l.b16 %v107
  %v741 = vunpack.c.h.b16 %v107
  %v742 = vunpack.c.l.b16 %v108
  %v743 = vunpack.c.h.b16 %v108
  %v744 = vunpack.c.l.b16 %v109
  %v745 = vunpack.c.h.b16 %v109
  %v746 = vunpack.c.l.b16 %v110
  %v747 = vunpack.c.h.b16 %v110
  %v748 = vunpack.c.l.b16 %v111
  %v749 = vunpack.c.h.b16 %v111
  %v750 = vunpack.c.l.b16 %v112
  %v751 = vunpack.c.h.b16 %v112
  %v752 = vunpack.c.l.b16 %v113
  %v753 = vunpack.c.h.b16 %v113
  %v754 = vunpack.c.l.b16 %v114
  %v755 = vunpack.c.h.b16 %v114
  %v756 = vunpack.c.l.b16 %v115
  %v757 = vunpack.c.h.b16 %v115
  %v758 = vunpack.c.l.b16 %v116
  %v759 = vunpack.c.h.b16 %v116
  %v760 = vunpack.c.l.b16 %v117
  %v761 = vunpack.c.h.b16 %v117
  %v762 = vunpack.c.l.b16 %v118
  %v763 = vunpack.c.h.b16 %v118
  %v764 = vunpack.c.l.b16 %v119
  %v765 = vunpack.c.h.b16 %v119
  %v766 = vunpack.c.l.b16 %v120
  %v767 = vunpack.c.h.b16 %v120
  %v768 = vunpack.c.l.b16 %v121
  %v769 = vunpack.c.h.b16 %v121
  %v770 = vunpack.c.l.b16 %v122
  %v771 = vunpack.c.h.b16 %v122
  %v772 = vunpack.c.l.b16 %v123
  %v773 = vunpack.c.h.b16 %v123
  %v774 = vunpack.c.l.b16 %v124
  %v775 = vunpack.c.h.b16 %v124
  %v776 = vunpack.c.l.b16 %v125
  %v777 = vunpack.c.h.b16 %v125
  %v778 = vunpack.c.l.b16 %v126
  %v779 = vunpack.c.h.b16 %v126
  %v780 = vunpack.c.l.b16 %v127
  %v781 = vunpack.c.h.b16 %v127
  %v782 = vunpack.c.l.b16 %v128
  %v783 = vunpack.c.h.b16 %v128
  %v784 = vunpack.c.l.b16 %v129
  %v785 = vunpack.c.h.b16 %v129
  %v786 = vunpack.c.l.b16 %v130
  %v787 = vunpack.c.h.b16 %v130
  %v788 = vunpack.c.l.b16 %v131
  %v789 = vunpack.c.h.b16 %v131
  %v790 = vunpack.c.l.b16 %v132
  %v791 = vunpack.c.h.b16 %v132
  %v792 = vunpack.c.l.b16 %v133
  %v793 = vunpack.c.h.b16 %v133
  %v794 = vunpack.c.l.b16 %v134
  %v795 = vunpack.c.h.b16 %v134
  %v796 = vunpack.c.l.b16 %v135
  %v797 = vunpack.c.h.b16 %v135
  %v798 = vunpack.c.l.b16 %v136
  %v799 = vunpack.c.h.b16 %v136
  %v800 = vunpack.c.l.b16 %v137
  %v801 = vunpack.c.h.b16 %v137
  %v802 = vunpack.c.l.b16 %v138
  %v803 = vunpack.c.h.b16 %v138
  %v804 = vunpack.c.l.b16 %v139
  %v805 = vunpack.c.h.b16 %v139
  %v806 = vunpack.c.l.b16 %v140
  %v807 = vunpack.c.h.b16 %v140
  %v808 = vunpack.c.l.b16 %v141
  %v809 = vunpack.c.h.b16 %v141
  %v810 = vunpack.c.l.b16 %v142
  %v811 = vunpack.c.h.b16 %v142
  %v812 = vunpack.c.l.b16 %v143
  %v813 = vunpack.c.h.b16 %v143
  %v814 = vunpack.c.l.b16 %v144
  %v815 = vunpack.c.h.b16 %v144
  %v816 = vunpack.c.l.b16 %v145
  %v817 = vunpack.c.h.b16 %v145
  %v818 = vunpack.c.l.b16 %v146
  %v819 = vunpack.c.h.b16 %v146
  %v820 = vunpack.c.l.b16 %v147
  %v821 = vunpack.c.h.b16 %v147
  %v822 = vunpack.c.l.b16 %v148
  %v823 = vunpack.c.h.b16 %v148
  %v824 = vunpack.c.l.b16 %v149
  %v825 = vunpack.c.h.b16 %v149
  %v826 = vunpack.c.l.b16 %v150
  %v827 = vunpack.c.h.b16 %v150
  %v828 = vunpack.c.l.b16 %v151
  %v829 = vunpack.c.h.b16 %v151
  %v830 = vunpack.c.l.b16 %v152
  %v831 = vunpack.c.h.b16 %v152
  %v832 = vunpack.c.l.b16 %v153
  %v833 = vunpack.c.h.b16 %v153
  %v834 = vunpack.c.l.b16 %v154
  %v835 = vunpack.c.h.b16 %v154
  %v836 = vunpack.c.l.b16 %v155
  %v837 = vunpack.c.h.b16 %v155
  %v838 = vunpack.c.l.b16 %v156
  %v839 = vunpack.c.h.b16 %v156
  %v840 = vunpack.c.l.b16 %v157
  %v841 = vunpack.c.h.b16 %v157
  %v842 = vunpack.c.l.b16 %v158
  %v843 = vunpack.c.h.b16 %v158
  %v844 = vunpack.c.l.b16 %v159
  %v845 = vunpack.c.h.b16 %v159
  %v846 = vunpack.c.l.b16 %v160
  %v847 = vunpack.c.h.b16 %v160
  %v848 = vunpack.c.l.b16 %v161
  %v849 = vunpack.c.h.b16 %v161
  %v850 = vunpack.c.l.b16 %v162
  %v851 = vunpack.c.h.b16 %v162
  %v852 = vunpack.c.l.b16 %v163
  %v853 = vunpack.c.h.b16 %v163
  %v854 = vunpack.c.l.b16 %v164
  %v855 = vunpack.c.h.b16 %v164
  %v856 = vunpack.c.l.b16 %v165
  %v857 = vunpack.c.h.b16 %v165
  %v858 = vunpack.c.l.b16 %v166
  %v859 = vunpack.c.h.b16 %v166
  %v860 = vunpack.c.l.b16 %v167
  %v861 = vunpack.c.h.b16 %v167
  %v862 = vunpack.c.l.b16 %v168
  %v863 = vunpack.c.h.b16 %v168
  %v864 = vunpack.c.l.b16 %v169
  %v865 = vunpack.c.h.b16 %v169
  %v866 = vunpack.c.l.b16 %v170
  %v867 = vunpack.c.h.b16 %v170
  %v868 = vunpack.c.l.b16 %v171
  %v869 = vunpack.c.h.b16 %v171
  %v870 = vunpack.c.l.b16 %v172
  %v871 = vunpack.c.h.b16 %v172
  %v872 = vunpack.c.l.b16 %v173
  %v873 = vunpack.c.h.b16 %v173
  %v874 = vunpack.c.l.b16 %v174
  %v875 = vunpack.c.h.b16 %v174
  %v876 = vunpack.c.l.b16 %v175
  %v877 = vunpack.c.h.b16 %v175
  %v878 = vunpack.c.l.b16 %v176
  %v879 = vunpack.c.h.b16 %v176
  %v880 = vunpack.c.l.b16 %v177
  %v881 = vunpack.c.h.b16 %v177
  %v882 = vunpack.c.l.b16 %v178
  %v883 = vunpack.c.h.b16 %v178
  %v884 = vunpack.c.l.b16 %v179
  %v885 = vunpack.c.h.b16 %v179
  %v886 = vunpack.c.l.b16 %v180
  %v887 = vunpack.c.h.b16 %v180
  %v888 = vunpack.c.l.b16 %v181
  %v889 = vunpack.c.h.b16 %v181
  %v890 = vunpack.c.l.b16 %v182
  %v891 = vunpack.c.h.b16 %v182
  %v892 = vunpack.c.l.b16 %v183
  %v893 = vunpack.c.h.b16 %v183
  %v894 = vunpack.c.l.b16 %v184
  %v895 = vunpack.c.h.b16 %v184
  %v896 = vunpack.c.l.b16 %v185
  %v897 = vunpack.c.h.b16 %v185
  %v898 = vunpack.c.l.b16 %v186
  %v899 = vunpack.c.h.b16 %v186
  %v900 = vunpack.c.l.b16 %v187
  %v901 = vunpack.c.h.b16 %v187
  %v902 = vunpack.c.l.b16 %v188
  %v903 = vunpack.c.h.b16 %v188
  %v904 = vunpack.c.l.b16 %v189
  %v905 = vunpack.c.h.b16 %v189
  %v906 = vunpack.c.l.b16 %v190
  %v907 = vunpack.c.h.b16 %v190
  %v908 = vunpack.c.l.b16 %v191
  %v909 = vunpack.c.h.b16 %v191
  %v910 = vunpack.c.l.b16 %v192
  %v911 = vunpack.c.h.b16 %v192
  %v912 = vunpack.c.l.b16 %v193
  %v913 = vunpack.c.h.b16 %v193
  %v914 = vunpack.c.l.b16 %v194
  %v915 = vunpack.c.h.b16 %v194
  %v916 = vunpack.c.l.b16 %v195
  %v917 = vunpack.c.h.b16 %v195
  %v918 = vunpack.c.l.b16 %v196
  %v919 = vunpack.c.h.b16 %v196
  %v920 = vunpack.c.l.b16 %v197
  %v921 = vunpack.c.h.b16 %v197
  %v922 = vunpack.c.l.b16 %v198
  %v923 = vunpack.c.h.b16 %v198
  %v924 = vunpack.c.l.b16 %v199
  %v925 = vunpack.c.h.b16 %v199
  %v926 = vunpack.c.l.b16 %v200
  %v927 = vunpack.c.h.b16 %v200
  %v928 = vunpack.c.l.b16 %v201
  %v929 = vunpack.c.h.b16 %v201
  %v930 = vunpack.c.l.b16 %v202
  %v931 = vunpack.c.h.b16 %v202
  %v932 = vunpack.c.l.b16 %v203
  %v933 = vunpack.c.h.b16 %v203
  %v934 = vunpack.c.l.b16 %v204
  %v935 = vunpack.c.h.b16 %v204
  %v936 = vunpack.c.l.b16 %v205
  %v937 = vunpack.c.h.b16 %v205
  %v938 = vunpack.c.l.b16 %v206
  %v939 = vunpack.c.h.b16 %v206
  %v940 = vunpack.c.l.b16 %v207
  %v941 = vunpack.c.h.b16 %v207
  %v942 = vunpack.c.l.b16 %v208
  %v943 = vunpack.c.h.b16 %v208
  %v944 = vunpack.c.l.b16 %v209
  %v945 = vunpack.c.h.b16 %v209
  %v946 = vunpack.c.l.b16 %v210
  %v947 = vunpack.c.h.b16 %v210
  %v948 = vunpack.c.l.b16 %v211
  %v949 = vunpack.c.h.b16 %v211
  %v950 = vunpack.c.l.b16 %v212
  %v951 = vunpack.c.h.b16 %v212
  %v952 = vunpack.c.l.b16 %v213
  %v953 = vunpack.c.h.b16 %v213
  %v954 = vunpack.c.l.b16 %v214
  %v955 = vunpack.c.h.b16 %v214
  %v956 = vunpack.c.l.b16 %v215
  %v957 = vunpack.c.h.b16 %v215
  %v958 = vunpack.c.l.b16 %v216
  %v959 = vunpack.c.h.b16 %v216
  %v960 = vunpack.c.l.b16 %v217
  %v961 = vunpack.c.h.b16 %v217
  %v962 = vunpack.c.l.b16 %v218
  %v963 = vunpack.c.h.b16 %v218
  %v964 = vunpack.c.l.b16 %v219
  %v965 = vunpack.c.h.b16 %v219
  %v966 = vunpack.c.l.b16 %v220
  %v967 = vunpack.c.h.b16 %v220
  %v968 = vunpack.c.l.b16 %v221
  %v969 = vunpack.c.h.b16 %v221
  %v970 = vunpack.c.l.b16 %v222
  %v971 = vunpack.c.h.b16 %v222
  %v972 = vunpack.c.l.b16 %v223
  %v973 = vunpack.c.h.b16 %v223
  %v974 = vunpack.c.l.b16 %v224
  %v975 = vunpack.c.h.b16 %v224
  %v976 = vunpack.c.l.b16 %v225
  %v977 = vunpack.c.h.b16 %v225
  %v978 = vunpack.c.l.b16 %v226
  %v979 = vunpack.c.h.b16 %v226
  %v980 = vunpack.c.l.b16 %v227
  %v981 = vunpack.c.h.b16 %v227
  %v982 = vunpack.c.l.b16 %v228
  %v983 = vunpack.c.h.b16 %v228
  %v984 = vunpack.c.l.b16 %v229
  %v985 = vunpack.c.h.b16 %v229
  %v986 = vunpack.c.l.b16 %v230
  %v987 = vunpack.c.h.b16 %v230
  %v988 = vunpack.c.l.b16 %v231
  %v989 = vunpack.c.h.b16 %v231
  %v990 = vunpack.c.l.b16 %v232
  %v991 = vunpack.c.h.b16 %v232
  %v992 = vunpack.c.l.b16 %v233
  %v993 = vunpack.c.h.b16 %v233
  %v994 = vunpack.c.l.b16 %v234
  %v995 = vunpack.c.h.b16 %v234
  %v996 = vunpack.c.l.b16 %v235
  %v997 = vunpack.c.h.b16 %v235
  %v998 = vunpack.c.l.b16 %v236
  %v999 = vunpack.c.h.b16 %v236
  %v1000 = vunpack.c.l.b16 %v237
  %v1001 = vunpack.c.h.b16 %v237
  %v1002 = vunpack.c.l.b16 %v238
  %v1003 = vunpack.c.h.b16 %v238
  %v1004 = vunpack.c.l.b16 %v239
  %v1005 = vunpack.c.h.b16 %v239
  %v1006 = vunpack.c.l.b16 %v240
  %v1007 = vunpack.c.h.b16 %v240
  %v1008 = vunpack.c.l.b16 %v241
  %v1009 = vunpack.c.h.b16 %v241
  %v1010 = vunpack.c.l.b16 %v242
  %v1011 = vunpack.c.h.b16 %v242
  %v1012 = vunpack.c.l.b16 %v243
  %v1013 = vunpack.c.h.b16 %v243
  %v1014 = vunpack.c.l.b16 %v244
  %v1015 = vunpack.c.h.b16 %v244
  %v1016 = vunpack.c.l.b16 %v245
  %v1017 = vunpack.c.h.b16 %v245
  %v1018 = vunpack.c.l.b16 %v246
  %v1019 = vunpack.c.h.b16 %v246
  %v1020 = vunpack.c.l.b16 %v247
  %v1021 = vunpack.c.h.b16 %v247
  %v1022 = vunpack.c.l.b16 %v248
  %v1023 = vunpack.c.h.b16 %v248
  %v1024 = vunpack.c.l.b16 %v249
  %v1025 = vunpack.c.h.b16 %v249
  %v1026 = vunpack.c.l.b16 %v250
  %v1027 = vunpack.c.h.b16 %v250
  %v1028 = vunpack.c.l.b16 %v251
  %v1029 = vunpack.c.h.b16 %v251
  %v1030 = vunpack.c.l.b16 %v252
  %v1031 = vunpack.c.h.b16 %v252
  %v1032 = vunpack.c.l.b16 %v253
  %v1033 = vunpack.c.h.b16 %v253
  %v1034 = vunpack.c.l.b16 %v254
  %v1035 = vunpack.c.h.b16 %v254
  %v1036 = vunpack.c.l.b16 %v255
  %v1037 = vunpack.c.h.b16 %v255
  %v1038 = vunpack.c.l.b16 %v256
  %v1039 = vunpack.c.h.b16 %v256
  %v1040 = vunpack.c.l.b16 %v257
  %v1041 = vunpack.c.h.b16 %v257
  %v1042 = vunpack.c.l.b16 %v258
  %v1043 = vunpack.c.h.b16 %v258
  %v1044 = vunpack.c.l.b16 %v259
  %v1045 = vunpack.c.h.b16 %v259
  %v1046 = vunpack.c.l.b16 %v260
  %v1047 = vunpack.c.h.b16 %v260
  %v1048 = vunpack.c.l.b16 %v261
  %v1049 = vunpack.c.h.b16 %v261
  %v1050 = vunpack.c.l.b16 %v262
  %v1051 = vunpack.c.h.b16 %v262
  %v1052 = vunpack.c.l.b16 %v263
  %v1053 = vunpack.c.h.b16 %v263
  %v1054 = vunpack.c.l.b16 %v264
  %v1055 = vunpack.c.h.b16 %v264
  %v1056 = vunpack.c.l.b16 %v265
  %v1057 = vunpack.c.h.b16 %v265
  %v1058 = vunpack.c.l.b16 %v266
  %v1059 = vunpack.c.h.b16 %v266
  %v1060 = vunpack.c.l.b16 %v267
  %v1061 = vunpack.c.h.b16 %v267
  %v1062 = vunpack.c.l.b16 %v268
  %v1063 = vunpack.c.h.b16 %v268
  %v1064 = vunpack.c.l.b16 %v269
  %v1065 = vunpack.c.h.b16 %v269
  %v1066 = vunpack.c.l.b16 %v270
  %v1067 = vunpack.c.h.b16 %v270
  %v1068 = vunpack.c.l.b16 %v271
  %v1069 = vunpack.c.h.b16 %v271
  %v1070 = vunpack.c.l.b16 %v272
  %v1071 = vunpack.c.h.b16 %v272
  %v1072 = vunpack.c.l.b16 %v273
  %v1073 = vunpack.c.h.b16 %v273
  %v1074 = vunpack.c.l.b16 %v274
  %v1075 = vunpack.c.h.b16 %v274
  %v1076 = vunpack.c.l.b16 %v275
  %v1077 = vunpack.c.h.b16 %v275
  %v1078 = vunpack.c.l.b16 %v276
  %v1079 = vunpack.c.h.b16 %v276
  %v1080 = vunpack.c.l.b16 %v277
  %v1081 = vunpack.c.h.b16 %v277
  %v1082 = vunpack.c.l.b16 %v278
  %v1083 = vunpack.c.h.b16 %v278
  %v1084 = vunpack.c.l.b16 %v279
  %v1085 = vunpack.c.h.b16 %v279
  %v1086 = vpack.c.b16 %v578, %v574
  %v1087 = vpack.c.b16 %v579, %v575
  %v1088 = vpack.c.b16 %v580, %v576
  %v1089 = vpack.c.b16 %v581, %v577
  %v1090 = vpack.c.b16 %v586, %v582
  %v1091 = vpack.c.b16 %v587, %v583
  %v1092 = vpack.c.b16 %v588, %v584
  %v1093 = vpack.c.b16 %v589, %v585
  %v1094 = vpack.c.b16 %v594, %v590
  %v1095 = vpack.c.b16 %v595, %v591
  %v1096 = vpack.c.b16 %v596, %v592
  %v1097 = vpack.c.b16 %v597, %v593
  %v1098 = vpack.c.b16 %v602, %v598
  %v1099 = vpack.c.b16 %v603, %v599
  %v1100 = vpack.c.b16 %v604, %v600
  %v1101 = vpack.c.b16 %v605, %v601
  %v1102 = vpack.c.b16 %v610, %v606
  %v1103 = vpack.c.b16 %v611, %v607
  %v1104 = vpack.c.b16 %v612, %v608
  %v1105 = vpack.c.b16 %v613, %v609
  %v1106 = vpack.c.b16 %v618, %v614
  %v1107 = vpack.c.b16 %v619, %v615
  %v1108 = vpack.c.b16 %v620, %v616
  %v1109 = vpack.c.b16 %v621, %v617
  %v1110 = vpack.c.b16 %v626, %v622
  %v1111 = vpack.c.b16 %v627, %v623
  %v1112 = vpack.c.b16 %v628, %v624
  %v1113 = vpack.c.b16 %v629, %v625
  %v1114 = vpack.c.b16 %v634, %v630
  %v1115 = vpack.c.b16 %v635, %v631
  %v1116 = vpack.c.b16 %v636, %v632
  %v1117 = vpack.c.b16 %v637, %v633
  %v1118 = vpack.c.b16 %v642, %v638
  %v1119 = vpack.c.b16 %v643, %v639
  %v1120 = vpack.c.b16 %v644, %v640
  %v1121 = vpack.c.b16 %v645, %v641
  %v1122 = vpack.c.b16 %v650, %v646
  %v1123 = vpack.c.b16 %v651, %v647
  %v1124 = vpack.c.b16 %v652, %v648
  %v1125 = vpack.c.b16 %v653, %v649
  %v1126 = vpack.c.b16 %v658, %v654
  %v1127 = vpack.c.b16 %v659, %v655
  %v1128 = vpack.c.b16 %v660, %v656
  %v1129 = vpack.c.b16 %v661, %v657
  %v1130 = vpack.c.b16 %v666, %v662
  %v1131 = vpack.c.b16 %v667, %v663
  %v1132 = vpack.c.b16 %v668, %v664
  %v1133 = vpack.c.b16 %v669, %v665
  %v1134 = vpack.c.b16 %v674, %v670
  %v1135 = vpack.c.b16 %v675, %v671
  %v1136 = vpack.c.b16 %v676, %v672
  %v1137 = vpack.c.b16 %v677, %v673
  %v1138 = vpack.c.b16 %v682, %v678
  %v1139 = vpack.c.b16 %v683, %v679
  %v1140 = vpack.c.b16 %v684, %v680
  %v1141 = vpack.c.b16 %v685, %v681
  %v1142 = vpack.c.b16 %v690, %v686
  %v1143 = vpack.c.b16 %v691, %v687
  %v1144 = vpack.c.b16 %v692, %v688
  %v1145 = vpack.c.b16 %v693, %v689
  %v1146 = vpack.c.b16 %v698, %v694
  %v1147 = vpack.c.b16 %v699, %v695
  %v1148 = vpack.c.b16 %v700, %v696
  %v1149 = vpack.c.b16 %v701, %v697
  %v1150 = vpack.c.b16 %v706, %v702
  %v1151 = vpack.c.b16 %v707, %v703
  %v1152 = vpack.c.b16 %v708, %v704
  %v1153 = vpack.c.b16 %v709, %v705
  %v1154 = vpack.c.b16 %v714, %v710
  %v1155 = vpack.c.b16 %v715, %v711
  %v1156 = vpack.c.b16 %v716, %v712
  %v1157 = vpack.c.b16 %v717, %v713
  %v1158 = vpack.c.b16 %v722, %v718
  %v1159 = vpack.c.b16 %v723, %v719
  %v1160 = vpack.c.b16 %v724, %v720
  %v1161 = vpack.c.b16 %v725, %v721
  %v1162 = vpack.c.b16 %v730, %v726
  %v1163 = vpack.c.b16 %v731, %v727
  %v1164 = vpack.c.b16 %v732, %v728
  %v1165 = vpack.c.b16 %v733, %v729
  %v1166 = vpack.c.b16 %v738, %v734
  %v1167 = vpack.c.b16 %v739, %v735
  %v1168 = vpack.c.b16 %v740, %v736
  %v1169 = vpack.c.b16 %v741, %v737
  %v1170 = vpack.c.b16 %v746, %v742
  %v1171 = vpack.c.b16 %v747, %v743
  %v1172 = vpack.c.b16 %v748, %v744
  %v1173 = vpack.c.b16 %v749, %v745
  %v1174 = vpack.c.b16 %v754, %v750
  %v1175 = vpack.c.b16 %v755, %v751
  %v1176 = vpack.c.b16 %v756, %v752
  %v1177 = vpack.c.b16 %v757, %v753
  %v1178 = vpack.c.b16 %v762, %v758
  %v1179 = vpack.c.b16 %v763, %v759
  %v1180 = vpack.c.b16 %v764, %v760
  %v1181 = vpack.c.b16 %v765, %v761
  %v1182 = vpack.c.b16 %v770, %v766
  %v1183 = vpack.c.b16 %v771, %v767
  %v1184 = vpack.c.b16 %v772, %v768
  %v1185 = vpack.c.b16 %v773, %v769
  %v1186 = vpack.c.b16 %v778, %v774
  %v1187 = vpack.c.b16 %v779, %v775
  %v1188 = vpack.c.b16 %v780, %v776
  %v1189 = vpack.c.b16 %v781, %v777
  %v1190 = vpack.c.b16 %v786, %v782
  %v1191 = vpack.c.b16 %v787, %v783
  %v1192 = vpack.c.b16 %v788, %v784
  %v1193 = vpack.c.b16 %v789, %v785
  %v1194 = vpack.c.b16 %v794, %v790
  %v1195 = vpack.c.b16 %v795, %v791
  %v1196 = vpack.c.b16 %v796, %v792
  %v1197 = vpack.c.b16 %v797, %v793
  %v1198 = vpack.c.b16 %v802, %v798
  %v1199 = vpack.c.b16 %v803, %v799
  %v1200 = vpack.c.b16 %v804, %v800
  %v1201 = vpack.c.b16 %v805, %v801
  %v1202 = vpack.c.b16 %v810, %v806
  %v1203 = vpack.c.b16 %v811, %v807
  %v1204 = vpack.c.b16 %v812, %v808
  %v1205 = vpack.c.b16 %v813, %v809
  %v1206 = vpack.c.b16 %v818, %v814
  %v1207 = vpack.c.b16 %v819, %v815
  %v1208 = vpack.c.b16 %v820, %v816
  %v1209 = vpack.c.b16 %v821, %v817
  %v1210 = vpack.c.b16 %v826, %v822
  %v1211 = vpack.c.b16 %v827, %v823
  %v1212 = vpack.c.b16 %v828, %v824
  %v1213 = vpack.c.b16 %v829, %v825
  %v1214 = vpack.c.b16 %v834, %v830
  %v1215 = vpack.c.b16 %v835, %v831
  %v1216 = vpack.c.b16 %v836, %v832
  %v1217 = vpack.c.b16 %v837, %v833
  %v1218 = vpack.c.b16 %v842, %v838
  %v1219 = vpack.c.b16 %v843, %v839
  %v1220 = vpack.c.b16 %v844, %v840
  %v1221 = vpack.c.b16 %v845, %v841
  %v1222 = vpack.c.b16 %v850, %v846
  %v1223 = vpack.c.b16 %v851, %v847
  %v1224 = vpack.c.b16 %v852, %v848
  %v1225 = vpack.c.b16 %v853, %v849
  %v1226 = vpack.c.b16 %v858, %v854
  %v1227 = vpack.c.b16 %v859, %v855
  %v1228 = vpack.c.b16 %v860, %v856
  %v1229 = vpack.c.b16 %v861, %v857
  %v1230 = vpack.c.b16 %v866, %v862
  %v1231 = vpack.c.b16 %v867, %v863
  %v1232 = vpack.c.b16 %v868, %v864
  %v1233 = vpack.c.b16 %v869, %v865
  %v1234 = vpack.c.b16 %v874, %v870
  %v1235 = vpack.c.b16 %v875, %v871
  %v1236 = vpack.c.b16 %v876, %v872
  %v1237 = vpack.c.b16 %v877, %v873
  %v1238 = vpack.c.b16 %v882, %v878
  %v1239 = vpack.c.b16 %v883, %v879
  %v1240 = vpack.c.b16 %v884, %v880
  %v1241 = vpack.c.b16 %v885, %v881
  %v1242 = vpack.c.b16 %v890, %v886
  %v1243 = vpack.c.b16 %v891, %v887
  %v1244 = vpack.c.b16 %v892, %v888
  %v1245 = vpack.c.b16 %v893, %v889
  %v1246 = vpack.c.b16 %v898, %v894
  %v1247 = vpack.c.b16 %v899, %v895
  %v1248 = vpack.c.b16 %v900, %v896
  %v1249 = vpack.c.b16 %v901, %v897
  %v1250 = vpack.c.b16 %v906, %v902
  %v1251 = vpack.c.b16 %v907, %v903
  %v1252 = vpack.c.b16 %v908, %v904
  %v1253 = vpack.c.b16 %v909, %v905
  %v1254 = vpack.c.b16 %v914, %v910
  %v1255 = vpack.c.b16 %v915, %v911
  %v1256 = vpack.c.b16 %v916, %v912
  %v1257 = vpack.c.b16 %v917, %v913
  %v1258 = vpack.c.b16 %v922, %v918
  %v1259 = vpack.c.b16 %v923, %v919
  %v1260 = vpack.c.b16 %v924, %v920
  %v1261 = vpack.c.b16 %v925, %v921
  %v1262 = vpack.c.b16 %v930, %v926
  %v1263 = vpack.c.b16 %v931, %v927
  %v1264 = vpack.c.b16 %v932, %v928
  %v1265 = vpack.c.b16 %v933, %v929
  %v1266 = vpack.c.b16 %v938, %v934
  %v1267 = vpack.c.b16 %v939, %v935
  %v1268 = vpack.c.b16 %v940, %v936
  %v1269 = vpack.c.b16 %v941, %v937
  %v1270 = vpack.c.b16 %v946, %v942
  %v1271 = vpack.c.b16 %v947, %v943
  %v1272 = vpack.c.b16 %v948, %v944
  %v1273 = vpack.c.b16 %v949, %v945
  %v1274 = vpack.c.b16 %v954, %v950
  %v1275 = vpack.c.b16 %v955, %v951
  %v1276 = vpack.c.b16 %v956, %v952
  %v1277 = vpack.c.b16 %v957, %v953
  %v1278 = vpack.c.b16 %v962, %v958
  %v1279 = vpack.c.b16 %v963, %v959
  %v1280 = vpack.c.b16 %v964, %v960
  %v1281 = vpack.c.b16 %v965, %v961
  %v1282 = vpack.c.b16 %v970, %v966
  %v1283 = vpack.c.b16 %v971, %v967
  %v1284 = vpack.c.b16 %v972, %v968
  %v1285 = vpack.c.b16 %v973, %v969
  %v1286 = vpack.c.b16 %v978, %v974
  %v1287 = vpack.c.b16 %v979, %v975
  %v1288 = vpack.c.b16 %v980, %v976
  %v1289 = vpack.c.b16 %v981, %v977
  %v1290 = vpack.c.b16 %v986, %v982
  %v1291 = vpack.c.b16 %v987, %v983
  %v1292 = vpack.c.b16 %v988, %v984
  %v1293 = vpack.c.b16 %v989, %v985
  %v1294 = vpack.c.b16 %v994, %v990
  %v1295 = vpack.c.b16 %v995, %v991
  %v1296 = vpack.c.b16 %v996, %v992
  %v1297 = vpack.c.b16 %v997, %v993
  %v1298 = vpack.c.b16 %v1002, %v998
  %v1299 = vpack.c.b16 %v1003, %v999
  %v1300 = vpack.c.b16 %v1004, %v1000
  %v1301 = vpack.c.b16 %v1005, %v1001
  %v1302 = vpack.c.b16 %v1010, %v1006
  %v1303 = vpack.c.b16 %v1011, %v1007
  %v1304 = vpack.c.b16 %v1012, %v1008
  %v1305 = vpack.c.b16 %v1013, %v1009
  %v1306 = vpack.c.b16 %v1018, %v1014
  %v1307 = vpack.c.b16 %v1019, %v1015
  %v1308 = vpack.c.b16 %v1020, %v1016
  %v1309 = vpack.c.b16 %v1021, %v1017
  %v1310 = vpack.c.b16 %v1026, %v1022
  %v1311 = vpack.c.b16 %v1027, %v1023
  %v1312 = vpack.c.b16 %v1028, %v1024
  %v1313 = vpack.c.b16 %v1029, %v1025
  %v1314 = vpack.c.b16 %v1034, %v1030
  %v1315 = vpack.c.b16 %v1035, %v1031
  %v1316 = vpack.c.b16 %v1036, %v1032
  %v1317 = vpack.c.b16 %v1037, %v1033
  %v1318 = vpack.c.b16 %v1042, %v1038
  %v1319 = vpack.c.b16 %v1043, %v1039
  %v1320 = vpack.c.b16 %v1044, %v1040
  %v1321 = vpack.c.b16 %v1045, %v1041
  %v1322 = vpack.c.b16 %v1050, %v1046
  %v1323 = vpack.c.b16 %v1051, %v1047
  %v1324 = vpack.c.b16 %v1052, %v1048
  %v1325 = vpack.c.b16 %v1053, %v1049
  %v1326 = vpack.c.b16 %v1058, %v1054
  %v1327 = vpack.c.b16 %v1059, %v1055
  %v1328 = vpack.c.b16 %v1060, %v1056
  %v1329 = vpack.c.b16 %v1061, %v1057
  %v1330 = vpack.c.b16 %v1066, %v1062
  %v1331 = vpack.c.b16 %v1067, %v1063
  %v1332 = vpack.c.b16 %v1068, %v1064
  %v1333 = vpack.c.b16 %v1069, %v1065
  %v1334 = vpack.c.b16 %v1074, %v1070
  %v1335 = vpack.c.b16 %v1075, %v1071
  %v1336 = vpack.c.b16 %v1076, %v1072
  %v1337 = vpack.c.b16 %v1077, %v1073
  %v1338 = vpack.c.b16 %v1082, %v1078
  %v1339 = vpack.c.b16 %v1083, %v1079
  %v1340 = vpack.c.b16 %v1084, %v1080
  %v1341 = vpack.c.b16 %v1085, %v1081
  %1598 = vmatpush.bf16.msra.mxu0 %v1114
  %1599 = vmatpush.bf16.msra.mxu0 %v1110
  %1600 = vmatpush.bf16.msra.mxu0 %v1106
  %1601 = vmatpush.bf16.msra.mxu0 %v1102
  %1602 = vmatpush.bf16.msra.mxu0 %v1098
  %1603 = vmatpush.bf16.msra.mxu0 %v1094
  %1604 = vmatpush.bf16.msra.mxu0 %v1090
  %1605 = vmatpush.bf16.msra.mxu0 %v1086
  %1606 = vmatmul.bf16.gmra.mxu0 %v302
  %v1607 = vpop.f32.mrf.mxu0
  %v1608 = vadd.f32 %v282, %v1607
  %v1609 = vpop.f32.mrf.mxu0
  %1610 = vdwg.mxu0
  %1611 = vmatpush.bf16.msra.mxu0 %v1146
  %1612 = vmatpush.bf16.msra.mxu0 %v1142
  %1613 = vmatpush.bf16.msra.mxu0 %v1138
  %1614 = vmatpush.bf16.msra.mxu0 %v1134
  %1615 = vmatpush.bf16.msra.mxu0 %v1130
  %1616 = vmatpush.bf16.msra.mxu0 %v1126
  %1617 = vmatpush.bf16.msra.mxu0 %v1122
  %1618 = vmatpush.bf16.msra.mxu0 %v1118
  %1619 = vmatmul.bf16.gmra.mxu0 %v303
  %v1620 = vpop.f32.mrf.mxu0
  %v1621 = vadd.f32 %v1608, %v1620
  %v1622 = vpop.f32.mrf.mxu0
  %1623 = vdwg.mxu0
  %1624 = vmatpush.bf16.msra.mxu0 %v1178
  %1625 = vmatpush.bf16.msra.mxu0 %v1174
  %1626 = vmatpush.bf16.msra.mxu0 %v1170
  %1627 = vmatpush.bf16.msra.mxu0 %v1166
  %1628 = vmatpush.bf16.msra.mxu0 %v1162
  %1629 = vmatpush.bf16.msra.mxu0 %v1158
  %1630 = vmatpush.bf16.msra.mxu0 %v1154
  %1631 = vmatpush.bf16.msra.mxu0 %v1150
  %1632 = vmatmul.bf16.gmra.mxu0 %v304
  %v1633 = vpop.f32.mrf.mxu0
  %v1634 = vadd.f32 %v1621, %v1633
  %v1635 = vpop.f32.mrf.mxu0
  %1636 = vdwg.mxu0
  %1637 = vmatpush.bf16.msra.mxu0 %v1210
  %1638 = vmatpush.bf16.msra.mxu0 %v1206
  %1639 = vmatpush.bf16.msra.mxu0 %v1202
  %1640 = vmatpush.bf16.msra.mxu0 %v1198
  %1641 = vmatpush.bf16.msra.mxu0 %v1194
  %1642 = vmatpush.bf16.msra.mxu0 %v1190
  %1643 = vmatpush.bf16.msra.mxu0 %v1186
  %1644 = vmatpush.bf16.msra.mxu0 %v1182
  %1645 = vmatmul.bf16.gmra.mxu0 %v305
  %v1646 = vpop.f32.mrf.mxu0
  %v1647 = vadd.f32 %v1634, %v1646
  %v1648 = vpop.f32.mrf.mxu0
  %1649 = vdwg.mxu0
  %1650 = vmatpush.bf16.msra.mxu0 %v1242
  %1651 = vmatpush.bf16.msra.mxu0 %v1238
  %1652 = vmatpush.bf16.msra.mxu0 %v1234
  %1653 = vmatpush.bf16.msra.mxu0 %v1230
  %1654 = vmatpush.bf16.msra.mxu0 %v1226
  %1655 = vmatpush.bf16.msra.mxu0 %v1222
  %1656 = vmatpush.bf16.msra.mxu0 %v1218
  %1657 = vmatpush.bf16.msra.mxu0 %v1214
  %1658 = vmatmul.bf16.gmra.mxu0 %v306
  %v1659 = vpop.f32.mrf.mxu0
  %v1660 = vadd.f32 %v1647, %v1659
  %v1661 = vpop.f32.mrf.mxu0
  %1662 = vdwg.mxu0
  %1663 = vmatpush.bf16.msra.mxu0 %v1274
  %1664 = vmatpush.bf16.msra.mxu0 %v1270
  %1665 = vmatpush.bf16.msra.mxu0 %v1266
  %1666 = vmatpush.bf16.msra.mxu0 %v1262
  %1667 = vmatpush.bf16.msra.mxu0 %v1258
  %1668 = vmatpush.bf16.msra.mxu0 %v1254
  %1669 = vmatpush.bf16.msra.mxu0 %v1250
  %1670 = vmatpush.bf16.msra.mxu0 %v1246
  %1671 = vmatmul.bf16.gmra.mxu0 %v307
  %v1672 = vpop.f32.mrf.mxu0
  %v1673 = vadd.f32 %v1660, %v1672
  %v1674 = vpop.f32.mrf.mxu0
  %1675 = vdwg.mxu0
  %1676 = vmatpush.bf16.msra.mxu0 %v1306
  %1677 = vmatpush.bf16.msra.mxu0 %v1302
  %1678 = vmatpush.bf16.msra.mxu0 %v1298
  %1679 = vmatpush.bf16.msra.mxu0 %v1294
  %1680 = vmatpush.bf16.msra.mxu0 %v1290
  %1681 = vmatpush.bf16.msra.mxu0 %v1286
  %1682 = vmatpush.bf16.msra.mxu0 %v1282
  %1683 = vmatpush.bf16.msra.mxu0 %v1278
  %1684 = vmatmul.bf16.gmra.mxu0 %v308
  %v1685 = vpop.f32.mrf.mxu0
  %v1686 = vadd.f32 %v1673, %v1685
  %v1687 = vpop.f32.mrf.mxu0
  %1688 = vdwg.mxu0
  %1689 = vmatpush.bf16.msra.mxu0 %v1338
  %1690 = vmatpush.bf16.msra.mxu0 %v1334
  %1691 = vmatpush.bf16.msra.mxu0 %v1330
  %1692 = vmatpush.bf16.msra.mxu0 %v1326
  %1693 = vmatpush.bf16.msra.mxu0 %v1322
  %1694 = vmatpush.bf16.msra.mxu0 %v1318
  %1695 = vmatpush.bf16.msra.mxu0 %v1314
  %1696 = vmatpush.bf16.msra.mxu0 %v1310
  %1697 = vmatmul.bf16.gmra.mxu0 %v309
  %v1698 = vpop.f32.mrf.mxu0
  %v1699 = vadd.f32 %v1686, %v1698
  %v1700 = vpop.f32.mrf.mxu0
  %1701 = vdwg.mxu0
  %1702 = vmatpush.bf16.msra.mxu0 %v1115
  %1703 = vmatpush.bf16.msra.mxu0 %v1111
  %1704 = vmatpush.bf16.msra.mxu0 %v1107
  %1705 = vmatpush.bf16.msra.mxu0 %v1103
  %1706 = vmatpush.bf16.msra.mxu0 %v1099
  %1707 = vmatpush.bf16.msra.mxu0 %v1095
  %1708 = vmatpush.bf16.msra.mxu0 %v1091
  %1709 = vmatpush.bf16.msra.mxu0 %v1087
  %1710 = vmatmul.bf16.gmra.mxu0 %v302
  %v1711 = vpop.f32.mrf.mxu0
  %v1712 = vadd.f32 %v283, %v1711
  %v1713 = vpop.f32.mrf.mxu0
  %1714 = vdwg.mxu0
  %1715 = vmatpush.bf16.msra.mxu0 %v1147
  %1716 = vmatpush.bf16.msra.mxu0 %v1143
  %1717 = vmatpush.bf16.msra.mxu0 %v1139
  %1718 = vmatpush.bf16.msra.mxu0 %v1135
  %1719 = vmatpush.bf16.msra.mxu0 %v1131
  %1720 = vmatpush.bf16.msra.mxu0 %v1127
  %1721 = vmatpush.bf16.msra.mxu0 %v1123
  %1722 = vmatpush.bf16.msra.mxu0 %v1119
  %1723 = vmatmul.bf16.gmra.mxu0 %v303
  %v1724 = vpop.f32.mrf.mxu0
  %v1725 = vadd.f32 %v1712, %v1724
  %v1726 = vpop.f32.mrf.mxu0
  %1727 = vdwg.mxu0
  %1728 = vmatpush.bf16.msra.mxu0 %v1179
  %1729 = vmatpush.bf16.msra.mxu0 %v1175
  %1730 = vmatpush.bf16.msra.mxu0 %v1171
  %1731 = vmatpush.bf16.msra.mxu0 %v1167
  %1732 = vmatpush.bf16.msra.mxu0 %v1163
  %1733 = vmatpush.bf16.msra.mxu0 %v1159
  %1734 = vmatpush.bf16.msra.mxu0 %v1155
  %1735 = vmatpush.bf16.msra.mxu0 %v1151
  %1736 = vmatmul.bf16.gmra.mxu0 %v304
  %v1737 = vpop.f32.mrf.mxu0
  %v1738 = vadd.f32 %v1725, %v1737
  %v1739 = vpop.f32.mrf.mxu0
  %1740 = vdwg.mxu0
  %1741 = vmatpush.bf16.msra.mxu0 %v1211
  %1742 = vmatpush.bf16.msra.mxu0 %v1207
  %1743 = vmatpush.bf16.msra.mxu0 %v1203
  %1744 = vmatpush.bf16.msra.mxu0 %v1199
  %1745 = vmatpush.bf16.msra.mxu0 %v1195
  %1746 = vmatpush.bf16.msra.mxu0 %v1191
  %1747 = vmatpush.bf16.msra.mxu0 %v1187
  %1748 = vmatpush.bf16.msra.mxu0 %v1183
  %1749 = vmatmul.bf16.gmra.mxu0 %v305
  %v1750 = vpop.f32.mrf.mxu0
  %v1751 = vadd.f32 %v1738, %v1750
  %v1752 = vpop.f32.mrf.mxu0
  %1753 = vdwg.mxu0
  %1754 = vmatpush.bf16.msra.mxu0 %v1243
  %1755 = vmatpush.bf16.msra.mxu0 %v1239
  %1756 = vmatpush.bf16.msra.mxu0 %v1235
  %1757 = vmatpush.bf16.msra.mxu0 %v1231
  %1758 = vmatpush.bf16.msra.mxu0 %v1227
  %1759 = vmatpush.bf16.msra.mxu0 %v1223
  %1760 = vmatpush.bf16.msra.mxu0 %v1219
  %1761 = vmatpush.bf16.msra.mxu0 %v1215
  %1762 = vmatmul.bf16.gmra.mxu0 %v306
  %v1763 = vpop.f32.mrf.mxu0
  %v1764 = vadd.f32 %v1751, %v1763
  %v1765 = vpop.f32.mrf.mxu0
  %1766 = vdwg.mxu0
  %1767 = vmatpush.bf16.msra.mxu0 %v1275
  %1768 = vmatpush.bf16.msra.mxu0 %v1271
  %1769 = vmatpush.bf16.msra.mxu0 %v1267
  %1770 = vmatpush.bf16.msra.mxu0 %v1263
  %1771 = vmatpush.bf16.msra.mxu0 %v1259
  %1772 = vmatpush.bf16.msra.mxu0 %v1255
  %1773 = vmatpush.bf16.msra.mxu0 %v1251
  %1774 = vmatpush.bf16.msra.mxu0 %v1247
  %1775 = vmatmul.bf16.gmra.mxu0 %v307
  %v1776 = vpop.f32.mrf.mxu0
  %v1777 = vadd.f32 %v1764, %v1776
  %v1778 = vpop.f32.mrf.mxu0
  %1779 = vdwg.mxu0
  %1780 = vmatpush.bf16.msra.mxu0 %v1307
  %1781 = vmatpush.bf16.msra.mxu0 %v1303
  %1782 = vmatpush.bf16.msra.mxu0 %v1299
  %1783 = vmatpush.bf16.msra.mxu0 %v1295
  %1784 = vmatpush.bf16.msra.mxu0 %v1291
  %1785 = vmatpush.bf16.msra.mxu0 %v1287
  %1786 = vmatpush.bf16.msra.mxu0 %v1283
  %1787 = vmatpush.bf16.msra.mxu0 %v1279
  %1788 = vmatmul.bf16.gmra.mxu0 %v308
  %v1789 = vpop.f32.mrf.mxu0
  %v1790 = vadd.f32 %v1777, %v1789
  %v1791 = vpop.f32.mrf.mxu0
  %1792 = vdwg.mxu0
  %1793 = vmatpush.bf16.msra.mxu0 %v1339
  %1794 = vmatpush.bf16.msra.mxu0 %v1335
  %1795 = vmatpush.bf16.msra.mxu0 %v1331
  %1796 = vmatpush.bf16.msra.mxu0 %v1327
  %1797 = vmatpush.bf16.msra.mxu0 %v1323
  %1798 = vmatpush.bf16.msra.mxu0 %v1319
  %1799 = vmatpush.bf16.msra.mxu0 %v1315
  %1800 = vmatpush.bf16.msra.mxu0 %v1311
  %1801 = vmatmul.bf16.gmra.mxu0 %v309
  %v1802 = vpop.f32.mrf.mxu0
  %v1803 = vadd.f32 %v1790, %v1802
  %v1804 = vpop.f32.mrf.mxu0
  %1805 = vdwg.mxu0
  %1806 = vmatpush.bf16.msra.mxu0 %v1116
  %1807 = vmatpush.bf16.msra.mxu0 %v1112
  %1808 = vmatpush.bf16.msra.mxu0 %v1108
  %1809 = vmatpush.bf16.msra.mxu0 %v1104
  %1810 = vmatpush.bf16.msra.mxu0 %v1100
  %1811 = vmatpush.bf16.msra.mxu0 %v1096
  %1812 = vmatpush.bf16.msra.mxu0 %v1092
  %1813 = vmatpush.bf16.msra.mxu0 %v1088
  %1814 = vmatmul.bf16.gmra.mxu0 %v302
  %v1815 = vpop.f32.mrf.mxu0
  %v1816 = vadd.f32 %v284, %v1815
  %v1817 = vpop.f32.mrf.mxu0
  %1818 = vdwg.mxu0
  %1819 = vmatpush.bf16.msra.mxu0 %v1148
  %1820 = vmatpush.bf16.msra.mxu0 %v1144
  %1821 = vmatpush.bf16.msra.mxu0 %v1140
  %1822 = vmatpush.bf16.msra.mxu0 %v1136
  %1823 = vmatpush.bf16.msra.mxu0 %v1132
  %1824 = vmatpush.bf16.msra.mxu0 %v1128
  %1825 = vmatpush.bf16.msra.mxu0 %v1124
  %1826 = vmatpush.bf16.msra.mxu0 %v1120
  %1827 = vmatmul.bf16.gmra.mxu0 %v303
  %v1828 = vpop.f32.mrf.mxu0
  %v1829 = vadd.f32 %v1816, %v1828
  %v1830 = vpop.f32.mrf.mxu0
  %1831 = vdwg.mxu0
  %1832 = vmatpush.bf16.msra.mxu0 %v1180
  %1833 = vmatpush.bf16.msra.mxu0 %v1176
  %1834 = vmatpush.bf16.msra.mxu0 %v1172
  %1835 = vmatpush.bf16.msra.mxu0 %v1168
  %1836 = vmatpush.bf16.msra.mxu0 %v1164
  %1837 = vmatpush.bf16.msra.mxu0 %v1160
  %1838 = vmatpush.bf16.msra.mxu0 %v1156
  %1839 = vmatpush.bf16.msra.mxu0 %v1152
  %1840 = vmatmul.bf16.gmra.mxu0 %v304
  %v1841 = vpop.f32.mrf.mxu0
  %v1842 = vadd.f32 %v1829, %v1841
  %v1843 = vpop.f32.mrf.mxu0
  %1844 = vdwg.mxu0
  %1845 = vmatpush.bf16.msra.mxu0 %v1212
  %1846 = vmatpush.bf16.msra.mxu0 %v1208
  %1847 = vmatpush.bf16.msra.mxu0 %v1204
  %1848 = vmatpush.bf16.msra.mxu0 %v1200
  %1849 = vmatpush.bf16.msra.mxu0 %v1196
  %1850 = vmatpush.bf16.msra.mxu0 %v1192
  %1851 = vmatpush.bf16.msra.mxu0 %v1188
  %1852 = vmatpush.bf16.msra.mxu0 %v1184
  %1853 = vmatmul.bf16.gmra.mxu0 %v305
  %v1854 = vpop.f32.mrf.mxu0
  %v1855 = vadd.f32 %v1842, %v1854
  %v1856 = vpop.f32.mrf.mxu0
  %1857 = vdwg.mxu0
  %1858 = vmatpush.bf16.msra.mxu0 %v1244
  %1859 = vmatpush.bf16.msra.mxu0 %v1240
  %1860 = vmatpush.bf16.msra.mxu0 %v1236
  %1861 = vmatpush.bf16.msra.mxu0 %v1232
  %1862 = vmatpush.bf16.msra.mxu0 %v1228
  %1863 = vmatpush.bf16.msra.mxu0 %v1224
  %1864 = vmatpush.bf16.msra.mxu0 %v1220
  %1865 = vmatpush.bf16.msra.mxu0 %v1216
  %1866 = vmatmul.bf16.gmra.mxu0 %v306
  %v1867 = vpop.f32.mrf.mxu0
  %v1868 = vadd.f32 %v1855, %v1867
  %v1869 = vpop.f32.mrf.mxu0
  %1870 = vdwg.mxu0
  %1871 = vmatpush.bf16.msra.mxu0 %v1276
  %1872 = vmatpush.bf16.msra.mxu0 %v1272
  %1873 = vmatpush.bf16.msra.mxu0 %v1268
  %1874 = vmatpush.bf16.msra.mxu0 %v1264
  %1875 = vmatpush.bf16.msra.mxu0 %v1260
  %1876 = vmatpush.bf16.msra.mxu0 %v1256
  %1877 = vmatpush.bf16.msra.mxu0 %v1252
  %1878 = vmatpush.bf16.msra.mxu0 %v1248
  %1879 = vmatmul.bf16.gmra.mxu0 %v307
  %v1880 = vpop.f32.mrf.mxu0
  %v1881 = vadd.f32 %v1868, %v1880
  %v1882 = vpop.f32.mrf.mxu0
  %1883 = vdwg.mxu0
  %1884 = vmatpush.bf16.msra.mxu0 %v1308
  %1885 = vmatpush.bf16.msra.mxu0 %v1304
  %1886 = vmatpush.bf16.msra.mxu0 %v1300
  %1887 = vmatpush.bf16.msra.mxu0 %v1296
  %1888 = vmatpush.bf16.msra.mxu0 %v1292
  %1889 = vmatpush.bf16.msra.mxu0 %v1288
  %1890 = vmatpush.bf16.msra.mxu0 %v1284
  %1891 = vmatpush.bf16.msra.mxu0 %v1280
  %1892 = vmatmul.bf16.gmra.mxu0 %v308
  %v1893 = vpop.f32.mrf.mxu0
  %v1894 = vadd.f32 %v1881, %v1893
  %v1895 = vpop.f32.mrf.mxu0
  %1896 = vdwg.mxu0
  %1897 = vmatpush.bf16.msra.mxu0 %v1340
  %1898 = vmatpush.bf16.msra.mxu0 %v1336
  %1899 = vmatpush.bf16.msra.mxu0 %v1332
  %1900 = vmatpush.bf16.msra.mxu0 %v1328
  %1901 = vmatpush.bf16.msra.mxu0 %v1324
  %1902 = vmatpush.bf16.msra.mxu0 %v1320
  %1903 = vmatpush.bf16.msra.mxu0 %v1316
  %1904 = vmatpush.bf16.msra.mxu0 %v1312
  %1905 = vmatmul.bf16.gmra.mxu0 %v309
  %v1906 = vpop.f32.mrf.mxu0
  %v1907 = vadd.f32 %v1894, %v1906
  %v1908 = vpop.f32.mrf.mxu0
  %1909 = vdwg.mxu0
  %1910 = vmatpush.bf16.msra.mxu0 %v1117
  %1911 = vmatpush.bf16.msra.mxu0 %v1113
  %1912 = vmatpush.bf16.msra.mxu0 %v1109
  %1913 = vmatpush.bf16.msra.mxu0 %v1105
  %1914 = vmatpush.bf16.msra.mxu0 %v1101
  %1915 = vmatpush.bf16.msra.mxu0 %v1097
  %1916 = vmatpush.bf16.msra.mxu0 %v1093
  %1917 = vmatpush.bf16.msra.mxu0 %v1089
  %1918 = vmatmul.bf16.gmra.mxu0 %v302
  %v1919 = vpop.f32.mrf.mxu0
  %v1920 = vadd.f32 %v285, %v1919
  %v1921 = vpop.f32.mrf.mxu0
  %1922 = vdwg.mxu0
  %1923 = vmatpush.bf16.msra.mxu0 %v1149
  %1924 = vmatpush.bf16.msra.mxu0 %v1145
  %1925 = vmatpush.bf16.msra.mxu0 %v1141
  %1926 = vmatpush.bf16.msra.mxu0 %v1137
  %1927 = vmatpush.bf16.msra.mxu0 %v1133
  %1928 = vmatpush.bf16.msra.mxu0 %v1129
  %1929 = vmatpush.bf16.msra.mxu0 %v1125
  %1930 = vmatpush.bf16.msra.mxu0 %v1121
  %1931 = vmatmul.bf16.gmra.mxu0 %v303
  %v1932 = vpop.f32.mrf.mxu0
  %v1933 = vadd.f32 %v1920, %v1932
  %v1934 = vpop.f32.mrf.mxu0
  %1935 = vdwg.mxu0
  %1936 = vmatpush.bf16.msra.mxu0 %v1181
  %1937 = vmatpush.bf16.msra.mxu0 %v1177
  %1938 = vmatpush.bf16.msra.mxu0 %v1173
  %1939 = vmatpush.bf16.msra.mxu0 %v1169
  %1940 = vmatpush.bf16.msra.mxu0 %v1165
  %1941 = vmatpush.bf16.msra.mxu0 %v1161
  %1942 = vmatpush.bf16.msra.mxu0 %v1157
  %1943 = vmatpush.bf16.msra.mxu0 %v1153
  %1944 = vmatmul.bf16.gmra.mxu0 %v304
  %v1945 = vpop.f32.mrf.mxu0
  %v1946 = vadd.f32 %v1933, %v1945
  %v1947 = vpop.f32.mrf.mxu0
  %1948 = vdwg.mxu0
  %1949 = vmatpush.bf16.msra.mxu0 %v1213
  %1950 = vmatpush.bf16.msra.mxu0 %v1209
  %1951 = vmatpush.bf16.msra.mxu0 %v1205
  %1952 = vmatpush.bf16.msra.mxu0 %v1201
  %1953 = vmatpush.bf16.msra.mxu0 %v1197
  %1954 = vmatpush.bf16.msra.mxu0 %v1193
  %1955 = vmatpush.bf16.msra.mxu0 %v1189
  %1956 = vmatpush.bf16.msra.mxu0 %v1185
  %1957 = vmatmul.bf16.gmra.mxu0 %v305
  %v1958 = vpop.f32.mrf.mxu0
  %v1959 = vadd.f32 %v1946, %v1958
  %v1960 = vpop.f32.mrf.mxu0
  %1961 = vdwg.mxu0
  %1962 = vmatpush.bf16.msra.mxu0 %v1245
  %1963 = vmatpush.bf16.msra.mxu0 %v1241
  %1964 = vmatpush.bf16.msra.mxu0 %v1237
  %1965 = vmatpush.bf16.msra.mxu0 %v1233
  %1966 = vmatpush.bf16.msra.mxu0 %v1229
  %1967 = vmatpush.bf16.msra.mxu0 %v1225
  %1968 = vmatpush.bf16.msra.mxu0 %v1221
  %1969 = vmatpush.bf16.msra.mxu0 %v1217
  %1970 = vmatmul.bf16.gmra.mxu0 %v306
  %v1971 = vpop.f32.mrf.mxu0
  %v1972 = vadd.f32 %v1959, %v1971
  %v1973 = vpop.f32.mrf.mxu0
  %1974 = vdwg.mxu0
  %1975 = vmatpush.bf16.msra.mxu0 %v1277
  %1976 = vmatpush.bf16.msra.mxu0 %v1273
  %1977 = vmatpush.bf16.msra.mxu0 %v1269
  %1978 = vmatpush.bf16.msra.mxu0 %v1265
  %1979 = vmatpush.bf16.msra.mxu0 %v1261
  %1980 = vmatpush.bf16.msra.mxu0 %v1257
  %1981 = vmatpush.bf16.msra.mxu0 %v1253
  %1982 = vmatpush.bf16.msra.mxu0 %v1249
  %1983 = vmatmul.bf16.gmra.mxu0 %v307
  %v1984 = vpop.f32.mrf.mxu0
  %v1985 = vadd.f32 %v1972, %v1984
  %v1986 = vpop.f32.mrf.mxu0
  %1987 = vdwg.mxu0
  %1988 = vmatpush.bf16.msra.mxu0 %v1309
  %1989 = vmatpush.bf16.msra.mxu0 %v1305
  %1990 = vmatpush.bf16.msra.mxu0 %v1301
  %1991 = vmatpush.bf16.msra.mxu0 %v1297
  %1992 = vmatpush.bf16.msra.mxu0 %v1293
  %1993 = vmatpush.bf16.msra.mxu0 %v1289
  %1994 = vmatpush.bf16.msra.mxu0 %v1285
  %1995 = vmatpush.bf16.msra.mxu0 %v1281
  %1996 = vmatmul.bf16.gmra.mxu0 %v308
  %v1997 = vpop.f32.mrf.mxu0
  %v1998 = vadd.f32 %v1985, %v1997
  %v1999 = vpop.f32.mrf.mxu0
  %2000 = vdwg.mxu0
  %2001 = vmatpush.bf16.msra.mxu0 %v1341
  %2002 = vmatpush.bf16.msra.mxu0 %v1337
  %2003 = vmatpush.bf16.msra.mxu0 %v1333
  %2004 = vmatpush.bf16.msra.mxu0 %v1329
  %2005 = vmatpush.bf16.msra.mxu0 %v1325
  %2006 = vmatpush.bf16.msra.mxu0 %v1321
  %2007 = vmatpush.bf16.msra.mxu0 %v1317
  %2008 = vmatpush.bf16.msra.mxu0 %v1313
  %2009 = vmatmul.bf16.gmra.mxu0 %v309
  %v2010 = vpop.f32.mrf.mxu0
  %v2011 = vadd.f32 %v1998, %v2010
  %v2012 = vpop.f32.mrf.mxu0
  %2013 = vdwg.mxu0
  %v2014 = vmax.f32 %v1699, 0.0
  %v2015 = vmax.f32 %v1803, 0.0
  %v2016 = vmax.f32 %v1907, 0.0
  %v2017 = vmax.f32 %v2011, 0.0
  %v2018 = vpack.c.bf16 %v2014, %v2014
  %v2019 = vpack.c.bf16 %v2015, %v2015
  %v2020 = vpack.c.bf16 %v2016, %v2016
  %v2021 = vpack.c.bf16 %v2017, %v2017
  %v2022 = vld [vmem:[%s3] sm:$0xf]
  %v2023 = vld [vmem:[%s3 + $0x4] sm:$0xf]
  %v2024 = vld [vmem:[%s3 + $0x8] sm:$0xf]
  %v2025 = vld [vmem:[%s3 + $0xc] sm:$0xf]
  %v2026 = vld [vmem:[%s3 + $0x10] sm:$0xf]
  %v2027 = vld [vmem:[%s3 + $0x14] sm:$0xf]
  %v2028 = vld [vmem:[%s3 + $0x18] sm:$0xf]
  %v2029 = vld [vmem:[%s3 + $0x1c] sm:$0xf]
  %v2030 = vld [vmem:[%s3 + $0x20] sm:$0xf]
  %v2031 = vld [vmem:[%s3 + $0x24] sm:$0xf]
  %v2032 = vld [vmem:[%s3 + $0x28] sm:$0xf]
  %v2033 = vld [vmem:[%s3 + $0x2c] sm:$0xf]
  %v2034 = vld [vmem:[%s3 + $0x30] sm:$0xf]
  %v2035 = vld [vmem:[%s3 + $0x34] sm:$0xf]
  %v2036 = vld [vmem:[%s3 + $0x38] sm:$0xf]
  %v2037 = vld [vmem:[%s3 + $0x3c] sm:$0xf]
  %v2038 = vld [vmem:[%s3 + $0x40] sm:$0xf]
  %v2039 = vld [vmem:[%s3 + $0x44] sm:$0xf]
  %v2040 = vld [vmem:[%s3 + $0x48] sm:$0xf]
  %v2041 = vld [vmem:[%s3 + $0x4c] sm:$0xf]
  %v2042 = vld [vmem:[%s3 + $0x50] sm:$0xf]
  %v2043 = vld [vmem:[%s3 + $0x54] sm:$0xf]
  %v2044 = vld [vmem:[%s3 + $0x58] sm:$0xf]
  %v2045 = vld [vmem:[%s3 + $0x5c] sm:$0xf]
  %v2046 = vld [vmem:[%s3 + $0x60] sm:$0xf]
  %v2047 = vld [vmem:[%s3 + $0x64] sm:$0xf]
  %v2048 = vld [vmem:[%s3 + $0x68] sm:$0xf]
  %v2049 = vld [vmem:[%s3 + $0x6c] sm:$0xf]
  %v2050 = vld [vmem:[%s3 + $0x70] sm:$0xf]
  %v2051 = vld [vmem:[%s3 + $0x74] sm:$0xf]
  %v2052 = vld [vmem:[%s3 + $0x78] sm:$0xf]
  %v2053 = vld [vmem:[%s3 + $0x7c] sm:$0xf]
  %v2054 = vld [vmem:[%s3 + $0x80] sm:$0xf]
  %v2055 = vld [vmem:[%s3 + $0x84] sm:$0xf]
  %v2056 = vld [vmem:[%s3 + $0x88] sm:$0xf]
  %v2057 = vld [vmem:[%s3 + $0x8c] sm:$0xf]
  %v2058 = vld [vmem:[%s3 + $0x90] sm:$0xf]
  %v2059 = vld [vmem:[%s3 + $0x94] sm:$0xf]
  %v2060 = vld [vmem:[%s3 + $0x98] sm:$0xf]
  %v2061 = vld [vmem:[%s3 + $0x9c] sm:$0xf]
  %v2062 = vld [vmem:[%s3 + $0xa0] sm:$0xf]
  %v2063 = vld [vmem:[%s3 + $0xa4] sm:$0xf]
  %v2064 = vld [vmem:[%s3 + $0xa8] sm:$0xf]
  %v2065 = vld [vmem:[%s3 + $0xac] sm:$0xf]
  %v2066 = vld [vmem:[%s3 + $0xb0] sm:$0xf]
  %v2067 = vld [vmem:[%s3 + $0xb4] sm:$0xf]
  %v2068 = vld [vmem:[%s3 + $0xb8] sm:$0xf]
  %v2069 = vld [vmem:[%s3 + $0xbc] sm:$0xf]
  %v2070 = vld [vmem:[%s3 + $0xc0] sm:$0xf]
  %v2071 = vld [vmem:[%s3 + $0xc4] sm:$0xf]
  %v2072 = vld [vmem:[%s3 + $0xc8] sm:$0xf]
  %v2073 = vld [vmem:[%s3 + $0xcc] sm:$0xf]
  %v2074 = vld [vmem:[%s3 + $0xd0] sm:$0xf]
  %v2075 = vld [vmem:[%s3 + $0xd4] sm:$0xf]
  %v2076 = vld [vmem:[%s3 + $0xd8] sm:$0xf]
  %v2077 = vld [vmem:[%s3 + $0xdc] sm:$0xf]
  %v2078 = vld [vmem:[%s3 + $0xe0] sm:$0xf]
  %v2079 = vld [vmem:[%s3 + $0xe4] sm:$0xf]
  %v2080 = vld [vmem:[%s3 + $0xe8] sm:$0xf]
  %v2081 = vld [vmem:[%s3 + $0xec] sm:$0xf]
  %v2082 = vld [vmem:[%s3 + $0xf0] sm:$0xf]
  %v2083 = vld [vmem:[%s3 + $0xf4] sm:$0xf]
  %v2084 = vld [vmem:[%s3 + $0xf8] sm:$0xf]
  %v2085 = vld [vmem:[%s3 + $0xfc] sm:$0xf]
  %v2086 = vld [vmem:[%s4] sm:$0x1]
  %v2088 = vperm.slane %v2086, 0
  %v2154 = vunpack.c.l.b16 %v2022
  %v2155 = vunpack.c.l.b16 %v2023
  %v2156 = vunpack.c.l.b16 %v2024
  %v2157 = vunpack.c.l.b16 %v2025
  %v2158 = vunpack.c.l.b16 %v2026
  %v2159 = vunpack.c.l.b16 %v2027
  %v2160 = vunpack.c.l.b16 %v2028
  %v2161 = vunpack.c.l.b16 %v2029
  %v2162 = vunpack.c.l.b16 %v2030
  %v2163 = vunpack.c.l.b16 %v2031
  %v2164 = vunpack.c.l.b16 %v2032
  %v2165 = vunpack.c.l.b16 %v2033
  %v2166 = vunpack.c.l.b16 %v2034
  %v2167 = vunpack.c.l.b16 %v2035
  %v2168 = vunpack.c.l.b16 %v2036
  %v2169 = vunpack.c.l.b16 %v2037
  %v2170 = vunpack.c.l.b16 %v2038
  %v2171 = vunpack.c.l.b16 %v2039
  %v2172 = vunpack.c.l.b16 %v2040
  %v2173 = vunpack.c.l.b16 %v2041
  %v2174 = vunpack.c.l.b16 %v2042
  %v2175 = vunpack.c.l.b16 %v2043
  %v2176 = vunpack.c.l.b16 %v2044
  %v2177 = vunpack.c.l.b16 %v2045
  %v2178 = vunpack.c.l.b16 %v2046
  %v2179 = vunpack.c.l.b16 %v2047
  %v2180 = vunpack.c.l.b16 %v2048
  %v2181 = vunpack.c.l.b16 %v2049
  %v2182 = vunpack.c.l.b16 %v2050
  %v2183 = vunpack.c.l.b16 %v2051
  %v2184 = vunpack.c.l.b16 %v2052
  %v2185 = vunpack.c.l.b16 %v2053
  %v2186 = vunpack.c.l.b16 %v2054
  %v2187 = vunpack.c.l.b16 %v2055
  %v2188 = vunpack.c.l.b16 %v2056
  %v2189 = vunpack.c.l.b16 %v2057
  %v2190 = vunpack.c.l.b16 %v2058
  %v2191 = vunpack.c.l.b16 %v2059
  %v2192 = vunpack.c.l.b16 %v2060
  %v2193 = vunpack.c.l.b16 %v2061
  %v2194 = vunpack.c.l.b16 %v2062
  %v2195 = vunpack.c.l.b16 %v2063
  %v2196 = vunpack.c.l.b16 %v2064
  %v2197 = vunpack.c.l.b16 %v2065
  %v2198 = vunpack.c.l.b16 %v2066
  %v2199 = vunpack.c.l.b16 %v2067
  %v2200 = vunpack.c.l.b16 %v2068
  %v2201 = vunpack.c.l.b16 %v2069
  %v2202 = vunpack.c.l.b16 %v2070
  %v2203 = vunpack.c.l.b16 %v2071
  %v2204 = vunpack.c.l.b16 %v2072
  %v2205 = vunpack.c.l.b16 %v2073
  %v2206 = vunpack.c.l.b16 %v2074
  %v2207 = vunpack.c.l.b16 %v2075
  %v2208 = vunpack.c.l.b16 %v2076
  %v2209 = vunpack.c.l.b16 %v2077
  %v2210 = vunpack.c.l.b16 %v2078
  %v2211 = vunpack.c.l.b16 %v2079
  %v2212 = vunpack.c.l.b16 %v2080
  %v2213 = vunpack.c.l.b16 %v2081
  %v2214 = vunpack.c.l.b16 %v2082
  %v2215 = vunpack.c.l.b16 %v2083
  %v2216 = vunpack.c.l.b16 %v2084
  %v2217 = vunpack.c.l.b16 %v2085
  %v2218 = vpack.c.b16 %v2155, %v2154
  %v2219 = vpack.c.b16 %v2157, %v2156
  %v2220 = vpack.c.b16 %v2159, %v2158
  %v2221 = vpack.c.b16 %v2161, %v2160
  %v2222 = vpack.c.b16 %v2163, %v2162
  %v2223 = vpack.c.b16 %v2165, %v2164
  %v2224 = vpack.c.b16 %v2167, %v2166
  %v2225 = vpack.c.b16 %v2169, %v2168
  %v2226 = vpack.c.b16 %v2171, %v2170
  %v2227 = vpack.c.b16 %v2173, %v2172
  %v2228 = vpack.c.b16 %v2175, %v2174
  %v2229 = vpack.c.b16 %v2177, %v2176
  %v2230 = vpack.c.b16 %v2179, %v2178
  %v2231 = vpack.c.b16 %v2181, %v2180
  %v2232 = vpack.c.b16 %v2183, %v2182
  %v2233 = vpack.c.b16 %v2185, %v2184
  %v2234 = vpack.c.b16 %v2187, %v2186
  %v2235 = vpack.c.b16 %v2189, %v2188
  %v2236 = vpack.c.b16 %v2191, %v2190
  %v2237 = vpack.c.b16 %v2193, %v2192
  %v2238 = vpack.c.b16 %v2195, %v2194
  %v2239 = vpack.c.b16 %v2197, %v2196
  %v2240 = vpack.c.b16 %v2199, %v2198
  %v2241 = vpack.c.b16 %v2201, %v2200
  %v2242 = vpack.c.b16 %v2203, %v2202
  %v2243 = vpack.c.b16 %v2205, %v2204
  %v2244 = vpack.c.b16 %v2207, %v2206
  %v2245 = vpack.c.b16 %v2209, %v2208
  %v2246 = vpack.c.b16 %v2211, %v2210
  %v2247 = vpack.c.b16 %v2213, %v2212
  %v2248 = vpack.c.b16 %v2215, %v2214
  %v2249 = vpack.c.b16 %v2217, %v2216
  %2282 = vmatpush.bf16.msra.mxu0 %v2225
  %2283 = vmatpush.bf16.msra.mxu0 %v2224
  %2284 = vmatpush.bf16.msra.mxu0 %v2223
  %2285 = vmatpush.bf16.msra.mxu0 %v2222
  %2286 = vmatpush.bf16.msra.mxu0 %v2221
  %2287 = vmatpush.bf16.msra.mxu0 %v2220
  %2288 = vmatpush.bf16.msra.mxu0 %v2219
  %2289 = vmatpush.bf16.msra.mxu0 %v2218
  %2290 = vmatmul.bf16.gmra.mxu0 %v2018
  %v2291 = vpop.f32.mrf.mxu0
  %v2292 = vadd.f32 %v2088, %v2291
  %v2293 = vpop.f32.mrf.mxu0
  %2294 = vdwg.mxu0
  %2295 = vmatpush.bf16.msra.mxu0 %v2233
  %2296 = vmatpush.bf16.msra.mxu0 %v2232
  %2297 = vmatpush.bf16.msra.mxu0 %v2231
  %2298 = vmatpush.bf16.msra.mxu0 %v2230
  %2299 = vmatpush.bf16.msra.mxu0 %v2229
  %2300 = vmatpush.bf16.msra.mxu0 %v2228
  %2301 = vmatpush.bf16.msra.mxu0 %v2227
  %2302 = vmatpush.bf16.msra.mxu0 %v2226
  %2303 = vmatmul.bf16.gmra.mxu0 %v2019
  %v2304 = vpop.f32.mrf.mxu0
  %v2305 = vadd.f32 %v2292, %v2304
  %v2306 = vpop.f32.mrf.mxu0
  %2307 = vdwg.mxu0
  %2308 = vmatpush.bf16.msra.mxu0 %v2241
  %2309 = vmatpush.bf16.msra.mxu0 %v2240
  %2310 = vmatpush.bf16.msra.mxu0 %v2239
  %2311 = vmatpush.bf16.msra.mxu0 %v2238
  %2312 = vmatpush.bf16.msra.mxu0 %v2237
  %2313 = vmatpush.bf16.msra.mxu0 %v2236
  %2314 = vmatpush.bf16.msra.mxu0 %v2235
  %2315 = vmatpush.bf16.msra.mxu0 %v2234
  %2316 = vmatmul.bf16.gmra.mxu0 %v2020
  %v2317 = vpop.f32.mrf.mxu0
  %v2318 = vadd.f32 %v2305, %v2317
  %v2319 = vpop.f32.mrf.mxu0
  %2320 = vdwg.mxu0
  %2321 = vmatpush.bf16.msra.mxu0 %v2249
  %2322 = vmatpush.bf16.msra.mxu0 %v2248
  %2323 = vmatpush.bf16.msra.mxu0 %v2247
  %2324 = vmatpush.bf16.msra.mxu0 %v2246
  %2325 = vmatpush.bf16.msra.mxu0 %v2245
  %2326 = vmatpush.bf16.msra.mxu0 %v2244
  %2327 = vmatpush.bf16.msra.mxu0 %v2243
  %2328 = vmatpush.bf16.msra.mxu0 %v2242
  %2329 = vmatmul.bf16.gmra.mxu0 %v2021
  %v2330 = vpop.f32.mrf.mxu0
  %v2331 = vadd.f32 %v2318, %v2330
  %v2332 = vpop.f32.mrf.mxu0
  %2333 = vdwg.mxu0
  %2334 = vst [vmem:[%s5] sm:$0xff] %v2331
  // Predicated region
  $region22: #{dqn_forward.7} parent=0 // pred_check
    _
  $region23: #{dqn_forward.7} parent=0 // pred_check_branch
    %2336 = sbr.rel (0) target = $region25
  $region24: #{dqn_forward.7} parent=0 // pred_region
    _
  $region25: #{dqn_forward.7} parent=0 // pred_fallthru
    _
  // Predicated region
  $region26: #{dqn_forward.7} parent=0 // pred_check
    _
  $region27: #{dqn_forward.7} parent=0 // pred_check_branch
    %2338 = sbr.rel (0) target = $region29
  $region28: #{dqn_forward.7} parent=0 // pred_region
    _
  $region29: #{dqn_forward.7} parent=0 // pred_fallthru
    _

</llo_original>
